<compile_context>
chip_gen: v6e
topology: v6e:2x2x1
jax: 0.10.0
libtpu: 0.0.40
codegen_flags: <defaults>
</compile_context>

<pallas_src>
import jax
import jax.numpy as jnp
import numpy as np
from jax.experimental import pallas as pl
from jax.experimental.pallas import tpu as pltpu


def _round_up(a, m):
    return -(-a // m) * m


def _stn3d_kernel(x_ref, w2_ref, b2_ref, w3_ref, b3_ref,
                  wf1_ref, bf1_ref, wf2_ref, bf2_ref, wf3_ref, bf3_ref,
                  out_ref, g_acc):
    tb, tn, c = x_ref.shape
    n_idx = pl.program_id(1)
    n_last = pl.num_programs(1) - 1

    @pl.when(n_idx == 0)
    def _init():
        # Post-ReLU activations are >= 0, so 0 is the identity for the running max.
        g_acc[...] = jnp.zeros_like(g_acc)

    # ---- conv stack (conv2, conv3): one M = TB*TN matmul per layer (conv1 is
    # done in the wrapper so its K=6 never touches the MXU here).
    x = x_ref[...].reshape(tb * tn, c)                                      # bf16 (rows, 64)
    h = jnp.dot(x, w2_ref[...], preferred_element_type=jnp.float32) + b2_ref[...]
    h = jnp.maximum(h, 0.0).astype(jnp.bfloat16)                            # (rows, 128)
    h = jnp.dot(h, w3_ref[...], preferred_element_type=jnp.float32) + b3_ref[...]
    h = jnp.maximum(h, 0.0)                                                 # (rows, 1024) f32

    # ---- vectorized per-batch-element running max over the point axis.
    m = jnp.max(h.reshape(tb, tn, 1024), axis=1)                            # (tb, 1024) f32
    g_acc[...] = jnp.maximum(g_acc[...], m.astype(jnp.bfloat16))

    # ---- batched FC head, once per batch block (last N tile only).
    @pl.when(n_idx == n_last)
    def _head():
        g = g_acc[...]                                                      # (tb, 1024) bf16
        f = jnp.dot(g, wf1_ref[...], preferred_element_type=jnp.float32) + bf1_ref[...]
        f = jnp.maximum(f, 0.0).astype(jnp.bfloat16)                        # (tb, 512)
        f = jnp.dot(f, wf2_ref[...], preferred_element_type=jnp.float32) + bf2_ref[...]
        f = jnp.maximum(f, 0.0).astype(jnp.bfloat16)                        # (tb, 256)
        # fc3 weight/bias are padded to 128 lanes; eye(3) is folded into the bias.
        f = jnp.dot(f, wf3_ref[...], preferred_element_type=jnp.float32) + bf3_ref[...]
        out_ref[0] = f.astype(out_ref.dtype)                                # (tb, 128)


def stn3d_forward(x_ncl, params):
    """x_ncl: (B, 6, N) float32 (PyTorch NCL layout).  Returns (B, 3, 3) float32."""
    B, C_in, N = x_ncl.shape
    assert C_in == 6
    (w1, b1, w2, b2, w3, b3, wf1, bf1, wf2, bf2, wf3, bf3) = params

    # conv1 hoisted to XLA: tiny (K=6) matmul; kernel then ingests 64-channel bf16.
    x = jnp.transpose(x_ncl, (0, 2, 1)).astype(jnp.bfloat16)                # (B, N, 6)
    h1 = jnp.dot(x, w1, preferred_element_type=jnp.float32) + b1
    h1 = jnp.maximum(h1, 0.0).astype(jnp.bfloat16)                          # (B, N, 64)

    # ---- batch tiling: keep >= 2 batch blocks whenever B > 1 (v7x megacore).
    TB = min(8, B)
    if B > 1 and pl.cdiv(B, TB) < 2:
        TB = pl.cdiv(B, 2)
    B_pad = pl.cdiv(B, TB) * TB
    grid_b = B_pad // TB

    # ---- point tiling: cap TB*TN rows so the f32 conv3 intermediate (+temps)
    # fits the explicit 48 MiB VMEM budget on every generation (incl. v7x 64 MiB).
    ROWS = 3072
    max_tn = max(16, (ROWS // TB) // 16 * 16)      # multiple of 16: bf16 sublane packing
    TN = min(max_tn, _round_up(N, 16))
    N_pad = _round_up(N, TN)
    grid_n = N_pad // TN

    # Edge-pad: duplicated last point / last batch element leave the max-pool
    # unchanged (padded batch rows are sliced off below), so no in-kernel mask.
    pad_b, pad_n = B_pad - B, N_pad - N
    if pad_b or pad_n:
        h1 = jnp.pad(h1, ((0, pad_b), (0, pad_n), (0, 0)), mode="edge")

    full = lambda shp: pl.BlockSpec(shp, lambda b, n: (0,) * len(shp))

    out = pl.pallas_call(
        _stn3d_kernel,
        out_shape=jax.ShapeDtypeStruct((grid_b, TB, 128), jnp.float32),
        grid_spec=pltpu.PrefetchScalarGridSpec(
            num_scalar_prefetch=0,
            grid=(grid_b, grid_n),
            in_specs=[
                pl.BlockSpec((TB, TN, 64), lambda b, n: (b, n, 0)),          # conv1 output
                full((64, 128)), full((1, 128)),                             # conv2 (+bn2)
                full((128, 1024)), full((1, 1024)),                          # conv3 (+bn3)
                full((1024, 512)), full((1, 512)),                           # fc1 (+bn4)
                full((512, 256)), full((1, 256)),                            # fc2 (+bn5)
                full((256, 128)), full((1, 128)),                            # fc3 (padded, +eye)
            ],
            out_specs=pl.BlockSpec((1, TB, 128), lambda b, n: (b, 0, 0)),
            scratch_shapes=[pltpu.VMEM((TB, 1024), jnp.bfloat16)],
        ),
        compiler_params=pltpu.CompilerParams(
            dimension_semantics=("parallel", "arbitrary"),
            vmem_limit_bytes=48 * 1024 * 1024),
    )(h1, w2, b2, w3, b3, wf1, bf1, wf2, bf2, wf3, bf3)

    return out.reshape(B_pad, 128)[:B, :9].reshape(B, 3, 3)


def _fold_bn(w, b, gamma, beta, mean, var, eps=1e-5):
    """Fold inference-mode BatchNorm into a linear layer.  w: (C_out, C_in)."""
    scale = gamma / jnp.sqrt(var + eps)
    w_eff = w * scale[:, None]
    b_eff = (b - mean) * scale + beta
    return w_eff, b_eff


def make_params(key):
    """Deterministic synthetic weights matching STN3d.__init__ shapes.

    Weights are returned pre-transposed to (C_in, C_out) in bf16; biases in f32
    with shape (1, C_out).  BN1-5 are folded; fc3 is padded to 128 output lanes
    with eye(3) folded into its bias.
    """
    dims = [(64, 6), (128, 64), (1024, 128), (512, 1024), (256, 512), (9, 256)]
    keys = jax.random.split(key, 4 * len(dims))
    folded = []
    for i, (co, ci) in enumerate(dims):
        kw, kb, kg, km = keys[4 * i:4 * i + 4]
        w = 0.1 * jax.random.normal(kw, (co, ci), jnp.float32)
        b = 0.05 * jax.random.normal(kb, (co,), jnp.float32)
        if i < 5:  # layers 0..4 have BatchNorm after them
            gamma = 1.0 + 0.1 * jax.random.normal(kg, (co,), jnp.float32)
            beta = 0.05 * jax.random.normal(km, (co,), jnp.float32)
            mean = 0.02 * jax.random.normal(jax.random.fold_in(km, 1), (co,), jnp.float32)
            var = 0.5 + jax.random.uniform(jax.random.fold_in(km, 2), (co,), jnp.float32)
            w, b = _fold_bn(w, b, gamma, beta, mean, var)
        folded.append((w, b))

    params = []
    for w, b in folded[:5]:
        params.append(jnp.asarray(w.T, dtype=jnp.bfloat16))
        params.append(b.reshape(1, -1).astype(jnp.float32))

    # fc3: fold eye(3) into the bias, pad output dim 9 -> 128 for lane-dense stores.
    w_fc3, b_fc3 = folded[5]
    b_fc3 = b_fc3 + jnp.eye(3, dtype=jnp.float32).reshape(9)
    w_fc3_pad = jnp.zeros((256, 128), jnp.float32).at[:, :9].set(w_fc3.T)
    b_fc3_pad = jnp.zeros((1, 128), jnp.float32).at[:, :9].set(b_fc3[None, :])
    params.append(w_fc3_pad.astype(jnp.bfloat16))
    params.append(b_fc3_pad)
    return tuple(params)


def stn3d_reference(x_ncl, params):
    """Plain-JAX reference with identical dtype strategy (bf16 matmuls, f32 acc)."""
    (w1, b1, w2, b2, w3, b3, wf1, bf1, wf2, bf2, wf3, bf3) = params
    x = jnp.transpose(x_ncl, (0, 2, 1)).astype(jnp.bfloat16)                # (B, N, 6)
    lin = lambda a, w, b: jnp.dot(a, w, preferred_element_type=jnp.float32) + b
    h = jnp.maximum(lin(x, w1, b1), 0.0).astype(jnp.bfloat16)
    h = jnp.maximum(lin(h, w2, b2), 0.0).astype(jnp.bfloat16)
    h = jnp.maximum(lin(h, w3, b3), 0.0)                                    # (B, N, 1024) f32
    g = jnp.max(h, axis=1).astype(jnp.bfloat16)                             # (B, 1024)
    f = jnp.maximum(lin(g, wf1, bf1), 0.0).astype(jnp.bfloat16)
    f = jnp.maximum(lin(f, wf2, bf2), 0.0).astype(jnp.bfloat16)
    f = lin(f, wf3, bf3)                                                    # (B, 128), eye folded
    return f[:, :9].reshape(-1, 3, 3)


if __name__ == "__main__":
    key = jax.random.PRNGKey(0)
    k_x, k_p = jax.random.split(key)

    B, C, N = 2, 6, 128                # small point cloud: 128 points, 6 input channels
    x = jax.random.normal(k_x, (B, C, N), jnp.float32)
    params = make_params(k_p)

    out = jax.block_until_ready(stn3d_forward(x, params))
    ref = stn3d_reference(x, params)

    assert out.shape == (B, 3, 3)
    np.testing.assert_allclose(np.asarray(out), np.asarray(ref), rtol=2e-2, atol=2e-2)
    print("KERNEL_OK")
</pallas_src>

<mosaic_0001>
module attributes {stable_mosaic.version = 11 : i64} {
  func.func @_stn3d_kernel(%arg0: i32, %arg1: i32, %arg2: memref<1x128x64xbf16, #tpu.memory_space<vmem>>, %arg3: memref<64x128xbf16, #tpu.memory_space<vmem>>, %arg4: memref<1x128xf32, #tpu.memory_space<vmem>>, %arg5: memref<128x1024xbf16, #tpu.memory_space<vmem>>, %arg6: memref<1x1024xf32, #tpu.memory_space<vmem>>, %arg7: memref<1024x512xbf16, #tpu.memory_space<vmem>>, %arg8: memref<1x512xf32, #tpu.memory_space<vmem>>, %arg9: memref<512x256xbf16, #tpu.memory_space<vmem>>, %arg10: memref<1x256xf32, #tpu.memory_space<vmem>>, %arg11: memref<256x128xbf16, #tpu.memory_space<vmem>>, %arg12: memref<1x128xf32, #tpu.memory_space<vmem>>, %arg13: memref<1x1x128xf32, #tpu.memory_space<vmem>>, %arg14: memref<1x1024xbf16, #tpu.memory_space<vmem>>) attributes {dimension_semantics = [#tpu.dimension_semantics<parallel>, #tpu.dimension_semantics<arbitrary>], iteration_bounds = array<i64: 2, 1>, scalar_prefetch = 0 : i64, scratch_operands = 1 : i64, tpu.core_type = #tpu.core_type<tc>, window_params = [{transform_indices = @transform_0, window_bounds = array<i64: 1, 128, 64>}, {pipeline_mode = #tpu.pipeline_mode<synchronous>, transform_indices = @transform_1, window_bounds = array<i64: 64, 128>}, {pipeline_mode = #tpu.pipeline_mode<synchronous>, transform_indices = @transform_2, window_bounds = array<i64: 1, 128>}, {pipeline_mode = #tpu.pipeline_mode<synchronous>, transform_indices = @transform_3, window_bounds = array<i64: 128, 1024>}, {pipeline_mode = #tpu.pipeline_mode<synchronous>, transform_indices = @transform_4, window_bounds = array<i64: 1, 1024>}, {pipeline_mode = #tpu.pipeline_mode<synchronous>, transform_indices = @transform_5, window_bounds = array<i64: 1024, 512>}, {pipeline_mode = #tpu.pipeline_mode<synchronous>, transform_indices = @transform_6, window_bounds = array<i64: 1, 512>}, {pipeline_mode = #tpu.pipeline_mode<synchronous>, transform_indices = @transform_7, window_bounds = array<i64: 512, 256>}, {pipeline_mode = #tpu.pipeline_mode<synchronous>, transform_indices = @transform_8, window_bounds = array<i64: 1, 256>}, {pipeline_mode = #tpu.pipeline_mode<synchronous>, transform_indices = @transform_9, window_bounds = array<i64: 256, 128>}, {pipeline_mode = #tpu.pipeline_mode<synchronous>, transform_indices = @transform_10, window_bounds = array<i64: 1, 128>}, {transform_indices = @transform_11, window_bounds = array<i64: 1, 1, 128>}]} {
    %c0_i32 = arith.constant 0 : i32
    %0 = arith.cmpi eq, %arg1, %c0_i32 : i32
    %1 = arith.extui %0 : i1 to i32
    %c0_i32_0 = arith.constant 0 : i32
    %2 = arith.cmpi ne, %1, %c0_i32_0 : i32
    scf.if %2 {
      %cst_21 = arith.constant 0.000000e+00 : bf16
      %29 = vector.broadcast %cst_21 : bf16 to vector<1x1024xbf16>
      %c0_22 = arith.constant 0 : index
      %c0_23 = arith.constant 0 : index
      %30 = vector.load %arg14[%c0_22, %c0_23] : memref<1x1024xbf16, #tpu.memory_space<vmem>>, vector<1x1024xbf16>
      tpu.vector_store %arg14[%c0_22, %c0_23], %29 {strides = array<i32>} : memref<1x1024xbf16, #tpu.memory_space<vmem>>, vector<1x1024xbf16>,
    } else {
    }
    %c0 = arith.constant 0 : index
    %c0_1 = arith.constant 0 : index
    %c0_2 = arith.constant 0 : index
    %3 = vector.load %arg2[%c0, %c0_1, %c0_2] : memref<1x128x64xbf16, #tpu.memory_space<vmem>>, vector<1x128x64xbf16>
    %4 = vector.shape_cast %3 : vector<1x128x64xbf16> to vector<128x64xbf16>
    %c0_3 = arith.constant 0 : index
    %c0_4 = arith.constant 0 : index
    %5 = vector.load %arg3[%c0_3, %c0_4] : memref<64x128xbf16, #tpu.memory_space<vmem>>, vector<64x128xbf16>
    %cst = arith.constant dense<0.000000e+00> : vector<128x128xf32>
    %6 = tpu.matmul %4, %5, %cst {dimension_numbers = #tpu.dot_dimension_numbers<[1], [0], [0], [1], [0, 0, 1, 1], [], []>} : vector<128x64xbf16>, vector<64x128xbf16>, vector<128x128xf32> -> vector<128x128xf32>
    %c0_5 = arith.constant 0 : index
    %c0_6 = arith.constant 0 : index
    %7 = vector.load %arg4[%c0_5, %c0_6] : memref<1x128xf32, #tpu.memory_space<vmem>>, vector<1x128xf32>
    %8 = vector.broadcast %7 : vector<1x128xf32> to vector<128x128xf32>
    %9 = arith.addf %6, %8 : vector<128x128xf32>
    %cst_7 = arith.constant 0.000000e+00 : f32
    %10 = vector.broadcast %cst_7 : f32 to vector<128x128xf32>
    %11 = arith.maximumf %9, %10 : vector<128x128xf32>
    %12 = arith.truncf %11 : vector<128x128xf32> to vector<128x128xbf16>
    %c0_8 = arith.constant 0 : index
    %c0_9 = arith.constant 0 : index
    %13 = vector.load %arg5[%c0_8, %c0_9] : memref<128x1024xbf16, #tpu.memory_space<vmem>>, vector<128x1024xbf16>
    %cst_10 = arith.constant dense<0.000000e+00> : vector<128x1024xf32>
    %14 = tpu.matmul %12, %13, %cst_10 {dimension_numbers = #tpu.dot_dimension_numbers<[1], [0], [0], [1], [0, 0, 1, 1], [], []>} : vector<128x128xbf16>, vector<128x1024xbf16>, vector<128x1024xf32> -> vector<128x1024xf32>
    %c0_11 = arith.constant 0 : index
    %c0_12 = arith.constant 0 : index
    %15 = vector.load %arg6[%c0_11, %c0_12] : memref<1x1024xf32, #tpu.memory_space<vmem>>, vector<1x1024xf32>
    %16 = vector.broadcast %15 : vector<1x1024xf32> to vector<128x1024xf32>
    %17 = arith.addf %14, %16 : vector<128x1024xf32>
    %cst_13 = arith.constant 0.000000e+00 : f32
    %18 = vector.broadcast %cst_13 : f32 to vector<128x1024xf32>
    %19 = arith.maximumf %17, %18 : vector<128x1024xf32>
    %20 = vector.shape_cast %19 : vector<128x1024xf32> to vector<1x128x1024xf32>
    %cst_14 = arith.constant dense<0xFF800000> : vector<1x1024xf32>
    %21 = vector.multi_reduction <maximumf>, %20, %cst_14 [1] : vector<1x128x1024xf32> to vector<1x1024xf32>
    %c0_15 = arith.constant 0 : index
    %c0_16 = arith.constant 0 : index
    %22 = vector.load %arg14[%c0_15, %c0_16] : memref<1x1024xbf16, #tpu.memory_space<vmem>>, vector<1x1024xbf16>
    %23 = arith.truncf %21 : vector<1x1024xf32> to vector<1x1024xbf16>
    %24 = arith.maximumf %22, %23 : vector<1x1024xbf16>
    %c0_17 = arith.constant 0 : index
    %c0_18 = arith.constant 0 : index
    %25 = vector.load %arg14[%c0_17, %c0_18] : memref<1x1024xbf16, #tpu.memory_space<vmem>>, vector<1x1024xbf16>
    tpu.vector_store %arg14[%c0_17, %c0_18], %24 {strides = array<i32>} : memref<1x1024xbf16, #tpu.memory_space<vmem>>, vector<1x1024xbf16>,
    %c0_i32_19 = arith.constant 0 : i32
    %26 = arith.cmpi eq, %arg1, %c0_i32_19 : i32
    %27 = arith.extui %26 : i1 to i32
    %c0_i32_20 = arith.constant 0 : i32
    %28 = arith.cmpi ne, %27, %c0_i32_20 : i32
    scf.if %28 {
      %c0_21 = arith.constant 0 : index
      %c0_22 = arith.constant 0 : index
      %29 = vector.load %arg14[%c0_21, %c0_22] : memref<1x1024xbf16, #tpu.memory_space<vmem>>, vector<1x1024xbf16>
      %c0_23 = arith.constant 0 : index
      %c0_24 = arith.constant 0 : index
      %30 = vector.load %arg7[%c0_23, %c0_24] : memref<1024x512xbf16, #tpu.memory_space<vmem>>, vector<1024x512xbf16>
      %cst_25 = arith.constant dense<0.000000e+00> : vector<1x512xf32>
      %31 = tpu.matmul %29, %30, %cst_25 {dimension_numbers = #tpu.dot_dimension_numbers<[1], [0], [0], [1], [0, 0, 1, 1], [], []>} : vector<1x1024xbf16>, vector<1024x512xbf16>, vector<1x512xf32> -> vector<1x512xf32>
      %c0_26 = arith.constant 0 : index
      %c0_27 = arith.constant 0 : index
      %32 = vector.load %arg8[%c0_26, %c0_27] : memref<1x512xf32, #tpu.memory_space<vmem>>, vector<1x512xf32>
      %33 = arith.addf %31, %32 : vector<1x512xf32>
      %cst_28 = arith.constant 0.000000e+00 : f32
      %34 = vector.broadcast %cst_28 : f32 to vector<1x512xf32>
      %35 = arith.maximumf %33, %34 : vector<1x512xf32>
      %36 = arith.truncf %35 : vector<1x512xf32> to vector<1x512xbf16>
      %c0_29 = arith.constant 0 : index
      %c0_30 = arith.constant 0 : index
      %37 = vector.load %arg9[%c0_29, %c0_30] : memref<512x256xbf16, #tpu.memory_space<vmem>>, vector<512x256xbf16>
      %cst_31 = arith.constant dense<0.000000e+00> : vector<1x256xf32>
      %38 = tpu.matmul %36, %37, %cst_31 {dimension_numbers = #tpu.dot_dimension_numbers<[1], [0], [0], [1], [0, 0, 1, 1], [], []>} : vector<1x512xbf16>, vector<512x256xbf16>, vector<1x256xf32> -> vector<1x256xf32>
      %c0_32 = arith.constant 0 : index
      %c0_33 = arith.constant 0 : index
      %39 = vector.load %arg10[%c0_32, %c0_33] : memref<1x256xf32, #tpu.memory_space<vmem>>, vector<1x256xf32>
      %40 = arith.addf %38, %39 : vector<1x256xf32>
      %cst_34 = arith.constant 0.000000e+00 : f32
      %41 = vector.broadcast %cst_34 : f32 to vector<1x256xf32>
      %42 = arith.maximumf %40, %41 : vector<1x256xf32>
      %43 = arith.truncf %42 : vector<1x256xf32> to vector<1x256xbf16>
      %c0_35 = arith.constant 0 : index
      %c0_36 = arith.constant 0 : index
      %44 = vector.load %arg11[%c0_35, %c0_36] : memref<256x128xbf16, #tpu.memory_space<vmem>>, vector<256x128xbf16>
      %cst_37 = arith.constant dense<0.000000e+00> : vector<1x128xf32>
      %45 = tpu.matmul %43, %44, %cst_37 {dimension_numbers = #tpu.dot_dimension_numbers<[1], [0], [0], [1], [0, 0, 1, 1], [], []>} : vector<1x256xbf16>, vector<256x128xbf16>, vector<1x128xf32> -> vector<1x128xf32>
      %c0_38 = arith.constant 0 : index
      %c0_39 = arith.constant 0 : index
      %46 = vector.load %arg12[%c0_38, %c0_39] : memref<1x128xf32, #tpu.memory_space<vmem>>, vector<1x128xf32>
      %47 = arith.addf %45, %46 : vector<1x128xf32>
      %c0_40 = arith.constant 0 : index
      %c0_41 = arith.constant 0 : index
      %c0_42 = arith.constant 0 : index
      %48 = vector.load %arg13[%c0_40, %c0_41, %c0_42] : memref<1x1x128xf32, #tpu.memory_space<vmem>>, vector<1x1x128xf32>
      %49 = vector.shape_cast %48 : vector<1x1x128xf32> to vector<1x128xf32>
      %50 = vector.shape_cast %47 : vector<1x128xf32> to vector<1x1x128xf32>
      tpu.vector_store %arg13[%c0_40, %c0_41, %c0_42], %50 {strides = array<i32>} : memref<1x1x128xf32, #tpu.memory_space<vmem>>, vector<1x1x128xf32>,
    } else {
    }
    return
  }
  func.func @transform_0(%arg0: i32, %arg1: i32) -> (i32, i32, i32) {
    %c0_i32 = arith.constant 0 : i32
    %c0_i32_0 = arith.constant 0 : i32
    return %arg0, %arg1, %c0_i32 : i32, i32, i32
  }
  func.func @transform_1(%arg0: i32, %arg1: i32) -> (i32, i32) {
    %c0_i32 = arith.constant 0 : i32
    %c0_i32_0 = arith.constant 0 : i32
    %c0_i32_1 = arith.constant 0 : i32
    return %c0_i32, %c0_i32_0 : i32, i32
  }
  func.func @transform_2(%arg0: i32, %arg1: i32) -> (i32, i32) {
    %c0_i32 = arith.constant 0 : i32
    %c0_i32_0 = arith.constant 0 : i32
    %c0_i32_1 = arith.constant 0 : i32
    return %c0_i32, %c0_i32_0 : i32, i32
  }
  func.func @transform_3(%arg0: i32, %arg1: i32) -> (i32, i32) {
    %c0_i32 = arith.constant 0 : i32
    %c0_i32_0 = arith.constant 0 : i32
    %c0_i32_1 = arith.constant 0 : i32
    return %c0_i32, %c0_i32_0 : i32, i32
  }
  func.func @transform_4(%arg0: i32, %arg1: i32) -> (i32, i32) {
    %c0_i32 = arith.constant 0 : i32
    %c0_i32_0 = arith.constant 0 : i32
    %c0_i32_1 = arith.constant 0 : i32
    return %c0_i32, %c0_i32_0 : i32, i32
  }
  func.func @transform_5(%arg0: i32, %arg1: i32) -> (i32, i32) {
    %c0_i32 = arith.constant 0 : i32
    %c0_i32_0 = arith.constant 0 : i32
    %c0_i32_1 = arith.constant 0 : i32
    return %c0_i32, %c0_i32_0 : i32, i32
  }
  func.func @transform_6(%arg0: i32, %arg1: i32) -> (i32, i32) {
    %c0_i32 = arith.constant 0 : i32
    %c0_i32_0 = arith.constant 0 : i32
    %c0_i32_1 = arith.constant 0 : i32
    return %c0_i32, %c0_i32_0 : i32, i32
  }
  func.func @transform_7(%arg0: i32, %arg1: i32) -> (i32, i32) {
    %c0_i32 = arith.constant 0 : i32
    %c0_i32_0 = arith.constant 0 : i32
    %c0_i32_1 = arith.constant 0 : i32
    return %c0_i32, %c0_i32_0 : i32, i32
  }
  func.func @transform_8(%arg0: i32, %arg1: i32) -> (i32, i32) {
    %c0_i32 = arith.constant 0 : i32
    %c0_i32_0 = arith.constant 0 : i32
    %c0_i32_1 = arith.constant 0 : i32
    return %c0_i32, %c0_i32_0 : i32, i32
  }
  func.func @transform_9(%arg0: i32, %arg1: i32) -> (i32, i32) {
    %c0_i32 = arith.constant 0 : i32
    %c0_i32_0 = arith.constant 0 : i32
    %c0_i32_1 = arith.constant 0 : i32
    return %c0_i32, %c0_i32_0 : i32, i32
  }
  func.func @transform_10(%arg0: i32, %arg1: i32) -> (i32, i32) {
    %c0_i32 = arith.constant 0 : i32
    %c0_i32_0 = arith.constant 0 : i32
    %c0_i32_1 = arith.constant 0 : i32
    return %c0_i32, %c0_i32_0 : i32, i32
  }
  func.func @transform_11(%arg0: i32, %arg1: i32) -> (i32, i32, i32) {
    %c0_i32 = arith.constant 0 : i32
    %c0_i32_0 = arith.constant 0 : i32
    %c0_i32_1 = arith.constant 0 : i32
    return %arg0, %c0_i32, %c0_i32_0 : i32, i32, i32
  }
}

</mosaic_0001>

<llo_original>
// kernel: tpu_custom_call.1
$region0: #{tpu_custom_call.1}
  #allocation0 [shape = 'u32[]', space=smem, size = 0x4, offset = 0x4, fixed_abs, tag = 'smem constant byte address 0x4 - core index']
  #allocation1 [shape = 'u32[144,128]{1,0:T(1,128)}', space=vmem, size = 0x12000, scoped, tag = 'internal scratch']
  #allocation2 [shape = 'bf16[1,1024]{1,0:T(2,128)(2,1)}', space=vmem, size = 0x1000, scoped, tag = 'scratch operand']
  %s0 = inlined_call_operand.vmem [shape: bf16[2,128,64], index: 0, kind: input, shape index: {}]
  %s1 = inlined_call_operand.vmem [shape: bf16[64,128], index: 1, kind: input, shape index: {}]
  %s2 = inlined_call_operand.vmem [shape: f32[1,128], index: 2, kind: input, shape index: {}]
  %s3 = inlined_call_operand.hbm [shape: bf16[128,1024], index: 3, kind: input, shape index: {}]
  %s4 = inlined_call_operand.vmem [shape: f32[1,1024], index: 4, kind: input, shape index: {}]
  %s5 = inlined_call_operand.hbm [shape: bf16[1024,512], index: 5, kind: input, shape index: {}]
  %s6 = inlined_call_operand.vmem [shape: f32[1,512], index: 6, kind: input, shape index: {}]
  %s7 = inlined_call_operand.hbm [shape: bf16[512,256], index: 7, kind: input, shape index: {}]
  %s8 = inlined_call_operand.vmem [shape: f32[1,256], index: 8, kind: input, shape index: {}]
  %s9 = inlined_call_operand.vmem [shape: bf16[256,128], index: 9, kind: input, shape index: {}]
  %s10 = inlined_call_operand.vmem [shape: f32[1,128], index: 10, kind: input, shape index: {}]
  %s11 = inlined_call_operand.hbm [shape: f32[2,1,128], index: 11, kind: output, shape index: {}]
  %s12 = sld [smem:[#allocation0]]
  $region97: #{tpu_custom_call.1} parent=0
    _
  %s14 = ssub.s32 1, %s12
  %s15 = scalar_select 0, %s14, %s12
  $region1: #{tpu_custom_call.1} parent=0
    #allocation3 [shape = 'u8[262144]{0}', space=vmem, size = 0x40000, scoped, tag = 'input window, operand 3, single buffered']
    #allocation4 [shape = 's32[2]{0}', space=sflag, size = 0x8, scoped, tag = 'scoped memory for tpu_custom_call.1']
    #allocation5 [shape = 's32[2]{0}', space=sflag, size = 0x8, scoped, tag = 'scoped memory for tpu_custom_call.1']
    #allocation6 [shape = 'u8[1048576]{0}', space=vmem, size = 0x100000, scoped, tag = 'input window, operand 5, single buffered']
    #allocation7 [shape = 's32[1]{0}', space=sflag, size = 0x4, scoped, tag = 'scoped memory for tpu_custom_call.1']
    #allocation8 [shape = 'u8[262144]{0}', space=vmem, size = 0x40000, scoped, tag = 'input window, operand 7, single buffered']
    #allocation9 [shape = 'u8[1024]{0}', space=vmem, size = 0x400, scoped, tag = 'output window, operand 0']
    %16 = vsyncpa [#allocation4], 0
    %17 = vsyncpa [#allocation7], 0
    %18 = vsyncpa [#allocation5], 0
    %s19 = scalar_lea.sflag [#allocation5], 1
    %20 = vsyncpa %s19, 0
    loop: start=0, step=1, limit=4
    $region2: #{tpu_custom_call.1} parent=1 // loop_pre_header
      _
    $region3: #{tpu_custom_call.1} parent=1 // loop_header
      %s22 = sphi 0, %s26
      %p23 = scmp.ge.s32.totalorder %s22, 4
      %s29 = sphi 0, %s41
      %s30 = sphi 0, %s37
      %s31 = sphi 0, %s29
      %s32 = sphi 0, %s30
      %s33 = sphi 0, %s31
      %s34 = sphi 0, %s32
      %s46 = sphi 0, %s48
      %s49 = sphi 0, %s46
      %s50 = sphi 0, %s49
      %s66 = sphi 0, %s50
      %s70 = sphi 0, %s70
      %s72 = sphi 0, %s70
      %s73 = sphi 0, %s72
      %s87 = sphi 0, %s73
      %s91 = sphi 0, %s91
      %s93 = sphi 0, %s91
      %s94 = sphi 0, %s93
      %s108 = sphi 0, %s94
      %s112 = sphi 0, %s112
      %s114 = sphi 0, %s112
      %s115 = sphi 0, %s114
      %s129 = sphi 0, %s115
      %s133 = sphi 0, %s133
      %s135 = sphi 0, %s133
      %s136 = sphi 0, %s135
      %s150 = sphi 0, %s136
      %s154 = sphi 0, %s154
      %s156 = sphi 0, %s154
      %s157 = sphi 0, %s156
      %s171 = sphi 0, %s157
      %s175 = sphi 0, %s175
      %s177 = sphi 0, %s175
      %s178 = sphi 0, %s177
      %s192 = sphi 0, %s178
      %s196 = sphi 0, %s196
      %s198 = sphi 0, %s196
      %s199 = sphi 0, %s198
      %s213 = sphi 0, %s199
      %s217 = sphi 0, %s217
      %s219 = sphi 0, %s217
      %s220 = sphi 0, %s219
      %s234 = sphi 0, %s220
      %s238 = sphi 0, %s238
      %s240 = sphi 0, %s238
      %s241 = sphi 0, %s240
      %s255 = sphi 0, %s241
      %s259 = sphi 0, %s259
      %s261 = sphi 0, %s259
      %s262 = sphi 0, %s261
      %s276 = sphi 0, %s262
      %s282 = sphi 0, %s284
      %s285 = sphi 0, %s282
      %s286 = sphi 0, %s285
      %s302 = sphi 0, %s286
    $region4: #{tpu_custom_call.1} parent=1 // loop_header_branch
      %25 = sbr.rel (%p23) target = $region8
    $region5: #{tpu_custom_call.1} parent=1 // loop_body
      %s27 = ssub.s32 %s22, 1
      %s28 = ssub.s32 %s22, 2
      %s35 = sadd.s32 1, %s30
      %p36 = scmp.ge.s32.totalorder %s35, 1
      %s37 = scalar_select %p36, 0, %s35
      %s38 = sadd.s32 1, %s29
      %s39 = scalar_select %p36, %s38, %s29
      %p40 = scmp.ge.s32.totalorder %s39, 2
      %s41 = scalar_select %p40, 0, %s39
      %s42 = ssub.s32 %s29, %s41
      %s43 = ssub.s32 %s30, %s37
      %s44 = sor.u32 %s42, %s43
      %p45 = scmp.eq.s32.totalorder %s44, 0
      %s47 = sadd.s32 %s46, 1
      %s48 = scalar_select %p45, %s46, %s47
      %p51 = pneg %p45
      %p52 = scmp.eq.s32.totalorder %s22, 1
      %p53 = por %p51, %p52
      %p54 = scmp.ne.s32.totalorder %s46, %s49
      %p55 = scmp.eq.s32.totalorder %s22, 0
      %p56 = por %p54, %p55
      %p57 = scmp.ne.s32.totalorder %s46, %s49
      %p58 = scmp.eq.s32.totalorder %s27, 1
      %p59 = por %p57, %p58
      %p60 = scmp.ne.s32.totalorder %s49, %s50
      %p61 = scmp.eq.s32.totalorder %s27, 0
      %p62 = por %p60, %p61
      %p63 = scmp.ne.s32.totalorder %s49, %s50
      %p64 = scmp.eq.s32.totalorder %s28, 1
      %p65 = por %p63, %p64
      %p67 = scmp.ne.s32.totalorder %s50, %s66
      %p68 = scmp.eq.s32.totalorder %s28, 0
      %p69 = por %p67, %p68
      %s71 = sadd.s32 %s70, 1
      %p74 = scmp.eq.s32.totalorder %s22, 1
      %p75 = scmp.ne.s32.totalorder %s70, %s72
      %p76 = scmp.eq.s32.totalorder %s22, 0
      %p77 = por %p75, %p76
      %p78 = scmp.ne.s32.totalorder %s70, %s72
      %p79 = scmp.eq.s32.totalorder %s27, 1
      %p80 = por %p78, %p79
      %p81 = scmp.ne.s32.totalorder %s72, %s73
      %p82 = scmp.eq.s32.totalorder %s27, 0
      %p83 = por %p81, %p82
      %p84 = scmp.ne.s32.totalorder %s72, %s73
      %p85 = scmp.eq.s32.totalorder %s28, 1
      %p86 = por %p84, %p85
      %p88 = scmp.ne.s32.totalorder %s73, %s87
      %p89 = scmp.eq.s32.totalorder %s28, 0
      %p90 = por %p88, %p89
      %s92 = sadd.s32 %s91, 1
      %p95 = scmp.eq.s32.totalorder %s22, 1
      %p96 = scmp.ne.s32.totalorder %s91, %s93
      %p97 = scmp.eq.s32.totalorder %s22, 0
      %p98 = por %p96, %p97
      %p99 = scmp.ne.s32.totalorder %s91, %s93
      %p100 = scmp.eq.s32.totalorder %s27, 1
      %p101 = por %p99, %p100
      %p102 = scmp.ne.s32.totalorder %s93, %s94
      %p103 = scmp.eq.s32.totalorder %s27, 0
      %p104 = por %p102, %p103
      %p105 = scmp.ne.s32.totalorder %s93, %s94
      %p106 = scmp.eq.s32.totalorder %s28, 1
      %p107 = por %p105, %p106
      %p109 = scmp.ne.s32.totalorder %s94, %s108
      %p110 = scmp.eq.s32.totalorder %s28, 0
      %p111 = por %p109, %p110
      %s113 = sadd.s32 %s112, 1
      %p116 = scmp.eq.s32.totalorder %s22, 1
      %p117 = scmp.ne.s32.totalorder %s112, %s114
      %p118 = scmp.eq.s32.totalorder %s22, 0
      %p119 = por %p117, %p118
      %p120 = scmp.ne.s32.totalorder %s112, %s114
      %p121 = scmp.eq.s32.totalorder %s27, 1
      %p122 = por %p120, %p121
      %p123 = scmp.ne.s32.totalorder %s114, %s115
      %p124 = scmp.eq.s32.totalorder %s27, 0
      %p125 = por %p123, %p124
      %p126 = scmp.ne.s32.totalorder %s114, %s115
      %p127 = scmp.eq.s32.totalorder %s28, 1
      %p128 = por %p126, %p127
      %p130 = scmp.ne.s32.totalorder %s115, %s129
      %p131 = scmp.eq.s32.totalorder %s28, 0
      %p132 = por %p130, %p131
      %s134 = sadd.s32 %s133, 1
      %p137 = scmp.eq.s32.totalorder %s22, 1
      %p138 = scmp.ne.s32.totalorder %s133, %s135
      %p139 = scmp.eq.s32.totalorder %s22, 0
      %p140 = por %p138, %p139
      %p141 = scmp.ne.s32.totalorder %s133, %s135
      %p142 = scmp.eq.s32.totalorder %s27, 1
      %p143 = por %p141, %p142
      %p144 = scmp.ne.s32.totalorder %s135, %s136
      %p145 = scmp.eq.s32.totalorder %s27, 0
      %p146 = por %p144, %p145
      %p147 = scmp.ne.s32.totalorder %s135, %s136
      %p148 = scmp.eq.s32.totalorder %s28, 1
      %p149 = por %p147, %p148
      %p151 = scmp.ne.s32.totalorder %s136, %s150
      %p152 = scmp.eq.s32.totalorder %s28, 0
      %p153 = por %p151, %p152
      %s155 = sadd.s32 %s154, 1
      %p158 = scmp.eq.s32.totalorder %s22, 1
      %p159 = scmp.ne.s32.totalorder %s154, %s156
      %p160 = scmp.eq.s32.totalorder %s22, 0
      %p161 = por %p159, %p160
      %p162 = scmp.ne.s32.totalorder %s154, %s156
      %p163 = scmp.eq.s32.totalorder %s27, 1
      %p164 = por %p162, %p163
      %p165 = scmp.ne.s32.totalorder %s156, %s157
      %p166 = scmp.eq.s32.totalorder %s27, 0
      %p167 = por %p165, %p166
      %p168 = scmp.ne.s32.totalorder %s156, %s157
      %p169 = scmp.eq.s32.totalorder %s28, 1
      %p170 = por %p168, %p169
      %p172 = scmp.ne.s32.totalorder %s157, %s171
      %p173 = scmp.eq.s32.totalorder %s28, 0
      %p174 = por %p172, %p173
      %s176 = sadd.s32 %s175, 1
      %p179 = scmp.eq.s32.totalorder %s22, 1
      %p180 = scmp.ne.s32.totalorder %s175, %s177
      %p181 = scmp.eq.s32.totalorder %s22, 0
      %p182 = por %p180, %p181
      %p183 = scmp.ne.s32.totalorder %s175, %s177
      %p184 = scmp.eq.s32.totalorder %s27, 1
      %p185 = por %p183, %p184
      %p186 = scmp.ne.s32.totalorder %s177, %s178
      %p187 = scmp.eq.s32.totalorder %s27, 0
      %p188 = por %p186, %p187
      %p189 = scmp.ne.s32.totalorder %s177, %s178
      %p190 = scmp.eq.s32.totalorder %s28, 1
      %p191 = por %p189, %p190
      %p193 = scmp.ne.s32.totalorder %s178, %s192
      %p194 = scmp.eq.s32.totalorder %s28, 0
      %p195 = por %p193, %p194
      %s197 = sadd.s32 %s196, 1
      %p200 = scmp.eq.s32.totalorder %s22, 1
      %p201 = scmp.ne.s32.totalorder %s196, %s198
      %p202 = scmp.eq.s32.totalorder %s22, 0
      %p203 = por %p201, %p202
      %p204 = scmp.ne.s32.totalorder %s196, %s198
      %p205 = scmp.eq.s32.totalorder %s27, 1
      %p206 = por %p204, %p205
      %p207 = scmp.ne.s32.totalorder %s198, %s199
      %p208 = scmp.eq.s32.totalorder %s27, 0
      %p209 = por %p207, %p208
      %p210 = scmp.ne.s32.totalorder %s198, %s199
      %p211 = scmp.eq.s32.totalorder %s28, 1
      %p212 = por %p210, %p211
      %p214 = scmp.ne.s32.totalorder %s199, %s213
      %p215 = scmp.eq.s32.totalorder %s28, 0
      %p216 = por %p214, %p215
      %s218 = sadd.s32 %s217, 1
      %p221 = scmp.eq.s32.totalorder %s22, 1
      %p222 = scmp.ne.s32.totalorder %s217, %s219
      %p223 = scmp.eq.s32.totalorder %s22, 0
      %p224 = por %p222, %p223
      %p225 = scmp.ne.s32.totalorder %s217, %s219
      %p226 = scmp.eq.s32.totalorder %s27, 1
      %p227 = por %p225, %p226
      %p228 = scmp.ne.s32.totalorder %s219, %s220
      %p229 = scmp.eq.s32.totalorder %s27, 0
      %p230 = por %p228, %p229
      %p231 = scmp.ne.s32.totalorder %s219, %s220
      %p232 = scmp.eq.s32.totalorder %s28, 1
      %p233 = por %p231, %p232
      %p235 = scmp.ne.s32.totalorder %s220, %s234
      %p236 = scmp.eq.s32.totalorder %s28, 0
      %p237 = por %p235, %p236
      %s239 = sadd.s32 %s238, 1
      %p242 = scmp.eq.s32.totalorder %s22, 1
      %p243 = scmp.ne.s32.totalorder %s238, %s240
      %p244 = scmp.eq.s32.totalorder %s22, 0
      %p245 = por %p243, %p244
      %p246 = scmp.ne.s32.totalorder %s238, %s240
      %p247 = scmp.eq.s32.totalorder %s27, 1
      %p248 = por %p246, %p247
      %p249 = scmp.ne.s32.totalorder %s240, %s241
      %p250 = scmp.eq.s32.totalorder %s27, 0
      %p251 = por %p249, %p250
      %p252 = scmp.ne.s32.totalorder %s240, %s241
      %p253 = scmp.eq.s32.totalorder %s28, 1
      %p254 = por %p252, %p253
      %p256 = scmp.ne.s32.totalorder %s241, %s255
      %p257 = scmp.eq.s32.totalorder %s28, 0
      %p258 = por %p256, %p257
      %s260 = sadd.s32 %s259, 1
      %p263 = scmp.eq.s32.totalorder %s22, 1
      %p264 = scmp.ne.s32.totalorder %s259, %s261
      %p265 = scmp.eq.s32.totalorder %s22, 0
      %p266 = por %p264, %p265
      %p267 = scmp.ne.s32.totalorder %s259, %s261
      %p268 = scmp.eq.s32.totalorder %s27, 1
      %p269 = por %p267, %p268
      %p270 = scmp.ne.s32.totalorder %s261, %s262
      %p271 = scmp.eq.s32.totalorder %s27, 0
      %p272 = por %p270, %p271
      %p273 = scmp.ne.s32.totalorder %s261, %s262
      %p274 = scmp.eq.s32.totalorder %s28, 1
      %p275 = por %p273, %p274
      %p277 = scmp.ne.s32.totalorder %s262, %s276
      %p278 = scmp.eq.s32.totalorder %s28, 0
      %p279 = por %p277, %p278
      %s280 = ssub.s32 %s29, %s41
      %p281 = scmp.eq.s32.totalorder %s280, 0
      %s283 = sadd.s32 %s282, 1
      %s284 = scalar_select %p281, %s282, %s283
      %p287 = pneg %p281
      %p288 = scmp.eq.s32.totalorder %s22, 1
      %p289 = por %p287, %p288
      %p290 = scmp.ne.s32.totalorder %s282, %s285
      %p291 = scmp.eq.s32.totalorder %s22, 0
      %p292 = por %p290, %p291
      %p293 = scmp.ne.s32.totalorder %s282, %s285
      %p294 = scmp.eq.s32.totalorder %s27, 1
      %p295 = por %p293, %p294
      %p296 = scmp.ne.s32.totalorder %s285, %s286
      %p297 = scmp.eq.s32.totalorder %s27, 0
      %p298 = por %p296, %p297
      %p299 = scmp.ne.s32.totalorder %s285, %s286
      %p300 = scmp.eq.s32.totalorder %s28, 1
      %p301 = por %p299, %p300
      %p303 = scmp.ne.s32.totalorder %s286, %s302
      %p304 = scmp.eq.s32.totalorder %s28, 0
      %p305 = por %p303, %p304
      %p306 = scmp.le.s32.totalorder 1, %s22
      %p307 = scmp.lt.s32.totalorder %s22, 3
      %p308 = pnand %p306, %p307
      %p309 = pneg %p308
      // Predicated region
      $region9: #{tpu_custom_call.1} parent=5 // pred_check
        _
      $region10: #{tpu_custom_call.1} parent=5 // pred_check_branch
        %311 = sbr.rel (%p308) target = $region12
      $region11: #{tpu_custom_call.1} parent=5 // pred_region
        %s312 = ssub.s32 %s22, 1
        // Predicated region
        $region13: #{tpu_custom_call.1} parent=11 // pred_check
          %p313 = pneg %p83
        $region14: #{tpu_custom_call.1} parent=11 // pred_check_branch
          %315 = sbr.rel (%p313) target = $region16
        $region15: #{tpu_custom_call.1} parent=11 // pred_region
          _
        $region16: #{tpu_custom_call.1} parent=11 // pred_fallthru
          _
        // Predicated region
        $region17: #{tpu_custom_call.1} parent=11 // pred_check
          %p316 = pneg %p104
        $region18: #{tpu_custom_call.1} parent=11 // pred_check_branch
          %318 = sbr.rel (%p316) target = $region20
        $region19: #{tpu_custom_call.1} parent=11 // pred_region
          _
        $region20: #{tpu_custom_call.1} parent=11 // pred_fallthru
          _
        // Predicated region
        $region21: #{tpu_custom_call.1} parent=11 // pred_check
          %p319 = pneg %p125
        $region22: #{tpu_custom_call.1} parent=11 // pred_check_branch
          %321 = sbr.rel (%p319) target = $region24
        $region23: #{tpu_custom_call.1} parent=11 // pred_region
          %s323 = ssub.s32 8192, 8192
          %324 = vsyncadd [#allocation4], %s323
          %s325 = sshll.u32 [#allocation3], 4
          %s326 = int_to_ptr.vmem [resolvable:$true] %s325
          %331 = dma.hbm_to_vmem [thread:$0]  %s3, 8192, %s326, [#allocation4], 512, 512, 32
        $region24: #{tpu_custom_call.1} parent=11 // pred_fallthru
          _
        // Predicated region
        $region25: #{tpu_custom_call.1} parent=11 // pred_check
          %p332 = pneg %p146
        $region26: #{tpu_custom_call.1} parent=11 // pred_check_branch
          %334 = sbr.rel (%p332) target = $region28
        $region27: #{tpu_custom_call.1} parent=11 // pred_region
          _
        $region28: #{tpu_custom_call.1} parent=11 // pred_fallthru
          _
        // Predicated region
        $region29: #{tpu_custom_call.1} parent=11 // pred_check
          %p335 = pneg %p167
        $region30: #{tpu_custom_call.1} parent=11 // pred_check_branch
          %337 = sbr.rel (%p335) target = $region32
        $region31: #{tpu_custom_call.1} parent=11 // pred_region
          %s339 = ssub.s32 32768, 32768
          %340 = vsyncadd [#allocation7], %s339
          %s341 = sshll.u32 [#allocation6], 4
          %s342 = int_to_ptr.vmem [resolvable:$true] %s341
          %347 = dma.hbm_to_vmem [thread:$0]  %s5, 32768, %s342, [#allocation7], 256, 256, 16
        $region32: #{tpu_custom_call.1} parent=11 // pred_fallthru
          _
        // Predicated region
        $region33: #{tpu_custom_call.1} parent=11 // pred_check
          %p348 = pneg %p188
        $region34: #{tpu_custom_call.1} parent=11 // pred_check_branch
          %350 = sbr.rel (%p348) target = $region36
        $region35: #{tpu_custom_call.1} parent=11 // pred_region
          _
        $region36: #{tpu_custom_call.1} parent=11 // pred_fallthru
          _
        // Predicated region
        $region37: #{tpu_custom_call.1} parent=11 // pred_check
          %p351 = pneg %p209
        $region38: #{tpu_custom_call.1} parent=11 // pred_check_branch
          %353 = sbr.rel (%p351) target = $region40
        $region39: #{tpu_custom_call.1} parent=11 // pred_region
          %s355 = ssub.s32 8192, 8192
          %356 = vsyncadd [#allocation7], %s355
          %s357 = sshll.u32 [#allocation8], 4
          %s358 = int_to_ptr.vmem [resolvable:$true] %s357
          %363 = dma.hbm_to_vmem [thread:$0]  %s7, 8192, %s358, [#allocation7], 128, 128, 8
        $region40: #{tpu_custom_call.1} parent=11 // pred_fallthru
          _
        // Predicated region
        $region41: #{tpu_custom_call.1} parent=11 // pred_check
          %p364 = pneg %p230
        $region42: #{tpu_custom_call.1} parent=11 // pred_check_branch
          %366 = sbr.rel (%p364) target = $region44
        $region43: #{tpu_custom_call.1} parent=11 // pred_region
          _
        $region44: #{tpu_custom_call.1} parent=11 // pred_fallthru
          _
        // Predicated region
        $region45: #{tpu_custom_call.1} parent=11 // pred_check
          %p367 = pneg %p251
        $region46: #{tpu_custom_call.1} parent=11 // pred_check_branch
          %369 = sbr.rel (%p367) target = $region48
        $region47: #{tpu_custom_call.1} parent=11 // pred_region
          _
        $region48: #{tpu_custom_call.1} parent=11 // pred_fallthru
          _
        // Predicated region
        $region49: #{tpu_custom_call.1} parent=11 // pred_check
          %p370 = pneg %p272
        $region50: #{tpu_custom_call.1} parent=11 // pred_check_branch
          %372 = sbr.rel (%p370) target = $region52
        $region51: #{tpu_custom_call.1} parent=11 // pred_region
          _
        $region52: #{tpu_custom_call.1} parent=11 // pred_fallthru
          _
      $region12: #{tpu_custom_call.1} parent=5 // pred_fallthru
        _
      %p373 = scmp.lt.s32.totalorder %s22, 2
      // Predicated region
      $region53: #{tpu_custom_call.1} parent=5 // pred_check
        %p374 = pneg %p373
      $region54: #{tpu_custom_call.1} parent=5 // pred_check_branch
        %376 = sbr.rel (%p374) target = $region56
      $region55: #{tpu_custom_call.1} parent=5 // pred_region
        // Predicated region
        $region57: #{tpu_custom_call.1} parent=55 // pred_check
          %p377 = pneg %p56
        $region58: #{tpu_custom_call.1} parent=55 // pred_check_branch
          %379 = sbr.rel (%p377) target = $region60
        $region59: #{tpu_custom_call.1} parent=55 // pred_region
          %s380 = smul.u32 16, %s30
          %p381 = scmp.lt.s32.totalorder %s29, 1
          %s382 = scalar_select %p381, %s29, 1
          %p383 = scmp.lt.s32.totalorder %s380, 15
          %s384 = scalar_select %p383, %s380, 15
          %s385 = smul.addr %s382, 16
          %s386 = sadd.s32 %s384, %s385
          %s387 = smul.addr %s386, 4
          %s388 = scalar_lea.vmem %s0, %s387
          %s389 = smul.u32 16, %s30
        $region60: #{tpu_custom_call.1} parent=55 // pred_fallthru
          _
      $region56: #{tpu_custom_call.1} parent=5 // pred_fallthru
        _
      %p390 = scmp.le.s32.totalorder 1, %s22
      %p391 = scmp.lt.s32.totalorder %s22, 3
      %p392 = pnand %p390, %p391
      %p393 = pneg %p392
      // Predicated region
      $region61: #{tpu_custom_call.1} parent=5 // pred_check
        _
      $region62: #{tpu_custom_call.1} parent=5 // pred_check_branch
        %395 = sbr.rel (%p392) target = $region64
      $region63: #{tpu_custom_call.1} parent=5 // pred_region
        %s396 = ssub.s32 %s22, 1
        // Predicated region
        $region65: #{tpu_custom_call.1} parent=63 // pred_check
          %p397 = pneg %p125
        $region66: #{tpu_custom_call.1} parent=63 // pred_check_branch
          %399 = sbr.rel (%p397) target = $region68
        $region67: #{tpu_custom_call.1} parent=63 // pred_region
          %400 = dma.done [#allocation4], 8192
        $region68: #{tpu_custom_call.1} parent=63 // pred_fallthru
          _
        // Predicated region
        $region69: #{tpu_custom_call.1} parent=63 // pred_check
          %p401 = pneg %p167
        $region70: #{tpu_custom_call.1} parent=63 // pred_check_branch
          %403 = sbr.rel (%p401) target = $region72
        $region71: #{tpu_custom_call.1} parent=63 // pred_region
          %404 = dma.done [#allocation7], 32768
        $region72: #{tpu_custom_call.1} parent=63 // pred_fallthru
          _
        // Predicated region
        $region73: #{tpu_custom_call.1} parent=63 // pred_check
          %p405 = pneg %p209
        $region74: #{tpu_custom_call.1} parent=63 // pred_check_branch
          %407 = sbr.rel (%p405) target = $region76
        $region75: #{tpu_custom_call.1} parent=63 // pred_region
          %408 = dma.done [#allocation7], 8192
        $region76: #{tpu_custom_call.1} parent=63 // pred_fallthru
          _
        %s409 = smul.u32 16, %s32
        %p410 = scmp.lt.s32.totalorder %s31, 1
        %s411 = scalar_select %p410, %s31, 1
        %p412 = scmp.lt.s32.totalorder %s409, 15
        %s413 = scalar_select %p412, %s409, 15
        %s414 = smul.addr %s411, 16
        %s415 = sadd.s32 %s413, %s414
        %s416 = smul.addr %s415, 4
        %s417 = scalar_lea.vmem %s0, %s416
        %p418 = pneg %p62
        %p419 = pneg %p59
        %p420 = pneg %p83
        %p421 = pneg %p80
        %p422 = pneg %p104
        %p423 = pneg %p101
        %p424 = pneg %p125
        %p425 = pneg %p122
        %p426 = pneg %p146
        %p427 = pneg %p143
        %p428 = pneg %p167
        %p429 = pneg %p164
        %p430 = pneg %p188
        %p431 = pneg %p185
        %p432 = pneg %p209
        %p433 = pneg %p206
        %p434 = pneg %p230
        %p435 = pneg %p227
        %p436 = pneg %p251
        %p437 = pneg %p248
        %p438 = pneg %p272
        %p439 = pneg %p269
        %p440 = pneg %p298
        %p441 = pneg %p295
        %s442 = sand.u32 %s285, 1
        %s443 = scalar_lea.sflag [#allocation5], %s442
        %s444 = sand.u32 %s285, 1
        %s445 = scalar_lea.vmem [#allocation9], %s444
        %s446 = smul.u32 16, %s32
        %p447 = scmp.lt.s32.totalorder %s31, 1
        %s448 = scalar_select %p447, %s31, 1
        %p449 = scmp.lt.s32.totalorder %s446, 15
        %s450 = scalar_select %p449, %s446, 15
        %s451 = smul.addr %s448, 16
        %s452 = sadd.s32 %s450, %s451
        %s453 = smul.addr %s452, 4
        %s454 = scalar_lea.vmem %s0, %s453
        %s455 = smul.u32 16, %s32
        %p457 = scmp.eq.s32.totalorder %s32, 0
        // Predicated region
        $region77: #{tpu_custom_call.1} parent=63 // pred_check
          %p458 = pneg %p457
        $region78: #{tpu_custom_call.1} parent=63 // pred_check_branch
          %460 = sbr.rel (%p458) target = $region80
        $region79: #{tpu_custom_call.1} parent=63 // pred_region
          %vm461 = vcmask 1040384
          %vm462 = vsmask.f32 256
          %vm463 = vmand %vm461, %vm462
          %vm464 = vcmask 1041409
          %vm465 = vsmask.f32 1280
          %vm466 = vmand %vm464, %vm465
          %vm467 = vmor %vm466, %vm463
          %vm468 = vcmask 1042434
          %vm469 = vsmask.f32 2304
          %vm470 = vmand %vm468, %vm469
          %vm471 = vmor %vm470, %vm467
          %vm472 = vcmask 1043459
          %vm473 = vsmask.f32 3328
          %vm474 = vmand %vm472, %vm473
          %vm475 = vmor %vm474, %vm471
          %vm476 = vcmask 1044484
          %vm477 = vsmask.f32 4352
          %vm478 = vmand %vm476, %vm477
          %vm479 = vmor %vm478, %vm475
          %vm480 = vcmask 1045509
          %vm481 = vsmask.f32 5376
          %vm482 = vmand %vm480, %vm481
          %vm483 = vmor %vm482, %vm479
          %vm484 = vcmask 1046534
          %vm485 = vsmask.f32 6400
          %vm486 = vmand %vm484, %vm485
          %vm487 = vmor %vm486, %vm483
          %vm488 = vcmask 1047559
          %vm489 = vsmask.f32 7424
          %vm490 = vmand %vm488, %vm489
          %vm491 = vmor %vm490, %vm487
          %v492 = vld [vmem:[#allocation2] sm:$0xff]
          %v493 = vsel %vm491, 0, %v492
          %494 = vst [vmem:[#allocation2] sm:$0xff] %v493
        $region80: #{tpu_custom_call.1} parent=63 // pred_fallthru
          _
        %v495 = vld [vmem:[%s454] sm:$0xf]
        %v496 = vld [vmem:[%s454 + $0x4] sm:$0xf]
        %v497 = vld [vmem:[%s454 + $0x8] sm:$0xf]
        %v498 = vld [vmem:[%s454 + $0xc] sm:$0xf]
        %v499 = vld [vmem:[%s454 + $0x10] sm:$0xf]
        %v500 = vld [vmem:[%s454 + $0x14] sm:$0xf]
        %v501 = vld [vmem:[%s454 + $0x18] sm:$0xf]
        %v502 = vld [vmem:[%s454 + $0x1c] sm:$0xf]
        %v503 = vld [vmem:[%s454 + $0x20] sm:$0xf]
        %v504 = vld [vmem:[%s454 + $0x24] sm:$0xf]
        %v505 = vld [vmem:[%s454 + $0x28] sm:$0xf]
        %v506 = vld [vmem:[%s454 + $0x2c] sm:$0xf]
        %v507 = vld [vmem:[%s454 + $0x30] sm:$0xf]
        %v508 = vld [vmem:[%s454 + $0x34] sm:$0xf]
        %v509 = vld [vmem:[%s454 + $0x38] sm:$0xf]
        %v510 = vld [vmem:[%s454 + $0x3c] sm:$0xf]
        %v511 = vld [vmem:[%s1] sm:$0xf]
        %v512 = vld [vmem:[%s1 + $0x4] sm:$0xf]
        %v513 = vld [vmem:[%s1 + $0x8] sm:$0xf]
        %v514 = vld [vmem:[%s1 + $0xc] sm:$0xf]
        %v515 = vld [vmem:[%s1 + $0x10] sm:$0xf]
        %v516 = vld [vmem:[%s1 + $0x14] sm:$0xf]
        %v517 = vld [vmem:[%s1 + $0x18] sm:$0xf]
        %v518 = vld [vmem:[%s1 + $0x1c] sm:$0xf]
        %v519 = vld [vmem:[%s2] sm:$0x1]
        %v521 = vlaneseq
        %v522 = vshrl.u32 %v521, 7
        %v523 = vsub.s32 0, %v522
        %v524 = vrot.slane %v519, %v523
        %v542 = vunpack.c.l.b16 %v495
        %v543 = vunpack.c.l.b16 %v496
        %v544 = vunpack.c.l.b16 %v497
        %v545 = vunpack.c.l.b16 %v498
        %v546 = vunpack.c.l.b16 %v499
        %v547 = vunpack.c.l.b16 %v500
        %v548 = vunpack.c.l.b16 %v501
        %v549 = vunpack.c.l.b16 %v502
        %v550 = vunpack.c.l.b16 %v503
        %v551 = vunpack.c.l.b16 %v504
        %v552 = vunpack.c.l.b16 %v505
        %v553 = vunpack.c.l.b16 %v506
        %v554 = vunpack.c.l.b16 %v507
        %v555 = vunpack.c.l.b16 %v508
        %v556 = vunpack.c.l.b16 %v509
        %v557 = vunpack.c.l.b16 %v510
        %v558 = vpack.c.b16 %v543, %v542
        %v559 = vpack.c.b16 %v545, %v544
        %v560 = vpack.c.b16 %v547, %v546
        %v561 = vpack.c.b16 %v549, %v548
        %v562 = vpack.c.b16 %v551, %v550
        %v563 = vpack.c.b16 %v553, %v552
        %v564 = vpack.c.b16 %v555, %v554
        %v565 = vpack.c.b16 %v557, %v556
        %v574 = vunpack.c.l.b16 %v511
        %v575 = vunpack.c.l.b16 %v512
        %v576 = vunpack.c.l.b16 %v513
        %v577 = vunpack.c.l.b16 %v514
        %v578 = vunpack.c.l.b16 %v515
        %v579 = vunpack.c.l.b16 %v516
        %v580 = vunpack.c.l.b16 %v517
        %v581 = vunpack.c.l.b16 %v518
        %v582 = vpack.c.b16 %v575, %v574
        %v583 = vpack.c.b16 %v577, %v576
        %v584 = vpack.c.b16 %v579, %v578
        %v585 = vpack.c.b16 %v581, %v580
        %vm590 = vcmask 523264
        %v592 = vsel %vm590, %v558, 0
        %v595 = vsel %vm590, %v559, 0
        %v598 = vsel %vm590, %v560, 0
        %v601 = vsel %vm590, %v561, 0
        %v604 = vsel %vm590, %v562, 0
        %v607 = vsel %vm590, %v563, 0
        %v610 = vsel %vm590, %v564, 0
        %v613 = vsel %vm590, %v565, 0
        %615 = vmatprep.subr.bf16.mxu0 0
        %616 = vmatpush1.bf16.msra.mxu0 0
        %617 = vmatprep.subr.bf16.mxu0 0
        %618 = vmatpush1.bf16.msra.mxu0 0
        %619 = vmatprep.subr.bf16.mxu0 0
        %620 = vmatpush1.bf16.msra.mxu0 0
        %621 = vmatprep.subr.bf16.mxu0 0
        %622 = vmatpush1.bf16.msra.mxu0 0
        %623 = vmatprep.subr.bf16.mxu0 0
        %624 = vmatpush1.bf16.msra.mxu0 %v585
        %625 = vmatprep.subr.bf16.mxu0 0
        %626 = vmatpush1.bf16.msra.mxu0 %v584
        %627 = vmatprep.subr.bf16.mxu0 0
        %628 = vmatpush1.bf16.msra.mxu0 %v583
        %629 = vmatprep.subr.bf16.mxu0 0
        %630 = vmatpush1.bf16.msra.mxu0 %v582
        %631 = vmatprep.subr.bf16.mxu0 0
        %632 = vmatpush2.bf16.msra.mxu0 0
        %633 = vmatprep.subr.bf16.mxu0 0
        %634 = vmatpush2.bf16.msra.mxu0 0
        %635 = vmatprep.subr.bf16.mxu0 0
        %636 = vmatpush2.bf16.msra.mxu0 0
        %637 = vmatprep.subr.bf16.mxu0 0
        %638 = vmatpush2.bf16.msra.mxu0 0
        %639 = vmatprep.subr.bf16.mxu0 0
        %640 = vmatpush2.bf16.msra.mxu0 0
        %641 = vmatprep.subr.bf16.mxu0 0
        %642 = vmatpush2.bf16.msra.mxu0 0
        %643 = vmatprep.subr.bf16.mxu0 0
        %644 = vmatpush2.bf16.msra.mxu0 0
        %645 = vmatprep.subr.bf16.mxu0 0
        %646 = vmatpush2.bf16.msra.mxu0 0
        %647 = vmatprep.mubr.bf16.mxu0 0
        %648 = vmatmul.mubr.bf16.gmra.mxu0 %v592
        %v649 = vpop.f32.mrf.mxu0
        %v650 = vadd.f32 %v524, %v649
        %v651 = vpop.f32.mrf.mxu0
        %v652 = vpop.f32.mrf.mxu0
        %v653 = vadd.f32 %v524, %v652
        %v654 = vpop.f32.mrf.mxu0
        %655 = vmatprep.mubr.bf16.mxu0 0
        %656 = vmatmul.mubr.bf16.gmra.mxu0 %v595
        %v657 = vpop.f32.mrf.mxu0
        %v658 = vadd.f32 %v524, %v657
        %v659 = vpop.f32.mrf.mxu0
        %v660 = vpop.f32.mrf.mxu0
        %v661 = vadd.f32 %v524, %v660
        %v662 = vpop.f32.mrf.mxu0
        %663 = vmatprep.mubr.bf16.mxu0 0
        %664 = vmatmul.mubr.bf16.gmra.mxu0 %v598
        %v665 = vpop.f32.mrf.mxu0
        %v666 = vadd.f32 %v524, %v665
        %v667 = vpop.f32.mrf.mxu0
        %v668 = vpop.f32.mrf.mxu0
        %v669 = vadd.f32 %v524, %v668
        %v670 = vpop.f32.mrf.mxu0
        %671 = vmatprep.mubr.bf16.mxu0 0
        %672 = vmatmul.mubr.bf16.gmra.mxu0 %v601
        %v673 = vpop.f32.mrf.mxu0
        %v674 = vadd.f32 %v524, %v673
        %v675 = vpop.f32.mrf.mxu0
        %v676 = vpop.f32.mrf.mxu0
        %v677 = vadd.f32 %v524, %v676
        %v678 = vpop.f32.mrf.mxu0
        %679 = vmatprep.mubr.bf16.mxu0 0
        %680 = vmatmul.mubr.bf16.gmra.mxu0 %v604
        %v681 = vpop.f32.mrf.mxu0
        %v682 = vadd.f32 %v524, %v681
        %v683 = vpop.f32.mrf.mxu0
        %v684 = vpop.f32.mrf.mxu0
        %v685 = vadd.f32 %v524, %v684
        %v686 = vpop.f32.mrf.mxu0
        %687 = vmatprep.mubr.bf16.mxu0 0
        %688 = vmatmul.mubr.bf16.gmra.mxu0 %v607
        %v689 = vpop.f32.mrf.mxu0
        %v690 = vadd.f32 %v524, %v689
        %v691 = vpop.f32.mrf.mxu0
        %v692 = vpop.f32.mrf.mxu0
        %v693 = vadd.f32 %v524, %v692
        %v694 = vpop.f32.mrf.mxu0
        %695 = vmatprep.mubr.bf16.mxu0 0
        %696 = vmatmul.mubr.bf16.gmra.mxu0 %v610
        %v697 = vpop.f32.mrf.mxu0
        %v698 = vadd.f32 %v524, %v697
        %v699 = vpop.f32.mrf.mxu0
        %v700 = vpop.f32.mrf.mxu0
        %v701 = vadd.f32 %v524, %v700
        %v702 = vpop.f32.mrf.mxu0
        %703 = vmatprep.mubr.bf16.mxu0 0
        %704 = vmatmul.mubr.bf16.gmra.mxu0 %v613
        %v705 = vpop.f32.mrf.mxu0
        %v706 = vadd.f32 %v524, %v705
        %v707 = vpop.f32.mrf.mxu0
        %v708 = vpop.f32.mrf.mxu0
        %v709 = vadd.f32 %v524, %v708
        %v710 = vpop.f32.mrf.mxu0
        %711 = vdwg.mxu0
        %v712 = vmax.f32 %v650, 0.0
        %v713 = vmax.f32 %v653, 0.0
        %v714 = vmax.f32 %v658, 0.0
        %v715 = vmax.f32 %v661, 0.0
        %v716 = vmax.f32 %v666, 0.0
        %v717 = vmax.f32 %v669, 0.0
        %v718 = vmax.f32 %v674, 0.0
        %v719 = vmax.f32 %v677, 0.0
        %v720 = vmax.f32 %v682, 0.0
        %v721 = vmax.f32 %v685, 0.0
        %v722 = vmax.f32 %v690, 0.0
        %v723 = vmax.f32 %v693, 0.0
        %v724 = vmax.f32 %v698, 0.0
        %v725 = vmax.f32 %v701, 0.0
        %v726 = vmax.f32 %v706, 0.0
        %v727 = vmax.f32 %v709, 0.0
        %v728 = vpack.c.bf16 %v713, %v712
        %v729 = vpack.c.bf16 %v715, %v714
        %v730 = vpack.c.bf16 %v717, %v716
        %v731 = vpack.c.bf16 %v719, %v718
        %v732 = vpack.c.bf16 %v721, %v720
        %v733 = vpack.c.bf16 %v723, %v722
        %v734 = vpack.c.bf16 %v725, %v724
        %v735 = vpack.c.bf16 %v727, %v726
        %v736 = vld [vmem:[#allocation3] sm:$0xff]
        %v737 = vld [vmem:[#allocation3 + $0x8] sm:$0xff]
        %v738 = vld [vmem:[#allocation3 + $0x10] sm:$0xff]
        %v739 = vld [vmem:[#allocation3 + $0x18] sm:$0xff]
        %v740 = vld [vmem:[#allocation3 + $0x20] sm:$0xff]
        %v741 = vld [vmem:[#allocation3 + $0x28] sm:$0xff]
        %v742 = vld [vmem:[#allocation3 + $0x30] sm:$0xff]
        %v743 = vld [vmem:[#allocation3 + $0x38] sm:$0xff]
        %v744 = vld [vmem:[#allocation3 + $0x40] sm:$0xff]
        %v745 = vld [vmem:[#allocation3 + $0x48] sm:$0xff]
        %v746 = vld [vmem:[#allocation3 + $0x50] sm:$0xff]
        %v747 = vld [vmem:[#allocation3 + $0x58] sm:$0xff]
        %v748 = vld [vmem:[#allocation3 + $0x60] sm:$0xff]
        %v749 = vld [vmem:[#allocation3 + $0x68] sm:$0xff]
        %v750 = vld [vmem:[#allocation3 + $0x70] sm:$0xff]
        %v751 = vld [vmem:[#allocation3 + $0x78] sm:$0xff]
        %v752 = vld [vmem:[#allocation3 + $0x80] sm:$0xff]
        %v753 = vld [vmem:[#allocation3 + $0x88] sm:$0xff]
        %v754 = vld [vmem:[#allocation3 + $0x90] sm:$0xff]
        %v755 = vld [vmem:[#allocation3 + $0x98] sm:$0xff]
        %v756 = vld [vmem:[#allocation3 + $0xa0] sm:$0xff]
        %v757 = vld [vmem:[#allocation3 + $0xa8] sm:$0xff]
        %v758 = vld [vmem:[#allocation3 + $0xb0] sm:$0xff]
        %v759 = vld [vmem:[#allocation3 + $0xb8] sm:$0xff]
        %v760 = vld [vmem:[#allocation3 + $0xc0] sm:$0xff]
        %v761 = vld [vmem:[#allocation3 + $0xc8] sm:$0xff]
        %v762 = vld [vmem:[#allocation3 + $0xd0] sm:$0xff]
        %v763 = vld [vmem:[#allocation3 + $0xd8] sm:$0xff]
        %v764 = vld [vmem:[#allocation3 + $0xe0] sm:$0xff]
        %v765 = vld [vmem:[#allocation3 + $0xe8] sm:$0xff]
        %v766 = vld [vmem:[#allocation3 + $0xf0] sm:$0xff]
        %v767 = vld [vmem:[#allocation3 + $0xf8] sm:$0xff]
        %v768 = vld [vmem:[#allocation3 + $0x100] sm:$0xff]
        %v769 = vld [vmem:[#allocation3 + $0x108] sm:$0xff]
        %v770 = vld [vmem:[#allocation3 + $0x110] sm:$0xff]
        %v771 = vld [vmem:[#allocation3 + $0x118] sm:$0xff]
        %v772 = vld [vmem:[#allocation3 + $0x120] sm:$0xff]
        %v773 = vld [vmem:[#allocation3 + $0x128] sm:$0xff]
        %v774 = vld [vmem:[#allocation3 + $0x130] sm:$0xff]
        %v775 = vld [vmem:[#allocation3 + $0x138] sm:$0xff]
        %v776 = vld [vmem:[#allocation3 + $0x140] sm:$0xff]
        %v777 = vld [vmem:[#allocation3 + $0x148] sm:$0xff]
        %v778 = vld [vmem:[#allocation3 + $0x150] sm:$0xff]
        %v779 = vld [vmem:[#allocation3 + $0x158] sm:$0xff]
        %v780 = vld [vmem:[#allocation3 + $0x160] sm:$0xff]
        %v781 = vld [vmem:[#allocation3 + $0x168] sm:$0xff]
        %v782 = vld [vmem:[#allocation3 + $0x170] sm:$0xff]
        %v783 = vld [vmem:[#allocation3 + $0x178] sm:$0xff]
        %v784 = vld [vmem:[#allocation3 + $0x180] sm:$0xff]
        %v785 = vld [vmem:[#allocation3 + $0x188] sm:$0xff]
        %v786 = vld [vmem:[#allocation3 + $0x190] sm:$0xff]
        %v787 = vld [vmem:[#allocation3 + $0x198] sm:$0xff]
        %v788 = vld [vmem:[#allocation3 + $0x1a0] sm:$0xff]
        %v789 = vld [vmem:[#allocation3 + $0x1a8] sm:$0xff]
        %v790 = vld [vmem:[#allocation3 + $0x1b0] sm:$0xff]
        %v791 = vld [vmem:[#allocation3 + $0x1b8] sm:$0xff]
        %v792 = vld [vmem:[#allocation3 + $0x1c0] sm:$0xff]
        %v793 = vld [vmem:[#allocation3 + $0x1c8] sm:$0xff]
        %v794 = vld [vmem:[#allocation3 + $0x1d0] sm:$0xff]
        %v795 = vld [vmem:[#allocation3 + $0x1d8] sm:$0xff]
        %v796 = vld [vmem:[#allocation3 + $0x1e0] sm:$0xff]
        %v797 = vld [vmem:[#allocation3 + $0x1e8] sm:$0xff]
        %v798 = vld [vmem:[#allocation3 + $0x1f0] sm:$0xff]
        %v799 = vld [vmem:[#allocation3 + $0x1f8] sm:$0xff]
        %v800 = vld [vmem:[%s4] sm:$0xff]
        %v802 = vlaneseq
        %v803 = vshrl.u32 %v802, 7
        %v804 = vsub.s32 0, %v803
        %v805 = vrot.slane %v800, %v804
        %v806 = vlaneseq
        %v807 = vshrl.u32 %v806, 7
        %v808 = vsub.s32 1, %v807
        %v809 = vrot.slane %v800, %v808
        %v810 = vlaneseq
        %v811 = vshrl.u32 %v810, 7
        %v812 = vsub.s32 2, %v811
        %v813 = vrot.slane %v800, %v812
        %v814 = vlaneseq
        %v815 = vshrl.u32 %v814, 7
        %v816 = vsub.s32 3, %v815
        %v817 = vrot.slane %v800, %v816
        %v818 = vlaneseq
        %v819 = vshrl.u32 %v818, 7
        %v820 = vsub.s32 4, %v819
        %v821 = vrot.slane %v800, %v820
        %v822 = vlaneseq
        %v823 = vshrl.u32 %v822, 7
        %v824 = vsub.s32 5, %v823
        %v825 = vrot.slane %v800, %v824
        %v826 = vlaneseq
        %v827 = vshrl.u32 %v826, 7
        %v828 = vsub.s32 6, %v827
        %v829 = vrot.slane %v800, %v828
        %v830 = vlaneseq
        %v831 = vshrl.u32 %v830, 7
        %v832 = vsub.s32 7, %v831
        %v833 = vrot.slane %v800, %v832
        %v906 = vunpack.c.l.b16 %v736
        %v907 = vunpack.c.h.b16 %v736
        %v908 = vunpack.c.l.b16 %v737
        %v909 = vunpack.c.h.b16 %v737
        %v910 = vunpack.c.l.b16 %v738
        %v911 = vunpack.c.h.b16 %v738
        %v912 = vunpack.c.l.b16 %v739
        %v913 = vunpack.c.h.b16 %v739
        %v914 = vunpack.c.l.b16 %v740
        %v915 = vunpack.c.h.b16 %v740
        %v916 = vunpack.c.l.b16 %v741
        %v917 = vunpack.c.h.b16 %v741
        %v918 = vunpack.c.l.b16 %v742
        %v919 = vunpack.c.h.b16 %v742
        %v920 = vunpack.c.l.b16 %v743
        %v921 = vunpack.c.h.b16 %v743
        %v922 = vunpack.c.l.b16 %v744
        %v923 = vunpack.c.h.b16 %v744
        %v924 = vunpack.c.l.b16 %v745
        %v925 = vunpack.c.h.b16 %v745
        %v926 = vunpack.c.l.b16 %v746
        %v927 = vunpack.c.h.b16 %v746
        %v928 = vunpack.c.l.b16 %v747
        %v929 = vunpack.c.h.b16 %v747
        %v930 = vunpack.c.l.b16 %v748
        %v931 = vunpack.c.h.b16 %v748
        %v932 = vunpack.c.l.b16 %v749
        %v933 = vunpack.c.h.b16 %v749
        %v934 = vunpack.c.l.b16 %v750
        %v935 = vunpack.c.h.b16 %v750
        %v936 = vunpack.c.l.b16 %v751
        %v937 = vunpack.c.h.b16 %v751
        %v938 = vunpack.c.l.b16 %v752
        %v939 = vunpack.c.h.b16 %v752
        %v940 = vunpack.c.l.b16 %v753
        %v941 = vunpack.c.h.b16 %v753
        %v942 = vunpack.c.l.b16 %v754
        %v943 = vunpack.c.h.b16 %v754
        %v944 = vunpack.c.l.b16 %v755
        %v945 = vunpack.c.h.b16 %v755
        %v946 = vunpack.c.l.b16 %v756
        %v947 = vunpack.c.h.b16 %v756
        %v948 = vunpack.c.l.b16 %v757
        %v949 = vunpack.c.h.b16 %v757
        %v950 = vunpack.c.l.b16 %v758
        %v951 = vunpack.c.h.b16 %v758
        %v952 = vunpack.c.l.b16 %v759
        %v953 = vunpack.c.h.b16 %v759
        %v954 = vunpack.c.l.b16 %v760
        %v955 = vunpack.c.h.b16 %v760
        %v956 = vunpack.c.l.b16 %v761
        %v957 = vunpack.c.h.b16 %v761
        %v958 = vunpack.c.l.b16 %v762
        %v959 = vunpack.c.h.b16 %v762
        %v960 = vunpack.c.l.b16 %v763
        %v961 = vunpack.c.h.b16 %v763
        %v962 = vunpack.c.l.b16 %v764
        %v963 = vunpack.c.h.b16 %v764
        %v964 = vunpack.c.l.b16 %v765
        %v965 = vunpack.c.h.b16 %v765
        %v966 = vunpack.c.l.b16 %v766
        %v967 = vunpack.c.h.b16 %v766
        %v968 = vunpack.c.l.b16 %v767
        %v969 = vunpack.c.h.b16 %v767
        %v970 = vunpack.c.l.b16 %v768
        %v971 = vunpack.c.h.b16 %v768
        %v972 = vunpack.c.l.b16 %v769
        %v973 = vunpack.c.h.b16 %v769
        %v974 = vunpack.c.l.b16 %v770
        %v975 = vunpack.c.h.b16 %v770
        %v976 = vunpack.c.l.b16 %v771
        %v977 = vunpack.c.h.b16 %v771
        %v978 = vunpack.c.l.b16 %v772
        %v979 = vunpack.c.h.b16 %v772
        %v980 = vunpack.c.l.b16 %v773
        %v981 = vunpack.c.h.b16 %v773
        %v982 = vunpack.c.l.b16 %v774
        %v983 = vunpack.c.h.b16 %v774
        %v984 = vunpack.c.l.b16 %v775
        %v985 = vunpack.c.h.b16 %v775
        %v986 = vunpack.c.l.b16 %v776
        %v987 = vunpack.c.h.b16 %v776
        %v988 = vunpack.c.l.b16 %v777
        %v989 = vunpack.c.h.b16 %v777
        %v990 = vunpack.c.l.b16 %v778
        %v991 = vunpack.c.h.b16 %v778
        %v992 = vunpack.c.l.b16 %v779
        %v993 = vunpack.c.h.b16 %v779
        %v994 = vunpack.c.l.b16 %v780
        %v995 = vunpack.c.h.b16 %v780
        %v996 = vunpack.c.l.b16 %v781
        %v997 = vunpack.c.h.b16 %v781
        %v998 = vunpack.c.l.b16 %v782
        %v999 = vunpack.c.h.b16 %v782
        %v1000 = vunpack.c.l.b16 %v783
        %v1001 = vunpack.c.h.b16 %v783
        %v1002 = vunpack.c.l.b16 %v784
        %v1003 = vunpack.c.h.b16 %v784
        %v1004 = vunpack.c.l.b16 %v785
        %v1005 = vunpack.c.h.b16 %v785
        %v1006 = vunpack.c.l.b16 %v786
        %v1007 = vunpack.c.h.b16 %v786
        %v1008 = vunpack.c.l.b16 %v787
        %v1009 = vunpack.c.h.b16 %v787
        %v1010 = vunpack.c.l.b16 %v788
        %v1011 = vunpack.c.h.b16 %v788
        %v1012 = vunpack.c.l.b16 %v789
        %v1013 = vunpack.c.h.b16 %v789
        %v1014 = vunpack.c.l.b16 %v790
        %v1015 = vunpack.c.h.b16 %v790
        %v1016 = vunpack.c.l.b16 %v791
        %v1017 = vunpack.c.h.b16 %v791
        %v1018 = vunpack.c.l.b16 %v792
        %v1019 = vunpack.c.h.b16 %v792
        %v1020 = vunpack.c.l.b16 %v793
        %v1021 = vunpack.c.h.b16 %v793
        %v1022 = vunpack.c.l.b16 %v794
        %v1023 = vunpack.c.h.b16 %v794
        %v1024 = vunpack.c.l.b16 %v795
        %v1025 = vunpack.c.h.b16 %v795
        %v1026 = vunpack.c.l.b16 %v796
        %v1027 = vunpack.c.h.b16 %v796
        %v1028 = vunpack.c.l.b16 %v797
        %v1029 = vunpack.c.h.b16 %v797
        %v1030 = vunpack.c.l.b16 %v798
        %v1031 = vunpack.c.h.b16 %v798
        %v1032 = vunpack.c.l.b16 %v799
        %v1033 = vunpack.c.h.b16 %v799
        %v1034 = vpack.c.b16 %v914, %v906
        %v1035 = vpack.c.b16 %v915, %v907
        %v1036 = vpack.c.b16 %v916, %v908
        %v1037 = vpack.c.b16 %v917, %v909
        %v1038 = vpack.c.b16 %v918, %v910
        %v1039 = vpack.c.b16 %v919, %v911
        %v1040 = vpack.c.b16 %v920, %v912
        %v1041 = vpack.c.b16 %v921, %v913
        %v1042 = vpack.c.b16 %v930, %v922
        %v1043 = vpack.c.b16 %v931, %v923
        %v1044 = vpack.c.b16 %v932, %v924
        %v1045 = vpack.c.b16 %v933, %v925
        %v1046 = vpack.c.b16 %v934, %v926
        %v1047 = vpack.c.b16 %v935, %v927
        %v1048 = vpack.c.b16 %v936, %v928
        %v1049 = vpack.c.b16 %v937, %v929
        %v1050 = vpack.c.b16 %v946, %v938
        %v1051 = vpack.c.b16 %v947, %v939
        %v1052 = vpack.c.b16 %v948, %v940
        %v1053 = vpack.c.b16 %v949, %v941
        %v1054 = vpack.c.b16 %v950, %v942
        %v1055 = vpack.c.b16 %v951, %v943
        %v1056 = vpack.c.b16 %v952, %v944
        %v1057 = vpack.c.b16 %v953, %v945
        %v1058 = vpack.c.b16 %v962, %v954
        %v1059 = vpack.c.b16 %v963, %v955
        %v1060 = vpack.c.b16 %v964, %v956
        %v1061 = vpack.c.b16 %v965, %v957
        %v1062 = vpack.c.b16 %v966, %v958
        %v1063 = vpack.c.b16 %v967, %v959
        %v1064 = vpack.c.b16 %v968, %v960
        %v1065 = vpack.c.b16 %v969, %v961
        %v1066 = vpack.c.b16 %v978, %v970
        %v1067 = vpack.c.b16 %v979, %v971
        %v1068 = vpack.c.b16 %v980, %v972
        %v1069 = vpack.c.b16 %v981, %v973
        %v1070 = vpack.c.b16 %v982, %v974
        %v1071 = vpack.c.b16 %v983, %v975
        %v1072 = vpack.c.b16 %v984, %v976
        %v1073 = vpack.c.b16 %v985, %v977
        %v1074 = vpack.c.b16 %v994, %v986
        %v1075 = vpack.c.b16 %v995, %v987
        %v1076 = vpack.c.b16 %v996, %v988
        %v1077 = vpack.c.b16 %v997, %v989
        %v1078 = vpack.c.b16 %v998, %v990
        %v1079 = vpack.c.b16 %v999, %v991
        %v1080 = vpack.c.b16 %v1000, %v992
        %v1081 = vpack.c.b16 %v1001, %v993
        %v1082 = vpack.c.b16 %v1010, %v1002
        %v1083 = vpack.c.b16 %v1011, %v1003
        %v1084 = vpack.c.b16 %v1012, %v1004
        %v1085 = vpack.c.b16 %v1013, %v1005
        %v1086 = vpack.c.b16 %v1014, %v1006
        %v1087 = vpack.c.b16 %v1015, %v1007
        %v1088 = vpack.c.b16 %v1016, %v1008
        %v1089 = vpack.c.b16 %v1017, %v1009
        %v1090 = vpack.c.b16 %v1026, %v1018
        %v1091 = vpack.c.b16 %v1027, %v1019
        %v1092 = vpack.c.b16 %v1028, %v1020
        %v1093 = vpack.c.b16 %v1029, %v1021
        %v1094 = vpack.c.b16 %v1030, %v1022
        %v1095 = vpack.c.b16 %v1031, %v1023
        %v1096 = vpack.c.b16 %v1032, %v1024
        %v1097 = vpack.c.b16 %v1033, %v1025
        %1162 = vmatprep.subr.bf16.mxu0 %v1091
        %1163 = vmatpush1.bf16.msra.mxu0 %v1090
        %1164 = vmatprep.subr.bf16.mxu0 %v1083
        %1165 = vmatpush1.bf16.msra.mxu0 %v1082
        %1166 = vmatprep.subr.bf16.mxu0 %v1075
        %1167 = vmatpush1.bf16.msra.mxu0 %v1074
        %1168 = vmatprep.subr.bf16.mxu0 %v1067
        %1169 = vmatpush1.bf16.msra.mxu0 %v1066
        %1170 = vmatprep.subr.bf16.mxu0 %v1059
        %1171 = vmatpush1.bf16.msra.mxu0 %v1058
        %1172 = vmatprep.subr.bf16.mxu0 %v1051
        %1173 = vmatpush1.bf16.msra.mxu0 %v1050
        %1174 = vmatprep.subr.bf16.mxu0 %v1043
        %1175 = vmatpush1.bf16.msra.mxu0 %v1042
        %1176 = vmatprep.subr.bf16.mxu0 %v1035
        %1177 = vmatpush1.bf16.msra.mxu0 %v1034
        %1178 = vmatprep.subr.bf16.mxu0 0
        %1179 = vmatpush2.bf16.msra.mxu0 0
        %1180 = vmatprep.subr.bf16.mxu0 0
        %1181 = vmatpush2.bf16.msra.mxu0 0
        %1182 = vmatprep.subr.bf16.mxu0 0
        %1183 = vmatpush2.bf16.msra.mxu0 0
        %1184 = vmatprep.subr.bf16.mxu0 0
        %1185 = vmatpush2.bf16.msra.mxu0 0
        %1186 = vmatprep.subr.bf16.mxu0 0
        %1187 = vmatpush2.bf16.msra.mxu0 0
        %1188 = vmatprep.subr.bf16.mxu0 0
        %1189 = vmatpush2.bf16.msra.mxu0 0
        %1190 = vmatprep.subr.bf16.mxu0 0
        %1191 = vmatpush2.bf16.msra.mxu0 0
        %1192 = vmatprep.subr.bf16.mxu0 0
        %1193 = vmatpush2.bf16.msra.mxu0 0
        %1194 = vmatprep.mubr.bf16.mxu0 0
        %1195 = vmatmul.mubr.bf16.gmra.mxu0 %v728
        %v1196 = vpop.f32.mrf.mxu0
        %v1197 = vadd.f32 %v805, %v1196
        %v1198 = vpop.f32.mrf.mxu0
        %v1199 = vadd.f32 %v809, %v1198
        %v1200 = vpop.f32.mrf.mxu0
        %v1201 = vadd.f32 %v805, %v1200
        %v1202 = vpop.f32.mrf.mxu0
        %v1203 = vadd.f32 %v809, %v1202
        %1204 = vmatprep.mubr.bf16.mxu0 0
        %1205 = vmatmul.mubr.bf16.gmra.mxu0 %v729
        %v1206 = vpop.f32.mrf.mxu0
        %v1207 = vadd.f32 %v805, %v1206
        %v1208 = vpop.f32.mrf.mxu0
        %v1209 = vadd.f32 %v809, %v1208
        %v1210 = vpop.f32.mrf.mxu0
        %v1211 = vadd.f32 %v805, %v1210
        %v1212 = vpop.f32.mrf.mxu0
        %v1213 = vadd.f32 %v809, %v1212
        %1214 = vmatprep.mubr.bf16.mxu0 0
        %1215 = vmatmul.mubr.bf16.gmra.mxu0 %v730
        %v1216 = vpop.f32.mrf.mxu0
        %v1217 = vadd.f32 %v805, %v1216
        %v1218 = vpop.f32.mrf.mxu0
        %v1219 = vadd.f32 %v809, %v1218
        %v1220 = vpop.f32.mrf.mxu0
        %v1221 = vadd.f32 %v805, %v1220
        %v1222 = vpop.f32.mrf.mxu0
        %v1223 = vadd.f32 %v809, %v1222
        %1224 = vmatprep.mubr.bf16.mxu0 0
        %1225 = vmatmul.mubr.bf16.gmra.mxu0 %v731
        %v1226 = vpop.f32.mrf.mxu0
        %v1227 = vadd.f32 %v805, %v1226
        %v1228 = vpop.f32.mrf.mxu0
        %v1229 = vadd.f32 %v809, %v1228
        %v1230 = vpop.f32.mrf.mxu0
        %v1231 = vadd.f32 %v805, %v1230
        %v1232 = vpop.f32.mrf.mxu0
        %v1233 = vadd.f32 %v809, %v1232
        %1234 = vmatprep.mubr.bf16.mxu0 0
        %1235 = vmatmul.mubr.bf16.gmra.mxu0 %v732
        %v1236 = vpop.f32.mrf.mxu0
        %v1237 = vadd.f32 %v805, %v1236
        %v1238 = vpop.f32.mrf.mxu0
        %v1239 = vadd.f32 %v809, %v1238
        %v1240 = vpop.f32.mrf.mxu0
        %v1241 = vadd.f32 %v805, %v1240
        %v1242 = vpop.f32.mrf.mxu0
        %v1243 = vadd.f32 %v809, %v1242
        %1244 = vmatprep.mubr.bf16.mxu0 0
        %1245 = vmatmul.mubr.bf16.gmra.mxu0 %v733
        %v1246 = vpop.f32.mrf.mxu0
        %v1247 = vadd.f32 %v805, %v1246
        %v1248 = vpop.f32.mrf.mxu0
        %v1249 = vadd.f32 %v809, %v1248
        %v1250 = vpop.f32.mrf.mxu0
        %v1251 = vadd.f32 %v805, %v1250
        %v1252 = vpop.f32.mrf.mxu0
        %v1253 = vadd.f32 %v809, %v1252
        %1254 = vmatprep.mubr.bf16.mxu0 0
        %1255 = vmatmul.mubr.bf16.gmra.mxu0 %v734
        %v1256 = vpop.f32.mrf.mxu0
        %v1257 = vadd.f32 %v805, %v1256
        %v1258 = vpop.f32.mrf.mxu0
        %v1259 = vadd.f32 %v809, %v1258
        %v1260 = vpop.f32.mrf.mxu0
        %v1261 = vadd.f32 %v805, %v1260
        %v1262 = vpop.f32.mrf.mxu0
        %v1263 = vadd.f32 %v809, %v1262
        %1264 = vmatprep.mubr.bf16.mxu0 0
        %1265 = vmatmul.mubr.bf16.gmra.mxu0 %v735
        %v1266 = vpop.f32.mrf.mxu0
        %v1267 = vadd.f32 %v805, %v1266
        %v1268 = vpop.f32.mrf.mxu0
        %v1269 = vadd.f32 %v809, %v1268
        %v1270 = vpop.f32.mrf.mxu0
        %v1271 = vadd.f32 %v805, %v1270
        %v1272 = vpop.f32.mrf.mxu0
        %v1273 = vadd.f32 %v809, %v1272
        %1274 = vdwg.mxu0
        %1275 = vmatprep.subr.bf16.mxu0 %v1093
        %1276 = vmatpush1.bf16.msra.mxu0 %v1092
        %1277 = vmatprep.subr.bf16.mxu0 %v1085
        %1278 = vmatpush1.bf16.msra.mxu0 %v1084
        %1279 = vmatprep.subr.bf16.mxu0 %v1077
        %1280 = vmatpush1.bf16.msra.mxu0 %v1076
        %1281 = vmatprep.subr.bf16.mxu0 %v1069
        %1282 = vmatpush1.bf16.msra.mxu0 %v1068
        %1283 = vmatprep.subr.bf16.mxu0 %v1061
        %1284 = vmatpush1.bf16.msra.mxu0 %v1060
        %1285 = vmatprep.subr.bf16.mxu0 %v1053
        %1286 = vmatpush1.bf16.msra.mxu0 %v1052
        %1287 = vmatprep.subr.bf16.mxu0 %v1045
        %1288 = vmatpush1.bf16.msra.mxu0 %v1044
        %1289 = vmatprep.subr.bf16.mxu0 %v1037
        %1290 = vmatpush1.bf16.msra.mxu0 %v1036
        %1291 = vmatprep.subr.bf16.mxu0 0
        %1292 = vmatpush2.bf16.msra.mxu0 0
        %1293 = vmatprep.subr.bf16.mxu0 0
        %1294 = vmatpush2.bf16.msra.mxu0 0
        %1295 = vmatprep.subr.bf16.mxu0 0
        %1296 = vmatpush2.bf16.msra.mxu0 0
        %1297 = vmatprep.subr.bf16.mxu0 0
        %1298 = vmatpush2.bf16.msra.mxu0 0
        %1299 = vmatprep.subr.bf16.mxu0 0
        %1300 = vmatpush2.bf16.msra.mxu0 0
        %1301 = vmatprep.subr.bf16.mxu0 0
        %1302 = vmatpush2.bf16.msra.mxu0 0
        %1303 = vmatprep.subr.bf16.mxu0 0
        %1304 = vmatpush2.bf16.msra.mxu0 0
        %1305 = vmatprep.subr.bf16.mxu0 0
        %1306 = vmatpush2.bf16.msra.mxu0 0
        %1307 = vmatprep.mubr.bf16.mxu0 0
        %1308 = vmatmul.mubr.bf16.gmra.mxu0 %v728
        %v1309 = vpop.f32.mrf.mxu0
        %v1310 = vadd.f32 %v813, %v1309
        %v1311 = vpop.f32.mrf.mxu0
        %v1312 = vadd.f32 %v817, %v1311
        %v1313 = vpop.f32.mrf.mxu0
        %v1314 = vadd.f32 %v813, %v1313
        %v1315 = vpop.f32.mrf.mxu0
        %v1316 = vadd.f32 %v817, %v1315
        %1317 = vmatprep.mubr.bf16.mxu0 0
        %1318 = vmatmul.mubr.bf16.gmra.mxu0 %v729
        %v1319 = vpop.f32.mrf.mxu0
        %v1320 = vadd.f32 %v813, %v1319
        %v1321 = vpop.f32.mrf.mxu0
        %v1322 = vadd.f32 %v817, %v1321
        %v1323 = vpop.f32.mrf.mxu0
        %v1324 = vadd.f32 %v813, %v1323
        %v1325 = vpop.f32.mrf.mxu0
        %v1326 = vadd.f32 %v817, %v1325
        %1327 = vmatprep.mubr.bf16.mxu0 0
        %1328 = vmatmul.mubr.bf16.gmra.mxu0 %v730
        %v1329 = vpop.f32.mrf.mxu0
        %v1330 = vadd.f32 %v813, %v1329
        %v1331 = vpop.f32.mrf.mxu0
        %v1332 = vadd.f32 %v817, %v1331
        %v1333 = vpop.f32.mrf.mxu0
        %v1334 = vadd.f32 %v813, %v1333
        %v1335 = vpop.f32.mrf.mxu0
        %v1336 = vadd.f32 %v817, %v1335
        %1337 = vmatprep.mubr.bf16.mxu0 0
        %1338 = vmatmul.mubr.bf16.gmra.mxu0 %v731
        %v1339 = vpop.f32.mrf.mxu0
        %v1340 = vadd.f32 %v813, %v1339
        %v1341 = vpop.f32.mrf.mxu0
        %v1342 = vadd.f32 %v817, %v1341
        %v1343 = vpop.f32.mrf.mxu0
        %v1344 = vadd.f32 %v813, %v1343
        %v1345 = vpop.f32.mrf.mxu0
        %v1346 = vadd.f32 %v817, %v1345
        %1347 = vmatprep.mubr.bf16.mxu0 0
        %1348 = vmatmul.mubr.bf16.gmra.mxu0 %v732
        %v1349 = vpop.f32.mrf.mxu0
        %v1350 = vadd.f32 %v813, %v1349
        %v1351 = vpop.f32.mrf.mxu0
        %v1352 = vadd.f32 %v817, %v1351
        %v1353 = vpop.f32.mrf.mxu0
        %v1354 = vadd.f32 %v813, %v1353
        %v1355 = vpop.f32.mrf.mxu0
        %v1356 = vadd.f32 %v817, %v1355
        %1357 = vmatprep.mubr.bf16.mxu0 0
        %1358 = vmatmul.mubr.bf16.gmra.mxu0 %v733
        %v1359 = vpop.f32.mrf.mxu0
        %v1360 = vadd.f32 %v813, %v1359
        %v1361 = vpop.f32.mrf.mxu0
        %v1362 = vadd.f32 %v817, %v1361
        %v1363 = vpop.f32.mrf.mxu0
        %v1364 = vadd.f32 %v813, %v1363
        %v1365 = vpop.f32.mrf.mxu0
        %v1366 = vadd.f32 %v817, %v1365
        %1367 = vmatprep.mubr.bf16.mxu0 0
        %1368 = vmatmul.mubr.bf16.gmra.mxu0 %v734
        %v1369 = vpop.f32.mrf.mxu0
        %v1370 = vadd.f32 %v813, %v1369
        %v1371 = vpop.f32.mrf.mxu0
        %v1372 = vadd.f32 %v817, %v1371
        %v1373 = vpop.f32.mrf.mxu0
        %v1374 = vadd.f32 %v813, %v1373
        %v1375 = vpop.f32.mrf.mxu0
        %v1376 = vadd.f32 %v817, %v1375
        %1377 = vmatprep.mubr.bf16.mxu0 0
        %1378 = vmatmul.mubr.bf16.gmra.mxu0 %v735
        %v1379 = vpop.f32.mrf.mxu0
        %v1380 = vadd.f32 %v813, %v1379
        %v1381 = vpop.f32.mrf.mxu0
        %v1382 = vadd.f32 %v817, %v1381
        %v1383 = vpop.f32.mrf.mxu0
        %v1384 = vadd.f32 %v813, %v1383
        %v1385 = vpop.f32.mrf.mxu0
        %v1386 = vadd.f32 %v817, %v1385
        %1387 = vdwg.mxu0
        %1388 = vmatprep.subr.bf16.mxu0 %v1095
        %1389 = vmatpush1.bf16.msra.mxu0 %v1094
        %1390 = vmatprep.subr.bf16.mxu0 %v1087
        %1391 = vmatpush1.bf16.msra.mxu0 %v1086
        %1392 = vmatprep.subr.bf16.mxu0 %v1079
        %1393 = vmatpush1.bf16.msra.mxu0 %v1078
        %1394 = vmatprep.subr.bf16.mxu0 %v1071
        %1395 = vmatpush1.bf16.msra.mxu0 %v1070
        %1396 = vmatprep.subr.bf16.mxu0 %v1063
        %1397 = vmatpush1.bf16.msra.mxu0 %v1062
        %1398 = vmatprep.subr.bf16.mxu0 %v1055
        %1399 = vmatpush1.bf16.msra.mxu0 %v1054
        %1400 = vmatprep.subr.bf16.mxu0 %v1047
        %1401 = vmatpush1.bf16.msra.mxu0 %v1046
        %1402 = vmatprep.subr.bf16.mxu0 %v1039
        %1403 = vmatpush1.bf16.msra.mxu0 %v1038
        %1404 = vmatprep.subr.bf16.mxu0 0
        %1405 = vmatpush2.bf16.msra.mxu0 0
        %1406 = vmatprep.subr.bf16.mxu0 0
        %1407 = vmatpush2.bf16.msra.mxu0 0
        %1408 = vmatprep.subr.bf16.mxu0 0
        %1409 = vmatpush2.bf16.msra.mxu0 0
        %1410 = vmatprep.subr.bf16.mxu0 0
        %1411 = vmatpush2.bf16.msra.mxu0 0
        %1412 = vmatprep.subr.bf16.mxu0 0
        %1413 = vmatpush2.bf16.msra.mxu0 0
        %1414 = vmatprep.subr.bf16.mxu0 0
        %1415 = vmatpush2.bf16.msra.mxu0 0
        %1416 = vmatprep.subr.bf16.mxu0 0
        %1417 = vmatpush2.bf16.msra.mxu0 0
        %1418 = vmatprep.subr.bf16.mxu0 0
        %1419 = vmatpush2.bf16.msra.mxu0 0
        %1420 = vmatprep.mubr.bf16.mxu0 0
        %1421 = vmatmul.mubr.bf16.gmra.mxu0 %v728
        %v1422 = vpop.f32.mrf.mxu0
        %v1423 = vadd.f32 %v821, %v1422
        %v1424 = vpop.f32.mrf.mxu0
        %v1425 = vadd.f32 %v825, %v1424
        %v1426 = vpop.f32.mrf.mxu0
        %v1427 = vadd.f32 %v821, %v1426
        %v1428 = vpop.f32.mrf.mxu0
        %v1429 = vadd.f32 %v825, %v1428
        %1430 = vmatprep.mubr.bf16.mxu0 0
        %1431 = vmatmul.mubr.bf16.gmra.mxu0 %v729
        %v1432 = vpop.f32.mrf.mxu0
        %v1433 = vadd.f32 %v821, %v1432
        %v1434 = vpop.f32.mrf.mxu0
        %v1435 = vadd.f32 %v825, %v1434
        %v1436 = vpop.f32.mrf.mxu0
        %v1437 = vadd.f32 %v821, %v1436
        %v1438 = vpop.f32.mrf.mxu0
        %v1439 = vadd.f32 %v825, %v1438
        %1440 = vmatprep.mubr.bf16.mxu0 0
        %1441 = vmatmul.mubr.bf16.gmra.mxu0 %v730
        %v1442 = vpop.f32.mrf.mxu0
        %v1443 = vadd.f32 %v821, %v1442
        %v1444 = vpop.f32.mrf.mxu0
        %v1445 = vadd.f32 %v825, %v1444
        %v1446 = vpop.f32.mrf.mxu0
        %v1447 = vadd.f32 %v821, %v1446
        %v1448 = vpop.f32.mrf.mxu0
        %v1449 = vadd.f32 %v825, %v1448
        %1450 = vmatprep.mubr.bf16.mxu0 0
        %1451 = vmatmul.mubr.bf16.gmra.mxu0 %v731
        %v1452 = vpop.f32.mrf.mxu0
        %v1453 = vadd.f32 %v821, %v1452
        %v1454 = vpop.f32.mrf.mxu0
        %v1455 = vadd.f32 %v825, %v1454
        %v1456 = vpop.f32.mrf.mxu0
        %v1457 = vadd.f32 %v821, %v1456
        %v1458 = vpop.f32.mrf.mxu0
        %v1459 = vadd.f32 %v825, %v1458
        %1460 = vmatprep.mubr.bf16.mxu0 0
        %1461 = vmatmul.mubr.bf16.gmra.mxu0 %v732
        %v1462 = vpop.f32.mrf.mxu0
        %v1463 = vadd.f32 %v821, %v1462
        %v1464 = vpop.f32.mrf.mxu0
        %v1465 = vadd.f32 %v825, %v1464
        %v1466 = vpop.f32.mrf.mxu0
        %v1467 = vadd.f32 %v821, %v1466
        %v1468 = vpop.f32.mrf.mxu0
        %v1469 = vadd.f32 %v825, %v1468
        %1470 = vmatprep.mubr.bf16.mxu0 0
        %1471 = vmatmul.mubr.bf16.gmra.mxu0 %v733
        %v1472 = vpop.f32.mrf.mxu0
        %v1473 = vadd.f32 %v821, %v1472
        %v1474 = vpop.f32.mrf.mxu0
        %v1475 = vadd.f32 %v825, %v1474
        %v1476 = vpop.f32.mrf.mxu0
        %v1477 = vadd.f32 %v821, %v1476
        %v1478 = vpop.f32.mrf.mxu0
        %v1479 = vadd.f32 %v825, %v1478
        %1480 = vmatprep.mubr.bf16.mxu0 0
        %1481 = vmatmul.mubr.bf16.gmra.mxu0 %v734
        %v1482 = vpop.f32.mrf.mxu0
        %v1483 = vadd.f32 %v821, %v1482
        %v1484 = vpop.f32.mrf.mxu0
        %v1485 = vadd.f32 %v825, %v1484
        %v1486 = vpop.f32.mrf.mxu0
        %v1487 = vadd.f32 %v821, %v1486
        %v1488 = vpop.f32.mrf.mxu0
        %v1489 = vadd.f32 %v825, %v1488
        %1490 = vmatprep.mubr.bf16.mxu0 0
        %1491 = vmatmul.mubr.bf16.gmra.mxu0 %v735
        %v1492 = vpop.f32.mrf.mxu0
        %v1493 = vadd.f32 %v821, %v1492
        %v1494 = vpop.f32.mrf.mxu0
        %v1495 = vadd.f32 %v825, %v1494
        %v1496 = vpop.f32.mrf.mxu0
        %v1497 = vadd.f32 %v821, %v1496
        %v1498 = vpop.f32.mrf.mxu0
        %v1499 = vadd.f32 %v825, %v1498
        %1500 = vdwg.mxu0
        %1501 = vmatprep.subr.bf16.mxu0 %v1097
        %1502 = vmatpush1.bf16.msra.mxu0 %v1096
        %1503 = vmatprep.subr.bf16.mxu0 %v1089
        %1504 = vmatpush1.bf16.msra.mxu0 %v1088
        %1505 = vmatprep.subr.bf16.mxu0 %v1081
        %1506 = vmatpush1.bf16.msra.mxu0 %v1080
        %1507 = vmatprep.subr.bf16.mxu0 %v1073
        %1508 = vmatpush1.bf16.msra.mxu0 %v1072
        %1509 = vmatprep.subr.bf16.mxu0 %v1065
        %1510 = vmatpush1.bf16.msra.mxu0 %v1064
        %1511 = vmatprep.subr.bf16.mxu0 %v1057
        %1512 = vmatpush1.bf16.msra.mxu0 %v1056
        %1513 = vmatprep.subr.bf16.mxu0 %v1049
        %1514 = vmatpush1.bf16.msra.mxu0 %v1048
        %1515 = vmatprep.subr.bf16.mxu0 %v1041
        %1516 = vmatpush1.bf16.msra.mxu0 %v1040
        %1517 = vmatprep.subr.bf16.mxu0 0
        %1518 = vmatpush2.bf16.msra.mxu0 0
        %1519 = vmatprep.subr.bf16.mxu0 0
        %1520 = vmatpush2.bf16.msra.mxu0 0
        %1521 = vmatprep.subr.bf16.mxu0 0
        %1522 = vmatpush2.bf16.msra.mxu0 0
        %1523 = vmatprep.subr.bf16.mxu0 0
        %1524 = vmatpush2.bf16.msra.mxu0 0
        %1525 = vmatprep.subr.bf16.mxu0 0
        %1526 = vmatpush2.bf16.msra.mxu0 0
        %1527 = vmatprep.subr.bf16.mxu0 0
        %1528 = vmatpush2.bf16.msra.mxu0 0
        %1529 = vmatprep.subr.bf16.mxu0 0
        %1530 = vmatpush2.bf16.msra.mxu0 0
        %1531 = vmatprep.subr.bf16.mxu0 0
        %1532 = vmatpush2.bf16.msra.mxu0 0
        %1533 = vmatprep.mubr.bf16.mxu0 0
        %1534 = vmatmul.mubr.bf16.gmra.mxu0 %v728
        %v1535 = vpop.f32.mrf.mxu0
        %v1536 = vadd.f32 %v829, %v1535
        %v1537 = vpop.f32.mrf.mxu0
        %v1538 = vadd.f32 %v833, %v1537
        %v1539 = vpop.f32.mrf.mxu0
        %v1540 = vadd.f32 %v829, %v1539
        %v1541 = vpop.f32.mrf.mxu0
        %v1542 = vadd.f32 %v833, %v1541
        %1543 = vmatprep.mubr.bf16.mxu0 0
        %1544 = vmatmul.mubr.bf16.gmra.mxu0 %v729
        %v1545 = vpop.f32.mrf.mxu0
        %v1546 = vadd.f32 %v829, %v1545
        %v1547 = vpop.f32.mrf.mxu0
        %v1548 = vadd.f32 %v833, %v1547
        %v1549 = vpop.f32.mrf.mxu0
        %v1550 = vadd.f32 %v829, %v1549
        %v1551 = vpop.f32.mrf.mxu0
        %v1552 = vadd.f32 %v833, %v1551
        %1553 = vmatprep.mubr.bf16.mxu0 0
        %1554 = vmatmul.mubr.bf16.gmra.mxu0 %v730
        %v1555 = vpop.f32.mrf.mxu0
        %v1556 = vadd.f32 %v829, %v1555
        %v1557 = vpop.f32.mrf.mxu0
        %v1558 = vadd.f32 %v833, %v1557
        %v1559 = vpop.f32.mrf.mxu0
        %v1560 = vadd.f32 %v829, %v1559
        %v1561 = vpop.f32.mrf.mxu0
        %v1562 = vadd.f32 %v833, %v1561
        %1563 = vmatprep.mubr.bf16.mxu0 0
        %1564 = vmatmul.mubr.bf16.gmra.mxu0 %v731
        %v1565 = vpop.f32.mrf.mxu0
        %v1566 = vadd.f32 %v829, %v1565
        %v1567 = vpop.f32.mrf.mxu0
        %v1568 = vadd.f32 %v833, %v1567
        %v1569 = vpop.f32.mrf.mxu0
        %v1570 = vadd.f32 %v829, %v1569
        %v1571 = vpop.f32.mrf.mxu0
        %v1572 = vadd.f32 %v833, %v1571
        %1573 = vmatprep.mubr.bf16.mxu0 0
        %1574 = vmatmul.mubr.bf16.gmra.mxu0 %v732
        %v1575 = vpop.f32.mrf.mxu0
        %v1576 = vadd.f32 %v829, %v1575
        %v1577 = vpop.f32.mrf.mxu0
        %v1578 = vadd.f32 %v833, %v1577
        %v1579 = vpop.f32.mrf.mxu0
        %v1580 = vadd.f32 %v829, %v1579
        %v1581 = vpop.f32.mrf.mxu0
        %v1582 = vadd.f32 %v833, %v1581
        %1583 = vmatprep.mubr.bf16.mxu0 0
        %1584 = vmatmul.mubr.bf16.gmra.mxu0 %v733
        %v1585 = vpop.f32.mrf.mxu0
        %v1586 = vadd.f32 %v829, %v1585
        %v1587 = vpop.f32.mrf.mxu0
        %v1588 = vadd.f32 %v833, %v1587
        %v1589 = vpop.f32.mrf.mxu0
        %v1590 = vadd.f32 %v829, %v1589
        %v1591 = vpop.f32.mrf.mxu0
        %v1592 = vadd.f32 %v833, %v1591
        %1593 = vmatprep.mubr.bf16.mxu0 0
        %1594 = vmatmul.mubr.bf16.gmra.mxu0 %v734
        %v1595 = vpop.f32.mrf.mxu0
        %v1596 = vadd.f32 %v829, %v1595
        %v1597 = vpop.f32.mrf.mxu0
        %v1598 = vadd.f32 %v833, %v1597
        %v1599 = vpop.f32.mrf.mxu0
        %v1600 = vadd.f32 %v829, %v1599
        %v1601 = vpop.f32.mrf.mxu0
        %v1602 = vadd.f32 %v833, %v1601
        %1603 = vmatprep.mubr.bf16.mxu0 0
        %1604 = vmatmul.mubr.bf16.gmra.mxu0 %v735
        %v1605 = vpop.f32.mrf.mxu0
        %v1606 = vadd.f32 %v829, %v1605
        %v1607 = vpop.f32.mrf.mxu0
        %v1608 = vadd.f32 %v833, %v1607
        %v1609 = vpop.f32.mrf.mxu0
        %v1610 = vadd.f32 %v829, %v1609
        %v1611 = vpop.f32.mrf.mxu0
        %v1612 = vadd.f32 %v833, %v1611
        %1613 = vdwg.mxu0
        %v1614 = vmax.f32 %v1197, 0.0
        %v1615 = vmax.f32 %v1199, 0.0
        %v1616 = vmax.f32 %v1310, 0.0
        %v1617 = vmax.f32 %v1312, 0.0
        %v1618 = vmax.f32 %v1423, 0.0
        %v1619 = vmax.f32 %v1425, 0.0
        %v1620 = vmax.f32 %v1536, 0.0
        %v1621 = vmax.f32 %v1538, 0.0
        %v1622 = vmax.f32 %v1201, 0.0
        %v1623 = vmax.f32 %v1203, 0.0
        %v1624 = vmax.f32 %v1314, 0.0
        %v1625 = vmax.f32 %v1316, 0.0
        %v1626 = vmax.f32 %v1427, 0.0
        %v1627 = vmax.f32 %v1429, 0.0
        %v1628 = vmax.f32 %v1540, 0.0
        %v1629 = vmax.f32 %v1542, 0.0
        %v1630 = vmax.f32 %v1207, 0.0
        %v1631 = vmax.f32 %v1209, 0.0
        %v1632 = vmax.f32 %v1320, 0.0
        %v1633 = vmax.f32 %v1322, 0.0
        %v1634 = vmax.f32 %v1433, 0.0
        %v1635 = vmax.f32 %v1435, 0.0
        %v1636 = vmax.f32 %v1546, 0.0
        %v1637 = vmax.f32 %v1548, 0.0
        %v1638 = vmax.f32 %v1211, 0.0
        %v1639 = vmax.f32 %v1213, 0.0
        %v1640 = vmax.f32 %v1324, 0.0
        %v1641 = vmax.f32 %v1326, 0.0
        %v1642 = vmax.f32 %v1437, 0.0
        %v1643 = vmax.f32 %v1439, 0.0
        %v1644 = vmax.f32 %v1550, 0.0
        %v1645 = vmax.f32 %v1552, 0.0
        %v1646 = vmax.f32 %v1217, 0.0
        %v1647 = vmax.f32 %v1219, 0.0
        %v1648 = vmax.f32 %v1330, 0.0
        %v1649 = vmax.f32 %v1332, 0.0
        %v1650 = vmax.f32 %v1443, 0.0
        %v1651 = vmax.f32 %v1445, 0.0
        %v1652 = vmax.f32 %v1556, 0.0
        %v1653 = vmax.f32 %v1558, 0.0
        %v1654 = vmax.f32 %v1221, 0.0
        %v1655 = vmax.f32 %v1223, 0.0
        %v1656 = vmax.f32 %v1334, 0.0
        %v1657 = vmax.f32 %v1336, 0.0
        %v1658 = vmax.f32 %v1447, 0.0
        %v1659 = vmax.f32 %v1449, 0.0
        %v1660 = vmax.f32 %v1560, 0.0
        %v1661 = vmax.f32 %v1562, 0.0
        %v1662 = vmax.f32 %v1227, 0.0
        %v1663 = vmax.f32 %v1229, 0.0
        %v1664 = vmax.f32 %v1340, 0.0
        %v1665 = vmax.f32 %v1342, 0.0
        %v1666 = vmax.f32 %v1453, 0.0
        %v1667 = vmax.f32 %v1455, 0.0
        %v1668 = vmax.f32 %v1566, 0.0
        %v1669 = vmax.f32 %v1568, 0.0
        %v1670 = vmax.f32 %v1231, 0.0
        %v1671 = vmax.f32 %v1233, 0.0
        %v1672 = vmax.f32 %v1344, 0.0
        %v1673 = vmax.f32 %v1346, 0.0
        %v1674 = vmax.f32 %v1457, 0.0
        %v1675 = vmax.f32 %v1459, 0.0
        %v1676 = vmax.f32 %v1570, 0.0
        %v1677 = vmax.f32 %v1572, 0.0
        %v1678 = vmax.f32 %v1237, 0.0
        %v1679 = vmax.f32 %v1239, 0.0
        %v1680 = vmax.f32 %v1350, 0.0
        %v1681 = vmax.f32 %v1352, 0.0
        %v1682 = vmax.f32 %v1463, 0.0
        %v1683 = vmax.f32 %v1465, 0.0
        %v1684 = vmax.f32 %v1576, 0.0
        %v1685 = vmax.f32 %v1578, 0.0
        %v1686 = vmax.f32 %v1241, 0.0
        %v1687 = vmax.f32 %v1243, 0.0
        %v1688 = vmax.f32 %v1354, 0.0
        %v1689 = vmax.f32 %v1356, 0.0
        %v1690 = vmax.f32 %v1467, 0.0
        %v1691 = vmax.f32 %v1469, 0.0
        %v1692 = vmax.f32 %v1580, 0.0
        %v1693 = vmax.f32 %v1582, 0.0
        %v1694 = vmax.f32 %v1247, 0.0
        %v1695 = vmax.f32 %v1249, 0.0
        %v1696 = vmax.f32 %v1360, 0.0
        %v1697 = vmax.f32 %v1362, 0.0
        %v1698 = vmax.f32 %v1473, 0.0
        %v1699 = vmax.f32 %v1475, 0.0
        %v1700 = vmax.f32 %v1586, 0.0
        %v1701 = vmax.f32 %v1588, 0.0
        %v1702 = vmax.f32 %v1251, 0.0
        %v1703 = vmax.f32 %v1253, 0.0
        %v1704 = vmax.f32 %v1364, 0.0
        %v1705 = vmax.f32 %v1366, 0.0
        %v1706 = vmax.f32 %v1477, 0.0
        %v1707 = vmax.f32 %v1479, 0.0
        %v1708 = vmax.f32 %v1590, 0.0
        %v1709 = vmax.f32 %v1592, 0.0
        %v1710 = vmax.f32 %v1257, 0.0
        %v1711 = vmax.f32 %v1259, 0.0
        %v1712 = vmax.f32 %v1370, 0.0
        %v1713 = vmax.f32 %v1372, 0.0
        %v1714 = vmax.f32 %v1483, 0.0
        %v1715 = vmax.f32 %v1485, 0.0
        %v1716 = vmax.f32 %v1596, 0.0
        %v1717 = vmax.f32 %v1598, 0.0
        %v1718 = vmax.f32 %v1261, 0.0
        %v1719 = vmax.f32 %v1263, 0.0
        %v1720 = vmax.f32 %v1374, 0.0
        %v1721 = vmax.f32 %v1376, 0.0
        %v1722 = vmax.f32 %v1487, 0.0
        %v1723 = vmax.f32 %v1489, 0.0
        %v1724 = vmax.f32 %v1600, 0.0
        %v1725 = vmax.f32 %v1602, 0.0
        %v1726 = vmax.f32 %v1267, 0.0
        %v1727 = vmax.f32 %v1269, 0.0
        %v1728 = vmax.f32 %v1380, 0.0
        %v1729 = vmax.f32 %v1382, 0.0
        %v1730 = vmax.f32 %v1493, 0.0
        %v1731 = vmax.f32 %v1495, 0.0
        %v1732 = vmax.f32 %v1606, 0.0
        %v1733 = vmax.f32 %v1608, 0.0
        %v1734 = vmax.f32 %v1271, 0.0
        %v1735 = vmax.f32 %v1273, 0.0
        %v1736 = vmax.f32 %v1384, 0.0
        %v1737 = vmax.f32 %v1386, 0.0
        %v1738 = vmax.f32 %v1497, 0.0
        %v1739 = vmax.f32 %v1499, 0.0
        %v1740 = vmax.f32 %v1610, 0.0
        %v1741 = vmax.f32 %v1612, 0.0
        %v1742 = vmax.f32 %v1614, %v1622
        %v1743 = vmax.f32 %v1742, %v1630
        %v1744 = vmax.f32 %v1743, %v1638
        %v1745 = vmax.f32 %v1744, %v1646
        %v1746 = vmax.f32 %v1745, %v1654
        %v1747 = vmax.f32 %v1746, %v1662
        %v1748 = vmax.f32 %v1747, %v1670
        %v1749 = vmax.f32 %v1748, %v1678
        %v1750 = vmax.f32 %v1749, %v1686
        %v1751 = vmax.f32 %v1750, %v1694
        %v1752 = vmax.f32 %v1751, %v1702
        %v1753 = vmax.f32 %v1752, %v1710
        %v1754 = vmax.f32 %v1753, %v1718
        %v1755 = vmax.f32 %v1754, %v1726
        %v1756 = vmax.f32 %v1755, %v1734
        %v1757 = vrot.slane %v1756, 4
        %v1758 = vmax.f32 %v1756, %v1757
        %v1759 = vrot.slane %v1758, 2
        %v1760 = vmax.f32 %v1758, %v1759
        %v1761 = vrot.slane %v1760, 1
        %v1762 = vmax.f32 %v1760, %v1761
        %v1763 = vmax.f32 %v1615, %v1623
        %v1764 = vmax.f32 %v1763, %v1631
        %v1765 = vmax.f32 %v1764, %v1639
        %v1766 = vmax.f32 %v1765, %v1647
        %v1767 = vmax.f32 %v1766, %v1655
        %v1768 = vmax.f32 %v1767, %v1663
        %v1769 = vmax.f32 %v1768, %v1671
        %v1770 = vmax.f32 %v1769, %v1679
        %v1771 = vmax.f32 %v1770, %v1687
        %v1772 = vmax.f32 %v1771, %v1695
        %v1773 = vmax.f32 %v1772, %v1703
        %v1774 = vmax.f32 %v1773, %v1711
        %v1775 = vmax.f32 %v1774, %v1719
        %v1776 = vmax.f32 %v1775, %v1727
        %v1777 = vmax.f32 %v1776, %v1735
        %v1778 = vrot.slane %v1777, 4
        %v1779 = vmax.f32 %v1777, %v1778
        %v1780 = vrot.slane %v1779, 2
        %v1781 = vmax.f32 %v1779, %v1780
        %v1782 = vrot.slane %v1781, 1
        %v1783 = vmax.f32 %v1781, %v1782
        %v1784 = vmax.f32 %v1616, %v1624
        %v1785 = vmax.f32 %v1784, %v1632
        %v1786 = vmax.f32 %v1785, %v1640
        %v1787 = vmax.f32 %v1786, %v1648
        %v1788 = vmax.f32 %v1787, %v1656
        %v1789 = vmax.f32 %v1788, %v1664
        %v1790 = vmax.f32 %v1789, %v1672
        %v1791 = vmax.f32 %v1790, %v1680
        %v1792 = vmax.f32 %v1791, %v1688
        %v1793 = vmax.f32 %v1792, %v1696
        %v1794 = vmax.f32 %v1793, %v1704
        %v1795 = vmax.f32 %v1794, %v1712
        %v1796 = vmax.f32 %v1795, %v1720
        %v1797 = vmax.f32 %v1796, %v1728
        %v1798 = vmax.f32 %v1797, %v1736
        %v1799 = vrot.slane %v1798, 4
        %v1800 = vmax.f32 %v1798, %v1799
        %v1801 = vrot.slane %v1800, 2
        %v1802 = vmax.f32 %v1800, %v1801
        %v1803 = vrot.slane %v1802, 1
        %v1804 = vmax.f32 %v1802, %v1803
        %v1805 = vmax.f32 %v1617, %v1625
        %v1806 = vmax.f32 %v1805, %v1633
        %v1807 = vmax.f32 %v1806, %v1641
        %v1808 = vmax.f32 %v1807, %v1649
        %v1809 = vmax.f32 %v1808, %v1657
        %v1810 = vmax.f32 %v1809, %v1665
        %v1811 = vmax.f32 %v1810, %v1673
        %v1812 = vmax.f32 %v1811, %v1681
        %v1813 = vmax.f32 %v1812, %v1689
        %v1814 = vmax.f32 %v1813, %v1697
        %v1815 = vmax.f32 %v1814, %v1705
        %v1816 = vmax.f32 %v1815, %v1713
        %v1817 = vmax.f32 %v1816, %v1721
        %v1818 = vmax.f32 %v1817, %v1729
        %v1819 = vmax.f32 %v1818, %v1737
        %v1820 = vrot.slane %v1819, 4
        %v1821 = vmax.f32 %v1819, %v1820
        %v1822 = vrot.slane %v1821, 2
        %v1823 = vmax.f32 %v1821, %v1822
        %v1824 = vrot.slane %v1823, 1
        %v1825 = vmax.f32 %v1823, %v1824
        %v1826 = vmax.f32 %v1618, %v1626
        %v1827 = vmax.f32 %v1826, %v1634
        %v1828 = vmax.f32 %v1827, %v1642
        %v1829 = vmax.f32 %v1828, %v1650
        %v1830 = vmax.f32 %v1829, %v1658
        %v1831 = vmax.f32 %v1830, %v1666
        %v1832 = vmax.f32 %v1831, %v1674
        %v1833 = vmax.f32 %v1832, %v1682
        %v1834 = vmax.f32 %v1833, %v1690
        %v1835 = vmax.f32 %v1834, %v1698
        %v1836 = vmax.f32 %v1835, %v1706
        %v1837 = vmax.f32 %v1836, %v1714
        %v1838 = vmax.f32 %v1837, %v1722
        %v1839 = vmax.f32 %v1838, %v1730
        %v1840 = vmax.f32 %v1839, %v1738
        %v1841 = vrot.slane %v1840, 4
        %v1842 = vmax.f32 %v1840, %v1841
        %v1843 = vrot.slane %v1842, 2
        %v1844 = vmax.f32 %v1842, %v1843
        %v1845 = vrot.slane %v1844, 1
        %v1846 = vmax.f32 %v1844, %v1845
        %v1847 = vmax.f32 %v1619, %v1627
        %v1848 = vmax.f32 %v1847, %v1635
        %v1849 = vmax.f32 %v1848, %v1643
        %v1850 = vmax.f32 %v1849, %v1651
        %v1851 = vmax.f32 %v1850, %v1659
        %v1852 = vmax.f32 %v1851, %v1667
        %v1853 = vmax.f32 %v1852, %v1675
        %v1854 = vmax.f32 %v1853, %v1683
        %v1855 = vmax.f32 %v1854, %v1691
        %v1856 = vmax.f32 %v1855, %v1699
        %v1857 = vmax.f32 %v1856, %v1707
        %v1858 = vmax.f32 %v1857, %v1715
        %v1859 = vmax.f32 %v1858, %v1723
        %v1860 = vmax.f32 %v1859, %v1731
        %v1861 = vmax.f32 %v1860, %v1739
        %v1862 = vrot.slane %v1861, 4
        %v1863 = vmax.f32 %v1861, %v1862
        %v1864 = vrot.slane %v1863, 2
        %v1865 = vmax.f32 %v1863, %v1864
        %v1866 = vrot.slane %v1865, 1
        %v1867 = vmax.f32 %v1865, %v1866
        %v1868 = vmax.f32 %v1620, %v1628
        %v1869 = vmax.f32 %v1868, %v1636
        %v1870 = vmax.f32 %v1869, %v1644
        %v1871 = vmax.f32 %v1870, %v1652
        %v1872 = vmax.f32 %v1871, %v1660
        %v1873 = vmax.f32 %v1872, %v1668
        %v1874 = vmax.f32 %v1873, %v1676
        %v1875 = vmax.f32 %v1874, %v1684
        %v1876 = vmax.f32 %v1875, %v1692
        %v1877 = vmax.f32 %v1876, %v1700
        %v1878 = vmax.f32 %v1877, %v1708
        %v1879 = vmax.f32 %v1878, %v1716
        %v1880 = vmax.f32 %v1879, %v1724
        %v1881 = vmax.f32 %v1880, %v1732
        %v1882 = vmax.f32 %v1881, %v1740
        %v1883 = vrot.slane %v1882, 4
        %v1884 = vmax.f32 %v1882, %v1883
        %v1885 = vrot.slane %v1884, 2
        %v1886 = vmax.f32 %v1884, %v1885
        %v1887 = vrot.slane %v1886, 1
        %v1888 = vmax.f32 %v1886, %v1887
        %v1889 = vmax.f32 %v1621, %v1629
        %v1890 = vmax.f32 %v1889, %v1637
        %v1891 = vmax.f32 %v1890, %v1645
        %v1892 = vmax.f32 %v1891, %v1653
        %v1893 = vmax.f32 %v1892, %v1661
        %v1894 = vmax.f32 %v1893, %v1669
        %v1895 = vmax.f32 %v1894, %v1677
        %v1896 = vmax.f32 %v1895, %v1685
        %v1897 = vmax.f32 %v1896, %v1693
        %v1898 = vmax.f32 %v1897, %v1701
        %v1899 = vmax.f32 %v1898, %v1709
        %v1900 = vmax.f32 %v1899, %v1717
        %v1901 = vmax.f32 %v1900, %v1725
        %v1902 = vmax.f32 %v1901, %v1733
        %v1903 = vmax.f32 %v1902, %v1741
        %v1904 = vrot.slane %v1903, 4
        %v1905 = vmax.f32 %v1903, %v1904
        %v1906 = vrot.slane %v1905, 2
        %v1907 = vmax.f32 %v1905, %v1906
        %v1908 = vrot.slane %v1907, 1
        %v1909 = vmax.f32 %v1907, %v1908
        %v1910 = vld [vmem:[#allocation2] sm:$0xff]
        %v1911 = vpack.c.bf16 %v1762, %v1762
        %v1912 = vpack.c.bf16 %v1783, %v1783
        %v1913 = vpack.c.bf16 %v1804, %v1804
        %v1914 = vpack.c.bf16 %v1825, %v1825
        %v1915 = vpack.c.bf16 %v1846, %v1846
        %v1916 = vpack.c.bf16 %v1867, %v1867
        %v1917 = vpack.c.bf16 %v1888, %v1888
        %v1918 = vpack.c.bf16 %v1909, %v1909
        %v1927 = vcombine.low %v1911, %v1912
        %v1928 = vcombine.low %v1913, %v1914
        %v1929 = vcombine.low %v1915, %v1916
        %v1930 = vcombine.low %v1917, %v1918
        %v1932 = vunpack.c.l.s4 1966171168
        %v1933 = vunpack.c.0.s8 %v1932
        %v1934 = vlaneseq
        %v1935 = vshrl.u32 %v1934, 7
        %v1936 = vsub.s32 %v1933, %v1935
        %v1937 = vrot.slane %v1927, %v1936
        %v1939 = vunpack.c.l.s4 1966171168
        %v1940 = vunpack.c.0.s8 %v1939
        %v1941 = vlaneseq
        %v1942 = vshrl.u32 %v1941, 7
        %v1943 = vsub.s32 %v1940, %v1942
        %v1944 = vrot.slane %v1928, %v1943
        %v1946 = vunpack.c.l.s4 1966171168
        %v1947 = vunpack.c.0.s8 %v1946
        %v1948 = vlaneseq
        %v1949 = vshrl.u32 %v1948, 7
        %v1950 = vsub.s32 %v1947, %v1949
        %v1951 = vrot.slane %v1929, %v1950
        %v1953 = vunpack.c.l.s4 1966171168
        %v1954 = vunpack.c.0.s8 %v1953
        %v1955 = vlaneseq
        %v1956 = vshrl.u32 %v1955, 7
        %v1957 = vsub.s32 %v1954, %v1956
        %v1958 = vrot.slane %v1930, %v1957
        %v1959 = vcombine.low %v1937, %v1944
        %v1960 = vcombine.low %v1951, %v1958
        %v1962 = vunpack.c.l.s4 1966171168
        %v1963 = vunpack.c.0.s8 %v1962
        %v1964 = vlaneseq
        %v1965 = vshrl.u32 %v1964, 7
        %v1966 = vsub.s32 %v1963, %v1965
        %v1967 = vrot.slane %v1959, %v1966
        %v1969 = vunpack.c.l.s4 1966171168
        %v1970 = vunpack.c.0.s8 %v1969
        %v1971 = vlaneseq
        %v1972 = vshrl.u32 %v1971, 7
        %v1973 = vsub.s32 %v1970, %v1972
        %v1974 = vrot.slane %v1960, %v1973
        %v1975 = vcombine.low %v1967, %v1974
        %v1977 = vmax.bf16 %v1910, %v1975
        %vm1978 = vcmask 1040384
        %vm1979 = vsmask.f32 256
        %vm1980 = vmand %vm1978, %vm1979
        %vm1981 = vcmask 1041409
        %vm1982 = vsmask.f32 1280
        %vm1983 = vmand %vm1981, %vm1982
        %vm1984 = vmor %vm1983, %vm1980
        %vm1985 = vcmask 1042434
        %vm1986 = vsmask.f32 2304
        %vm1987 = vmand %vm1985, %vm1986
        %vm1988 = vmor %vm1987, %vm1984
        %vm1989 = vcmask 1043459
        %vm1990 = vsmask.f32 3328
        %vm1991 = vmand %vm1989, %vm1990
        %vm1992 = vmor %vm1991, %vm1988
        %vm1993 = vcmask 1044484
        %vm1994 = vsmask.f32 4352
        %vm1995 = vmand %vm1993, %vm1994
        %vm1996 = vmor %vm1995, %vm1992
        %vm1997 = vcmask 1045509
        %vm1998 = vsmask.f32 5376
        %vm1999 = vmand %vm1997, %vm1998
        %vm2000 = vmor %vm1999, %vm1996
        %vm2001 = vcmask 1046534
        %vm2002 = vsmask.f32 6400
        %vm2003 = vmand %vm2001, %vm2002
        %vm2004 = vmor %vm2003, %vm2000
        %vm2005 = vcmask 1047559
        %vm2006 = vsmask.f32 7424
        %vm2007 = vmand %vm2005, %vm2006
        %vm2008 = vmor %vm2007, %vm2004
        %v2009 = vsel %vm2008, %v1977, %v1910
        %2010 = vst [vmem:[#allocation2] sm:$0xff] %v2009
        // Predicated region
        $region81: #{tpu_custom_call.1} parent=63 // pred_check
          %p2011 = pneg %p457
        $region82: #{tpu_custom_call.1} parent=63 // pred_check_branch
          %2013 = sbr.rel (%p2011) target = $region84
        $region83: #{tpu_custom_call.1} parent=63 // pred_region
          %v2014 = vld [vmem:[#allocation2] sm:$0xff]
          %v2015 = vld [vmem:[#allocation6] sm:$0xff]
          %v2016 = vld [vmem:[#allocation6 + $0x8] sm:$0xff]
          %v2017 = vld [vmem:[#allocation6 + $0x10] sm:$0xff]
          %v2018 = vld [vmem:[#allocation6 + $0x18] sm:$0xff]
          %v2019 = vld [vmem:[#allocation6 + $0x20] sm:$0xff]
          %v2020 = vld [vmem:[#allocation6 + $0x28] sm:$0xff]
          %v2021 = vld [vmem:[#allocation6 + $0x30] sm:$0xff]
          %v2022 = vld [vmem:[#allocation6 + $0x38] sm:$0xff]
          %v2023 = vld [vmem:[#allocation6 + $0x40] sm:$0xff]
          %v2024 = vld [vmem:[#allocation6 + $0x48] sm:$0xff]
          %v2025 = vld [vmem:[#allocation6 + $0x50] sm:$0xff]
          %v2026 = vld [vmem:[#allocation6 + $0x58] sm:$0xff]
          %v2027 = vld [vmem:[#allocation6 + $0x60] sm:$0xff]
          %v2028 = vld [vmem:[#allocation6 + $0x68] sm:$0xff]
          %v2029 = vld [vmem:[#allocation6 + $0x70] sm:$0xff]
          %v2030 = vld [vmem:[#allocation6 + $0x78] sm:$0xff]
          %v2031 = vld [vmem:[#allocation6 + $0x80] sm:$0xff]
          %v2032 = vld [vmem:[#allocation6 + $0x88] sm:$0xff]
          %v2033 = vld [vmem:[#allocation6 + $0x90] sm:$0xff]
          %v2034 = vld [vmem:[#allocation6 + $0x98] sm:$0xff]
          %v2035 = vld [vmem:[#allocation6 + $0xa0] sm:$0xff]
          %v2036 = vld [vmem:[#allocation6 + $0xa8] sm:$0xff]
          %v2037 = vld [vmem:[#allocation6 + $0xb0] sm:$0xff]
          %v2038 = vld [vmem:[#allocation6 + $0xb8] sm:$0xff]
          %v2039 = vld [vmem:[#allocation6 + $0xc0] sm:$0xff]
          %v2040 = vld [vmem:[#allocation6 + $0xc8] sm:$0xff]
          %v2041 = vld [vmem:[#allocation6 + $0xd0] sm:$0xff]
          %v2042 = vld [vmem:[#allocation6 + $0xd8] sm:$0xff]
          %v2043 = vld [vmem:[#allocation6 + $0xe0] sm:$0xff]
          %v2044 = vld [vmem:[#allocation6 + $0xe8] sm:$0xff]
          %v2045 = vld [vmem:[#allocation6 + $0xf0] sm:$0xff]
          %v2046 = vld [vmem:[#allocation6 + $0xf8] sm:$0xff]
          %v2047 = vld [vmem:[#allocation6 + $0x100] sm:$0xff]
          %v2048 = vld [vmem:[#allocation6 + $0x108] sm:$0xff]
          %v2049 = vld [vmem:[#allocation6 + $0x110] sm:$0xff]
          %v2050 = vld [vmem:[#allocation6 + $0x118] sm:$0xff]
          %v2051 = vld [vmem:[#allocation6 + $0x120] sm:$0xff]
          %v2052 = vld [vmem:[#allocation6 + $0x128] sm:$0xff]
          %v2053 = vld [vmem:[#allocation6 + $0x130] sm:$0xff]
          %v2054 = vld [vmem:[#allocation6 + $0x138] sm:$0xff]
          %v2055 = vld [vmem:[#allocation6 + $0x140] sm:$0xff]
          %v2056 = vld [vmem:[#allocation6 + $0x148] sm:$0xff]
          %v2057 = vld [vmem:[#allocation6 + $0x150] sm:$0xff]
          %v2058 = vld [vmem:[#allocation6 + $0x158] sm:$0xff]
          %v2059 = vld [vmem:[#allocation6 + $0x160] sm:$0xff]
          %v2060 = vld [vmem:[#allocation6 + $0x168] sm:$0xff]
          %v2061 = vld [vmem:[#allocation6 + $0x170] sm:$0xff]
          %v2062 = vld [vmem:[#allocation6 + $0x178] sm:$0xff]
          %v2063 = vld [vmem:[#allocation6 + $0x180] sm:$0xff]
          %v2064 = vld [vmem:[#allocation6 + $0x188] sm:$0xff]
          %v2065 = vld [vmem:[#allocation6 + $0x190] sm:$0xff]
          %v2066 = vld [vmem:[#allocation6 + $0x198] sm:$0xff]
          %v2067 = vld [vmem:[#allocation6 + $0x1a0] sm:$0xff]
          %v2068 = vld [vmem:[#allocation6 + $0x1a8] sm:$0xff]
          %v2069 = vld [vmem:[#allocation6 + $0x1b0] sm:$0xff]
          %v2070 = vld [vmem:[#allocation6 + $0x1b8] sm:$0xff]
          %v2071 = vld [vmem:[#allocation6 + $0x1c0] sm:$0xff]
          %v2072 = vld [vmem:[#allocation6 + $0x1c8] sm:$0xff]
          %v2073 = vld [vmem:[#allocation6 + $0x1d0] sm:$0xff]
          %v2074 = vld [vmem:[#allocation6 + $0x1d8] sm:$0xff]
          %v2075 = vld [vmem:[#allocation6 + $0x1e0] sm:$0xff]
          %v2076 = vld [vmem:[#allocation6 + $0x1e8] sm:$0xff]
          %v2077 = vld [vmem:[#allocation6 + $0x1f0] sm:$0xff]
          %v2078 = vld [vmem:[#allocation6 + $0x1f8] sm:$0xff]
          %v2079 = vld [vmem:[#allocation6 + $0x200] sm:$0xff]
          %v2080 = vld [vmem:[#allocation6 + $0x208] sm:$0xff]
          %v2081 = vld [vmem:[#allocation6 + $0x210] sm:$0xff]
          %v2082 = vld [vmem:[#allocation6 + $0x218] sm:$0xff]
          %v2083 = vld [vmem:[#allocation6 + $0x220] sm:$0xff]
          %v2084 = vld [vmem:[#allocation6 + $0x228] sm:$0xff]
          %v2085 = vld [vmem:[#allocation6 + $0x230] sm:$0xff]
          %v2086 = vld [vmem:[#allocation6 + $0x238] sm:$0xff]
          %v2087 = vld [vmem:[#allocation6 + $0x240] sm:$0xff]
          %v2088 = vld [vmem:[#allocation6 + $0x248] sm:$0xff]
          %v2089 = vld [vmem:[#allocation6 + $0x250] sm:$0xff]
          %v2090 = vld [vmem:[#allocation6 + $0x258] sm:$0xff]
          %v2091 = vld [vmem:[#allocation6 + $0x260] sm:$0xff]
          %v2092 = vld [vmem:[#allocation6 + $0x268] sm:$0xff]
          %v2093 = vld [vmem:[#allocation6 + $0x270] sm:$0xff]
          %v2094 = vld [vmem:[#allocation6 + $0x278] sm:$0xff]
          %v2095 = vld [vmem:[#allocation6 + $0x280] sm:$0xff]
          %v2096 = vld [vmem:[#allocation6 + $0x288] sm:$0xff]
          %v2097 = vld [vmem:[#allocation6 + $0x290] sm:$0xff]
          %v2098 = vld [vmem:[#allocation6 + $0x298] sm:$0xff]
          %v2099 = vld [vmem:[#allocation6 + $0x2a0] sm:$0xff]
          %v2100 = vld [vmem:[#allocation6 + $0x2a8] sm:$0xff]
          %v2101 = vld [vmem:[#allocation6 + $0x2b0] sm:$0xff]
          %v2102 = vld [vmem:[#allocation6 + $0x2b8] sm:$0xff]
          %v2103 = vld [vmem:[#allocation6 + $0x2c0] sm:$0xff]
          %v2104 = vld [vmem:[#allocation6 + $0x2c8] sm:$0xff]
          %v2105 = vld [vmem:[#allocation6 + $0x2d0] sm:$0xff]
          %v2106 = vld [vmem:[#allocation6 + $0x2d8] sm:$0xff]
          %v2107 = vld [vmem:[#allocation6 + $0x2e0] sm:$0xff]
          %v2108 = vld [vmem:[#allocation6 + $0x2e8] sm:$0xff]
          %v2109 = vld [vmem:[#allocation6 + $0x2f0] sm:$0xff]
          %v2110 = vld [vmem:[#allocation6 + $0x2f8] sm:$0xff]
          %v2111 = vld [vmem:[#allocation6 + $0x300] sm:$0xff]
          %v2112 = vld [vmem:[#allocation6 + $0x308] sm:$0xff]
          %v2113 = vld [vmem:[#allocation6 + $0x310] sm:$0xff]
          %v2114 = vld [vmem:[#allocation6 + $0x318] sm:$0xff]
          %v2115 = vld [vmem:[#allocation6 + $0x320] sm:$0xff]
          %v2116 = vld [vmem:[#allocation6 + $0x328] sm:$0xff]
          %v2117 = vld [vmem:[#allocation6 + $0x330] sm:$0xff]
          %v2118 = vld [vmem:[#allocation6 + $0x338] sm:$0xff]
          %v2119 = vld [vmem:[#allocation6 + $0x340] sm:$0xff]
          %v2120 = vld [vmem:[#allocation6 + $0x348] sm:$0xff]
          %v2121 = vld [vmem:[#allocation6 + $0x350] sm:$0xff]
          %v2122 = vld [vmem:[#allocation6 + $0x358] sm:$0xff]
          %v2123 = vld [vmem:[#allocation6 + $0x360] sm:$0xff]
          %v2124 = vld [vmem:[#allocation6 + $0x368] sm:$0xff]
          %v2125 = vld [vmem:[#allocation6 + $0x370] sm:$0xff]
          %v2126 = vld [vmem:[#allocation6 + $0x378] sm:$0xff]
          %v2127 = vld [vmem:[#allocation6 + $0x380] sm:$0xff]
          %v2128 = vld [vmem:[#allocation6 + $0x388] sm:$0xff]
          %v2129 = vld [vmem:[#allocation6 + $0x390] sm:$0xff]
          %v2130 = vld [vmem:[#allocation6 + $0x398] sm:$0xff]
          %v2131 = vld [vmem:[#allocation6 + $0x3a0] sm:$0xff]
          %v2132 = vld [vmem:[#allocation6 + $0x3a8] sm:$0xff]
          %v2133 = vld [vmem:[#allocation6 + $0x3b0] sm:$0xff]
          %v2134 = vld [vmem:[#allocation6 + $0x3b8] sm:$0xff]
          %v2135 = vld [vmem:[#allocation6 + $0x3c0] sm:$0xff]
          %v2136 = vld [vmem:[#allocation6 + $0x3c8] sm:$0xff]
          %v2137 = vld [vmem:[#allocation6 + $0x3d0] sm:$0xff]
          %v2138 = vld [vmem:[#allocation6 + $0x3d8] sm:$0xff]
          %v2139 = vld [vmem:[#allocation6 + $0x3e0] sm:$0xff]
          %v2140 = vld [vmem:[#allocation6 + $0x3e8] sm:$0xff]
          %v2141 = vld [vmem:[#allocation6 + $0x3f0] sm:$0xff]
          %v2142 = vld [vmem:[#allocation6 + $0x3f8] sm:$0xff]
          %v2143 = vld [vmem:[#allocation6 + $0x400] sm:$0xff]
          %v2144 = vld [vmem:[#allocation6 + $0x408] sm:$0xff]
          %v2145 = vld [vmem:[#allocation6 + $0x410] sm:$0xff]
          %v2146 = vld [vmem:[#allocation6 + $0x418] sm:$0xff]
          %v2147 = vld [vmem:[#allocation6 + $0x420] sm:$0xff]
          %v2148 = vld [vmem:[#allocation6 + $0x428] sm:$0xff]
          %v2149 = vld [vmem:[#allocation6 + $0x430] sm:$0xff]
          %v2150 = vld [vmem:[#allocation6 + $0x438] sm:$0xff]
          %v2151 = vld [vmem:[#allocation6 + $0x440] sm:$0xff]
          %v2152 = vld [vmem:[#allocation6 + $0x448] sm:$0xff]
          %v2153 = vld [vmem:[#allocation6 + $0x450] sm:$0xff]
          %v2154 = vld [vmem:[#allocation6 + $0x458] sm:$0xff]
          %v2155 = vld [vmem:[#allocation6 + $0x460] sm:$0xff]
          %v2156 = vld [vmem:[#allocation6 + $0x468] sm:$0xff]
          %v2157 = vld [vmem:[#allocation6 + $0x470] sm:$0xff]
          %v2158 = vld [vmem:[#allocation6 + $0x478] sm:$0xff]
          %v2159 = vld [vmem:[#allocation6 + $0x480] sm:$0xff]
          %v2160 = vld [vmem:[#allocation6 + $0x488] sm:$0xff]
          %v2161 = vld [vmem:[#allocation6 + $0x490] sm:$0xff]
          %v2162 = vld [vmem:[#allocation6 + $0x498] sm:$0xff]
          %v2163 = vld [vmem:[#allocation6 + $0x4a0] sm:$0xff]
          %v2164 = vld [vmem:[#allocation6 + $0x4a8] sm:$0xff]
          %v2165 = vld [vmem:[#allocation6 + $0x4b0] sm:$0xff]
          %v2166 = vld [vmem:[#allocation6 + $0x4b8] sm:$0xff]
          %v2167 = vld [vmem:[#allocation6 + $0x4c0] sm:$0xff]
          %v2168 = vld [vmem:[#allocation6 + $0x4c8] sm:$0xff]
          %v2169 = vld [vmem:[#allocation6 + $0x4d0] sm:$0xff]
          %v2170 = vld [vmem:[#allocation6 + $0x4d8] sm:$0xff]
          %v2171 = vld [vmem:[#allocation6 + $0x4e0] sm:$0xff]
          %v2172 = vld [vmem:[#allocation6 + $0x4e8] sm:$0xff]
          %v2173 = vld [vmem:[#allocation6 + $0x4f0] sm:$0xff]
          %v2174 = vld [vmem:[#allocation6 + $0x4f8] sm:$0xff]
          %v2175 = vld [vmem:[#allocation6 + $0x500] sm:$0xff]
          %v2176 = vld [vmem:[#allocation6 + $0x508] sm:$0xff]
          %v2177 = vld [vmem:[#allocation6 + $0x510] sm:$0xff]
          %v2178 = vld [vmem:[#allocation6 + $0x518] sm:$0xff]
          %v2179 = vld [vmem:[#allocation6 + $0x520] sm:$0xff]
          %v2180 = vld [vmem:[#allocation6 + $0x528] sm:$0xff]
          %v2181 = vld [vmem:[#allocation6 + $0x530] sm:$0xff]
          %v2182 = vld [vmem:[#allocation6 + $0x538] sm:$0xff]
          %v2183 = vld [vmem:[#allocation6 + $0x540] sm:$0xff]
          %v2184 = vld [vmem:[#allocation6 + $0x548] sm:$0xff]
          %v2185 = vld [vmem:[#allocation6 + $0x550] sm:$0xff]
          %v2186 = vld [vmem:[#allocation6 + $0x558] sm:$0xff]
          %v2187 = vld [vmem:[#allocation6 + $0x560] sm:$0xff]
          %v2188 = vld [vmem:[#allocation6 + $0x568] sm:$0xff]
          %v2189 = vld [vmem:[#allocation6 + $0x570] sm:$0xff]
          %v2190 = vld [vmem:[#allocation6 + $0x578] sm:$0xff]
          %v2191 = vld [vmem:[#allocation6 + $0x580] sm:$0xff]
          %v2192 = vld [vmem:[#allocation6 + $0x588] sm:$0xff]
          %v2193 = vld [vmem:[#allocation6 + $0x590] sm:$0xff]
          %v2194 = vld [vmem:[#allocation6 + $0x598] sm:$0xff]
          %v2195 = vld [vmem:[#allocation6 + $0x5a0] sm:$0xff]
          %v2196 = vld [vmem:[#allocation6 + $0x5a8] sm:$0xff]
          %v2197 = vld [vmem:[#allocation6 + $0x5b0] sm:$0xff]
          %v2198 = vld [vmem:[#allocation6 + $0x5b8] sm:$0xff]
          %v2199 = vld [vmem:[#allocation6 + $0x5c0] sm:$0xff]
          %v2200 = vld [vmem:[#allocation6 + $0x5c8] sm:$0xff]
          %v2201 = vld [vmem:[#allocation6 + $0x5d0] sm:$0xff]
          %v2202 = vld [vmem:[#allocation6 + $0x5d8] sm:$0xff]
          %v2203 = vld [vmem:[#allocation6 + $0x5e0] sm:$0xff]
          %v2204 = vld [vmem:[#allocation6 + $0x5e8] sm:$0xff]
          %v2205 = vld [vmem:[#allocation6 + $0x5f0] sm:$0xff]
          %v2206 = vld [vmem:[#allocation6 + $0x5f8] sm:$0xff]
          %v2207 = vld [vmem:[#allocation6 + $0x600] sm:$0xff]
          %v2208 = vld [vmem:[#allocation6 + $0x608] sm:$0xff]
          %v2209 = vld [vmem:[#allocation6 + $0x610] sm:$0xff]
          %v2210 = vld [vmem:[#allocation6 + $0x618] sm:$0xff]
          %v2211 = vld [vmem:[#allocation6 + $0x620] sm:$0xff]
          %v2212 = vld [vmem:[#allocation6 + $0x628] sm:$0xff]
          %v2213 = vld [vmem:[#allocation6 + $0x630] sm:$0xff]
          %v2214 = vld [vmem:[#allocation6 + $0x638] sm:$0xff]
          %v2215 = vld [vmem:[#allocation6 + $0x640] sm:$0xff]
          %v2216 = vld [vmem:[#allocation6 + $0x648] sm:$0xff]
          %v2217 = vld [vmem:[#allocation6 + $0x650] sm:$0xff]
          %v2218 = vld [vmem:[#allocation6 + $0x658] sm:$0xff]
          %v2219 = vld [vmem:[#allocation6 + $0x660] sm:$0xff]
          %v2220 = vld [vmem:[#allocation6 + $0x668] sm:$0xff]
          %v2221 = vld [vmem:[#allocation6 + $0x670] sm:$0xff]
          %v2222 = vld [vmem:[#allocation6 + $0x678] sm:$0xff]
          %v2223 = vld [vmem:[#allocation6 + $0x680] sm:$0xff]
          %v2224 = vld [vmem:[#allocation6 + $0x688] sm:$0xff]
          %v2225 = vld [vmem:[#allocation6 + $0x690] sm:$0xff]
          %v2226 = vld [vmem:[#allocation6 + $0x698] sm:$0xff]
          %v2227 = vld [vmem:[#allocation6 + $0x6a0] sm:$0xff]
          %v2228 = vld [vmem:[#allocation6 + $0x6a8] sm:$0xff]
          %v2229 = vld [vmem:[#allocation6 + $0x6b0] sm:$0xff]
          %v2230 = vld [vmem:[#allocation6 + $0x6b8] sm:$0xff]
          %v2231 = vld [vmem:[#allocation6 + $0x6c0] sm:$0xff]
          %v2232 = vld [vmem:[#allocation6 + $0x6c8] sm:$0xff]
          %v2233 = vld [vmem:[#allocation6 + $0x6d0] sm:$0xff]
          %v2234 = vld [vmem:[#allocation6 + $0x6d8] sm:$0xff]
          %v2235 = vld [vmem:[#allocation6 + $0x6e0] sm:$0xff]
          %v2236 = vld [vmem:[#allocation6 + $0x6e8] sm:$0xff]
          %v2237 = vld [vmem:[#allocation6 + $0x6f0] sm:$0xff]
          %v2238 = vld [vmem:[#allocation6 + $0x6f8] sm:$0xff]
          %v2239 = vld [vmem:[#allocation6 + $0x700] sm:$0xff]
          %v2240 = vld [vmem:[#allocation6 + $0x708] sm:$0xff]
          %v2241 = vld [vmem:[#allocation6 + $0x710] sm:$0xff]
          %v2242 = vld [vmem:[#allocation6 + $0x718] sm:$0xff]
          %v2243 = vld [vmem:[#allocation6 + $0x720] sm:$0xff]
          %v2244 = vld [vmem:[#allocation6 + $0x728] sm:$0xff]
          %v2245 = vld [vmem:[#allocation6 + $0x730] sm:$0xff]
          %v2246 = vld [vmem:[#allocation6 + $0x738] sm:$0xff]
          %v2247 = vld [vmem:[#allocation6 + $0x740] sm:$0xff]
          %v2248 = vld [vmem:[#allocation6 + $0x748] sm:$0xff]
          %v2249 = vld [vmem:[#allocation6 + $0x750] sm:$0xff]
          %v2250 = vld [vmem:[#allocation6 + $0x758] sm:$0xff]
          %v2251 = vld [vmem:[#allocation6 + $0x760] sm:$0xff]
          %v2252 = vld [vmem:[#allocation6 + $0x768] sm:$0xff]
          %v2253 = vld [vmem:[#allocation6 + $0x770] sm:$0xff]
          %v2254 = vld [vmem:[#allocation6 + $0x778] sm:$0xff]
          %v2255 = vld [vmem:[#allocation6 + $0x780] sm:$0xff]
          %v2256 = vld [vmem:[#allocation6 + $0x788] sm:$0xff]
          %v2257 = vld [vmem:[#allocation6 + $0x790] sm:$0xff]
          %v2258 = vld [vmem:[#allocation6 + $0x798] sm:$0xff]
          %v2259 = vld [vmem:[#allocation6 + $0x7a0] sm:$0xff]
          %v2260 = vld [vmem:[#allocation6 + $0x7a8] sm:$0xff]
          %v2261 = vld [vmem:[#allocation6 + $0x7b0] sm:$0xff]
          %v2262 = vld [vmem:[#allocation6 + $0x7b8] sm:$0xff]
          %v2263 = vld [vmem:[#allocation6 + $0x7c0] sm:$0xff]
          %v2264 = vld [vmem:[#allocation6 + $0x7c8] sm:$0xff]
          %v2265 = vld [vmem:[#allocation6 + $0x7d0] sm:$0xff]
          %v2266 = vld [vmem:[#allocation6 + $0x7d8] sm:$0xff]
          %v2267 = vld [vmem:[#allocation6 + $0x7e0] sm:$0xff]
          %v2268 = vld [vmem:[#allocation6 + $0x7e8] sm:$0xff]
          %v2269 = vld [vmem:[#allocation6 + $0x7f0] sm:$0xff]
          %v2270 = vld [vmem:[#allocation6 + $0x7f8] sm:$0xff]
          %v2271 = vld [vmem:[%s6] sm:$0xf]
          %v2273 = vcombine.high %v2014, %v2014
          %v2275 = vunpack.c.l.s4 1966171168
          %v2276 = vunpack.c.0.s8 %v2275
          %v2277 = vlaneseq
          %v2278 = vshrl.u32 %v2277, 7
          %v2279 = vsub.s32 %v2276, %v2278
          %v2280 = vrot.slane %v2014, %v2279
          %v2282 = vunpack.c.l.s4 1966171168
          %v2283 = vunpack.c.0.s8 %v2282
          %v2284 = vlaneseq
          %v2285 = vshrl.u32 %v2284, 7
          %v2286 = vsub.s32 %v2283, %v2285
          %v2287 = vrot.slane %v2273, %v2286
          %v2288 = vcombine.high %v2280, %v2280
          %v2289 = vcombine.high %v2287, %v2287
          %v2291 = vunpack.c.l.s4 1966171168
          %v2292 = vunpack.c.0.s8 %v2291
          %v2293 = vlaneseq
          %v2294 = vshrl.u32 %v2293, 7
          %v2295 = vsub.s32 %v2292, %v2294
          %v2296 = vrot.slane %v2280, %v2295
          %v2298 = vunpack.c.l.s4 1966171168
          %v2299 = vunpack.c.0.s8 %v2298
          %v2300 = vlaneseq
          %v2301 = vshrl.u32 %v2300, 7
          %v2302 = vsub.s32 %v2299, %v2301
          %v2303 = vrot.slane %v2287, %v2302
          %v2305 = vunpack.c.l.s4 1966171168
          %v2306 = vunpack.c.0.s8 %v2305
          %v2307 = vlaneseq
          %v2308 = vshrl.u32 %v2307, 7
          %v2309 = vsub.s32 %v2306, %v2308
          %v2310 = vrot.slane %v2288, %v2309
          %v2312 = vunpack.c.l.s4 1966171168
          %v2313 = vunpack.c.0.s8 %v2312
          %v2314 = vlaneseq
          %v2315 = vshrl.u32 %v2314, 7
          %v2316 = vsub.s32 %v2313, %v2315
          %v2317 = vrot.slane %v2289, %v2316
          %v2318 = vcombine.high %v2296, %v2296
          %v2319 = vcombine.high %v2303, %v2303
          %v2320 = vcombine.high %v2310, %v2310
          %v2321 = vcombine.high %v2317, %v2317
          %v2586 = vunpack.c.l.b16 %v2015
          %v2587 = vunpack.c.h.b16 %v2015
          %v2588 = vunpack.c.l.b16 %v2016
          %v2589 = vunpack.c.h.b16 %v2016
          %v2590 = vunpack.c.l.b16 %v2017
          %v2591 = vunpack.c.h.b16 %v2017
          %v2592 = vunpack.c.l.b16 %v2018
          %v2593 = vunpack.c.h.b16 %v2018
          %v2594 = vunpack.c.l.b16 %v2019
          %v2595 = vunpack.c.h.b16 %v2019
          %v2596 = vunpack.c.l.b16 %v2020
          %v2597 = vunpack.c.h.b16 %v2020
          %v2598 = vunpack.c.l.b16 %v2021
          %v2599 = vunpack.c.h.b16 %v2021
          %v2600 = vunpack.c.l.b16 %v2022
          %v2601 = vunpack.c.h.b16 %v2022
          %v2602 = vunpack.c.l.b16 %v2023
          %v2603 = vunpack.c.h.b16 %v2023
          %v2604 = vunpack.c.l.b16 %v2024
          %v2605 = vunpack.c.h.b16 %v2024
          %v2606 = vunpack.c.l.b16 %v2025
          %v2607 = vunpack.c.h.b16 %v2025
          %v2608 = vunpack.c.l.b16 %v2026
          %v2609 = vunpack.c.h.b16 %v2026
          %v2610 = vunpack.c.l.b16 %v2027
          %v2611 = vunpack.c.h.b16 %v2027
          %v2612 = vunpack.c.l.b16 %v2028
          %v2613 = vunpack.c.h.b16 %v2028
          %v2614 = vunpack.c.l.b16 %v2029
          %v2615 = vunpack.c.h.b16 %v2029
          %v2616 = vunpack.c.l.b16 %v2030
          %v2617 = vunpack.c.h.b16 %v2030
          %v2618 = vunpack.c.l.b16 %v2031
          %v2619 = vunpack.c.h.b16 %v2031
          %v2620 = vunpack.c.l.b16 %v2032
          %v2621 = vunpack.c.h.b16 %v2032
          %v2622 = vunpack.c.l.b16 %v2033
          %v2623 = vunpack.c.h.b16 %v2033
          %v2624 = vunpack.c.l.b16 %v2034
          %v2625 = vunpack.c.h.b16 %v2034
          %v2626 = vunpack.c.l.b16 %v2035
          %v2627 = vunpack.c.h.b16 %v2035
          %v2628 = vunpack.c.l.b16 %v2036
          %v2629 = vunpack.c.h.b16 %v2036
          %v2630 = vunpack.c.l.b16 %v2037
          %v2631 = vunpack.c.h.b16 %v2037
          %v2632 = vunpack.c.l.b16 %v2038
          %v2633 = vunpack.c.h.b16 %v2038
          %v2634 = vunpack.c.l.b16 %v2039
          %v2635 = vunpack.c.h.b16 %v2039
          %v2636 = vunpack.c.l.b16 %v2040
          %v2637 = vunpack.c.h.b16 %v2040
          %v2638 = vunpack.c.l.b16 %v2041
          %v2639 = vunpack.c.h.b16 %v2041
          %v2640 = vunpack.c.l.b16 %v2042
          %v2641 = vunpack.c.h.b16 %v2042
          %v2642 = vunpack.c.l.b16 %v2043
          %v2643 = vunpack.c.h.b16 %v2043
          %v2644 = vunpack.c.l.b16 %v2044
          %v2645 = vunpack.c.h.b16 %v2044
          %v2646 = vunpack.c.l.b16 %v2045
          %v2647 = vunpack.c.h.b16 %v2045
          %v2648 = vunpack.c.l.b16 %v2046
          %v2649 = vunpack.c.h.b16 %v2046
          %v2650 = vunpack.c.l.b16 %v2047
          %v2651 = vunpack.c.h.b16 %v2047
          %v2652 = vunpack.c.l.b16 %v2048
          %v2653 = vunpack.c.h.b16 %v2048
          %v2654 = vunpack.c.l.b16 %v2049
          %v2655 = vunpack.c.h.b16 %v2049
          %v2656 = vunpack.c.l.b16 %v2050
          %v2657 = vunpack.c.h.b16 %v2050
          %v2658 = vunpack.c.l.b16 %v2051
          %v2659 = vunpack.c.h.b16 %v2051
          %v2660 = vunpack.c.l.b16 %v2052
          %v2661 = vunpack.c.h.b16 %v2052
          %v2662 = vunpack.c.l.b16 %v2053
          %v2663 = vunpack.c.h.b16 %v2053
          %v2664 = vunpack.c.l.b16 %v2054
          %v2665 = vunpack.c.h.b16 %v2054
          %v2666 = vunpack.c.l.b16 %v2055
          %v2667 = vunpack.c.h.b16 %v2055
          %v2668 = vunpack.c.l.b16 %v2056
          %v2669 = vunpack.c.h.b16 %v2056
          %v2670 = vunpack.c.l.b16 %v2057
          %v2671 = vunpack.c.h.b16 %v2057
          %v2672 = vunpack.c.l.b16 %v2058
          %v2673 = vunpack.c.h.b16 %v2058
          %v2674 = vunpack.c.l.b16 %v2059
          %v2675 = vunpack.c.h.b16 %v2059
          %v2676 = vunpack.c.l.b16 %v2060
          %v2677 = vunpack.c.h.b16 %v2060
          %v2678 = vunpack.c.l.b16 %v2061
          %v2679 = vunpack.c.h.b16 %v2061
          %v2680 = vunpack.c.l.b16 %v2062
          %v2681 = vunpack.c.h.b16 %v2062
          %v2682 = vunpack.c.l.b16 %v2063
          %v2683 = vunpack.c.h.b16 %v2063
          %v2684 = vunpack.c.l.b16 %v2064
          %v2685 = vunpack.c.h.b16 %v2064
          %v2686 = vunpack.c.l.b16 %v2065
          %v2687 = vunpack.c.h.b16 %v2065
          %v2688 = vunpack.c.l.b16 %v2066
          %v2689 = vunpack.c.h.b16 %v2066
          %v2690 = vunpack.c.l.b16 %v2067
          %v2691 = vunpack.c.h.b16 %v2067
          %v2692 = vunpack.c.l.b16 %v2068
          %v2693 = vunpack.c.h.b16 %v2068
          %v2694 = vunpack.c.l.b16 %v2069
          %v2695 = vunpack.c.h.b16 %v2069
          %v2696 = vunpack.c.l.b16 %v2070
          %v2697 = vunpack.c.h.b16 %v2070
          %v2698 = vunpack.c.l.b16 %v2071
          %v2699 = vunpack.c.h.b16 %v2071
          %v2700 = vunpack.c.l.b16 %v2072
          %v2701 = vunpack.c.h.b16 %v2072
          %v2702 = vunpack.c.l.b16 %v2073
          %v2703 = vunpack.c.h.b16 %v2073
          %v2704 = vunpack.c.l.b16 %v2074
          %v2705 = vunpack.c.h.b16 %v2074
          %v2706 = vunpack.c.l.b16 %v2075
          %v2707 = vunpack.c.h.b16 %v2075
          %v2708 = vunpack.c.l.b16 %v2076
          %v2709 = vunpack.c.h.b16 %v2076
          %v2710 = vunpack.c.l.b16 %v2077
          %v2711 = vunpack.c.h.b16 %v2077
          %v2712 = vunpack.c.l.b16 %v2078
          %v2713 = vunpack.c.h.b16 %v2078
          %v2714 = vunpack.c.l.b16 %v2079
          %v2715 = vunpack.c.h.b16 %v2079
          %v2716 = vunpack.c.l.b16 %v2080
          %v2717 = vunpack.c.h.b16 %v2080
          %v2718 = vunpack.c.l.b16 %v2081
          %v2719 = vunpack.c.h.b16 %v2081
          %v2720 = vunpack.c.l.b16 %v2082
          %v2721 = vunpack.c.h.b16 %v2082
          %v2722 = vunpack.c.l.b16 %v2083
          %v2723 = vunpack.c.h.b16 %v2083
          %v2724 = vunpack.c.l.b16 %v2084
          %v2725 = vunpack.c.h.b16 %v2084
          %v2726 = vunpack.c.l.b16 %v2085
          %v2727 = vunpack.c.h.b16 %v2085
          %v2728 = vunpack.c.l.b16 %v2086
          %v2729 = vunpack.c.h.b16 %v2086
          %v2730 = vunpack.c.l.b16 %v2087
          %v2731 = vunpack.c.h.b16 %v2087
          %v2732 = vunpack.c.l.b16 %v2088
          %v2733 = vunpack.c.h.b16 %v2088
          %v2734 = vunpack.c.l.b16 %v2089
          %v2735 = vunpack.c.h.b16 %v2089
          %v2736 = vunpack.c.l.b16 %v2090
          %v2737 = vunpack.c.h.b16 %v2090
          %v2738 = vunpack.c.l.b16 %v2091
          %v2739 = vunpack.c.h.b16 %v2091
          %v2740 = vunpack.c.l.b16 %v2092
          %v2741 = vunpack.c.h.b16 %v2092
          %v2742 = vunpack.c.l.b16 %v2093
          %v2743 = vunpack.c.h.b16 %v2093
          %v2744 = vunpack.c.l.b16 %v2094
          %v2745 = vunpack.c.h.b16 %v2094
          %v2746 = vunpack.c.l.b16 %v2095
          %v2747 = vunpack.c.h.b16 %v2095
          %v2748 = vunpack.c.l.b16 %v2096
          %v2749 = vunpack.c.h.b16 %v2096
          %v2750 = vunpack.c.l.b16 %v2097
          %v2751 = vunpack.c.h.b16 %v2097
          %v2752 = vunpack.c.l.b16 %v2098
          %v2753 = vunpack.c.h.b16 %v2098
          %v2754 = vunpack.c.l.b16 %v2099
          %v2755 = vunpack.c.h.b16 %v2099
          %v2756 = vunpack.c.l.b16 %v2100
          %v2757 = vunpack.c.h.b16 %v2100
          %v2758 = vunpack.c.l.b16 %v2101
          %v2759 = vunpack.c.h.b16 %v2101
          %v2760 = vunpack.c.l.b16 %v2102
          %v2761 = vunpack.c.h.b16 %v2102
          %v2762 = vunpack.c.l.b16 %v2103
          %v2763 = vunpack.c.h.b16 %v2103
          %v2764 = vunpack.c.l.b16 %v2104
          %v2765 = vunpack.c.h.b16 %v2104
          %v2766 = vunpack.c.l.b16 %v2105
          %v2767 = vunpack.c.h.b16 %v2105
          %v2768 = vunpack.c.l.b16 %v2106
          %v2769 = vunpack.c.h.b16 %v2106
          %v2770 = vunpack.c.l.b16 %v2107
          %v2771 = vunpack.c.h.b16 %v2107
          %v2772 = vunpack.c.l.b16 %v2108
          %v2773 = vunpack.c.h.b16 %v2108
          %v2774 = vunpack.c.l.b16 %v2109
          %v2775 = vunpack.c.h.b16 %v2109
          %v2776 = vunpack.c.l.b16 %v2110
          %v2777 = vunpack.c.h.b16 %v2110
          %v2778 = vunpack.c.l.b16 %v2111
          %v2779 = vunpack.c.h.b16 %v2111
          %v2780 = vunpack.c.l.b16 %v2112
          %v2781 = vunpack.c.h.b16 %v2112
          %v2782 = vunpack.c.l.b16 %v2113
          %v2783 = vunpack.c.h.b16 %v2113
          %v2784 = vunpack.c.l.b16 %v2114
          %v2785 = vunpack.c.h.b16 %v2114
          %v2786 = vunpack.c.l.b16 %v2115
          %v2787 = vunpack.c.h.b16 %v2115
          %v2788 = vunpack.c.l.b16 %v2116
          %v2789 = vunpack.c.h.b16 %v2116
          %v2790 = vunpack.c.l.b16 %v2117
          %v2791 = vunpack.c.h.b16 %v2117
          %v2792 = vunpack.c.l.b16 %v2118
          %v2793 = vunpack.c.h.b16 %v2118
          %v2794 = vunpack.c.l.b16 %v2119
          %v2795 = vunpack.c.h.b16 %v2119
          %v2796 = vunpack.c.l.b16 %v2120
          %v2797 = vunpack.c.h.b16 %v2120
          %v2798 = vunpack.c.l.b16 %v2121
          %v2799 = vunpack.c.h.b16 %v2121
          %v2800 = vunpack.c.l.b16 %v2122
          %v2801 = vunpack.c.h.b16 %v2122
          %v2802 = vunpack.c.l.b16 %v2123
          %v2803 = vunpack.c.h.b16 %v2123
          %v2804 = vunpack.c.l.b16 %v2124
          %v2805 = vunpack.c.h.b16 %v2124
          %v2806 = vunpack.c.l.b16 %v2125
          %v2807 = vunpack.c.h.b16 %v2125
          %v2808 = vunpack.c.l.b16 %v2126
          %v2809 = vunpack.c.h.b16 %v2126
          %v2810 = vunpack.c.l.b16 %v2127
          %v2811 = vunpack.c.h.b16 %v2127
          %v2812 = vunpack.c.l.b16 %v2128
          %v2813 = vunpack.c.h.b16 %v2128
          %v2814 = vunpack.c.l.b16 %v2129
          %v2815 = vunpack.c.h.b16 %v2129
          %v2816 = vunpack.c.l.b16 %v2130
          %v2817 = vunpack.c.h.b16 %v2130
          %v2818 = vunpack.c.l.b16 %v2131
          %v2819 = vunpack.c.h.b16 %v2131
          %v2820 = vunpack.c.l.b16 %v2132
          %v2821 = vunpack.c.h.b16 %v2132
          %v2822 = vunpack.c.l.b16 %v2133
          %v2823 = vunpack.c.h.b16 %v2133
          %v2824 = vunpack.c.l.b16 %v2134
          %v2825 = vunpack.c.h.b16 %v2134
          %v2826 = vunpack.c.l.b16 %v2135
          %v2827 = vunpack.c.h.b16 %v2135
          %v2828 = vunpack.c.l.b16 %v2136
          %v2829 = vunpack.c.h.b16 %v2136
          %v2830 = vunpack.c.l.b16 %v2137
          %v2831 = vunpack.c.h.b16 %v2137
          %v2832 = vunpack.c.l.b16 %v2138
          %v2833 = vunpack.c.h.b16 %v2138
          %v2834 = vunpack.c.l.b16 %v2139
          %v2835 = vunpack.c.h.b16 %v2139
          %v2836 = vunpack.c.l.b16 %v2140
          %v2837 = vunpack.c.h.b16 %v2140
          %v2838 = vunpack.c.l.b16 %v2141
          %v2839 = vunpack.c.h.b16 %v2141
          %v2840 = vunpack.c.l.b16 %v2142
          %v2841 = vunpack.c.h.b16 %v2142
          %v2842 = vunpack.c.l.b16 %v2143
          %v2843 = vunpack.c.h.b16 %v2143
          %v2844 = vunpack.c.l.b16 %v2144
          %v2845 = vunpack.c.h.b16 %v2144
          %v2846 = vunpack.c.l.b16 %v2145
          %v2847 = vunpack.c.h.b16 %v2145
          %v2848 = vunpack.c.l.b16 %v2146
          %v2849 = vunpack.c.h.b16 %v2146
          %v2850 = vunpack.c.l.b16 %v2147
          %v2851 = vunpack.c.h.b16 %v2147
          %v2852 = vunpack.c.l.b16 %v2148
          %v2853 = vunpack.c.h.b16 %v2148
          %v2854 = vunpack.c.l.b16 %v2149
          %v2855 = vunpack.c.h.b16 %v2149
          %v2856 = vunpack.c.l.b16 %v2150
          %v2857 = vunpack.c.h.b16 %v2150
          %v2858 = vunpack.c.l.b16 %v2151
          %v2859 = vunpack.c.h.b16 %v2151
          %v2860 = vunpack.c.l.b16 %v2152
          %v2861 = vunpack.c.h.b16 %v2152
          %v2862 = vunpack.c.l.b16 %v2153
          %v2863 = vunpack.c.h.b16 %v2153
          %v2864 = vunpack.c.l.b16 %v2154
          %v2865 = vunpack.c.h.b16 %v2154
          %v2866 = vunpack.c.l.b16 %v2155
          %v2867 = vunpack.c.h.b16 %v2155
          %v2868 = vunpack.c.l.b16 %v2156
          %v2869 = vunpack.c.h.b16 %v2156
          %v2870 = vunpack.c.l.b16 %v2157
          %v2871 = vunpack.c.h.b16 %v2157
          %v2872 = vunpack.c.l.b16 %v2158
          %v2873 = vunpack.c.h.b16 %v2158
          %v2874 = vunpack.c.l.b16 %v2159
          %v2875 = vunpack.c.h.b16 %v2159
          %v2876 = vunpack.c.l.b16 %v2160
          %v2877 = vunpack.c.h.b16 %v2160
          %v2878 = vunpack.c.l.b16 %v2161
          %v2879 = vunpack.c.h.b16 %v2161
          %v2880 = vunpack.c.l.b16 %v2162
          %v2881 = vunpack.c.h.b16 %v2162
          %v2882 = vunpack.c.l.b16 %v2163
          %v2883 = vunpack.c.h.b16 %v2163
          %v2884 = vunpack.c.l.b16 %v2164
          %v2885 = vunpack.c.h.b16 %v2164
          %v2886 = vunpack.c.l.b16 %v2165
          %v2887 = vunpack.c.h.b16 %v2165
          %v2888 = vunpack.c.l.b16 %v2166
          %v2889 = vunpack.c.h.b16 %v2166
          %v2890 = vunpack.c.l.b16 %v2167
          %v2891 = vunpack.c.h.b16 %v2167
          %v2892 = vunpack.c.l.b16 %v2168
          %v2893 = vunpack.c.h.b16 %v2168
          %v2894 = vunpack.c.l.b16 %v2169
          %v2895 = vunpack.c.h.b16 %v2169
          %v2896 = vunpack.c.l.b16 %v2170
          %v2897 = vunpack.c.h.b16 %v2170
          %v2898 = vunpack.c.l.b16 %v2171
          %v2899 = vunpack.c.h.b16 %v2171
          %v2900 = vunpack.c.l.b16 %v2172
          %v2901 = vunpack.c.h.b16 %v2172
          %v2902 = vunpack.c.l.b16 %v2173
          %v2903 = vunpack.c.h.b16 %v2173
          %v2904 = vunpack.c.l.b16 %v2174
          %v2905 = vunpack.c.h.b16 %v2174
          %v2906 = vunpack.c.l.b16 %v2175
          %v2907 = vunpack.c.h.b16 %v2175
          %v2908 = vunpack.c.l.b16 %v2176
          %v2909 = vunpack.c.h.b16 %v2176
          %v2910 = vunpack.c.l.b16 %v2177
          %v2911 = vunpack.c.h.b16 %v2177
          %v2912 = vunpack.c.l.b16 %v2178
          %v2913 = vunpack.c.h.b16 %v2178
          %v2914 = vunpack.c.l.b16 %v2179
          %v2915 = vunpack.c.h.b16 %v2179
          %v2916 = vunpack.c.l.b16 %v2180
          %v2917 = vunpack.c.h.b16 %v2180
          %v2918 = vunpack.c.l.b16 %v2181
          %v2919 = vunpack.c.h.b16 %v2181
          %v2920 = vunpack.c.l.b16 %v2182
          %v2921 = vunpack.c.h.b16 %v2182
          %v2922 = vunpack.c.l.b16 %v2183
          %v2923 = vunpack.c.h.b16 %v2183
          %v2924 = vunpack.c.l.b16 %v2184
          %v2925 = vunpack.c.h.b16 %v2184
          %v2926 = vunpack.c.l.b16 %v2185
          %v2927 = vunpack.c.h.b16 %v2185
          %v2928 = vunpack.c.l.b16 %v2186
          %v2929 = vunpack.c.h.b16 %v2186
          %v2930 = vunpack.c.l.b16 %v2187
          %v2931 = vunpack.c.h.b16 %v2187
          %v2932 = vunpack.c.l.b16 %v2188
          %v2933 = vunpack.c.h.b16 %v2188
          %v2934 = vunpack.c.l.b16 %v2189
          %v2935 = vunpack.c.h.b16 %v2189
          %v2936 = vunpack.c.l.b16 %v2190
          %v2937 = vunpack.c.h.b16 %v2190
          %v2938 = vunpack.c.l.b16 %v2191
          %v2939 = vunpack.c.h.b16 %v2191
          %v2940 = vunpack.c.l.b16 %v2192
          %v2941 = vunpack.c.h.b16 %v2192
          %v2942 = vunpack.c.l.b16 %v2193
          %v2943 = vunpack.c.h.b16 %v2193
          %v2944 = vunpack.c.l.b16 %v2194
          %v2945 = vunpack.c.h.b16 %v2194
          %v2946 = vunpack.c.l.b16 %v2195
          %v2947 = vunpack.c.h.b16 %v2195
          %v2948 = vunpack.c.l.b16 %v2196
          %v2949 = vunpack.c.h.b16 %v2196
          %v2950 = vunpack.c.l.b16 %v2197
          %v2951 = vunpack.c.h.b16 %v2197
          %v2952 = vunpack.c.l.b16 %v2198
          %v2953 = vunpack.c.h.b16 %v2198
          %v2954 = vunpack.c.l.b16 %v2199
          %v2955 = vunpack.c.h.b16 %v2199
          %v2956 = vunpack.c.l.b16 %v2200
          %v2957 = vunpack.c.h.b16 %v2200
          %v2958 = vunpack.c.l.b16 %v2201
          %v2959 = vunpack.c.h.b16 %v2201
          %v2960 = vunpack.c.l.b16 %v2202
          %v2961 = vunpack.c.h.b16 %v2202
          %v2962 = vunpack.c.l.b16 %v2203
          %v2963 = vunpack.c.h.b16 %v2203
          %v2964 = vunpack.c.l.b16 %v2204
          %v2965 = vunpack.c.h.b16 %v2204
          %v2966 = vunpack.c.l.b16 %v2205
          %v2967 = vunpack.c.h.b16 %v2205
          %v2968 = vunpack.c.l.b16 %v2206
          %v2969 = vunpack.c.h.b16 %v2206
          %v2970 = vunpack.c.l.b16 %v2207
          %v2971 = vunpack.c.h.b16 %v2207
          %v2972 = vunpack.c.l.b16 %v2208
          %v2973 = vunpack.c.h.b16 %v2208
          %v2974 = vunpack.c.l.b16 %v2209
          %v2975 = vunpack.c.h.b16 %v2209
          %v2976 = vunpack.c.l.b16 %v2210
          %v2977 = vunpack.c.h.b16 %v2210
          %v2978 = vunpack.c.l.b16 %v2211
          %v2979 = vunpack.c.h.b16 %v2211
          %v2980 = vunpack.c.l.b16 %v2212
          %v2981 = vunpack.c.h.b16 %v2212
          %v2982 = vunpack.c.l.b16 %v2213
          %v2983 = vunpack.c.h.b16 %v2213
          %v2984 = vunpack.c.l.b16 %v2214
          %v2985 = vunpack.c.h.b16 %v2214
          %v2986 = vunpack.c.l.b16 %v2215
          %v2987 = vunpack.c.h.b16 %v2215
          %v2988 = vunpack.c.l.b16 %v2216
          %v2989 = vunpack.c.h.b16 %v2216
          %v2990 = vunpack.c.l.b16 %v2217
          %v2991 = vunpack.c.h.b16 %v2217
          %v2992 = vunpack.c.l.b16 %v2218
          %v2993 = vunpack.c.h.b16 %v2218
          %v2994 = vunpack.c.l.b16 %v2219
          %v2995 = vunpack.c.h.b16 %v2219
          %v2996 = vunpack.c.l.b16 %v2220
          %v2997 = vunpack.c.h.b16 %v2220
          %v2998 = vunpack.c.l.b16 %v2221
          %v2999 = vunpack.c.h.b16 %v2221
          %v3000 = vunpack.c.l.b16 %v2222
          %v3001 = vunpack.c.h.b16 %v2222
          %v3002 = vunpack.c.l.b16 %v2223
          %v3003 = vunpack.c.h.b16 %v2223
          %v3004 = vunpack.c.l.b16 %v2224
          %v3005 = vunpack.c.h.b16 %v2224
          %v3006 = vunpack.c.l.b16 %v2225
          %v3007 = vunpack.c.h.b16 %v2225
          %v3008 = vunpack.c.l.b16 %v2226
          %v3009 = vunpack.c.h.b16 %v2226
          %v3010 = vunpack.c.l.b16 %v2227
          %v3011 = vunpack.c.h.b16 %v2227
          %v3012 = vunpack.c.l.b16 %v2228
          %v3013 = vunpack.c.h.b16 %v2228
          %v3014 = vunpack.c.l.b16 %v2229
          %v3015 = vunpack.c.h.b16 %v2229
          %v3016 = vunpack.c.l.b16 %v2230
          %v3017 = vunpack.c.h.b16 %v2230
          %v3018 = vunpack.c.l.b16 %v2231
          %v3019 = vunpack.c.h.b16 %v2231
          %v3020 = vunpack.c.l.b16 %v2232
          %v3021 = vunpack.c.h.b16 %v2232
          %v3022 = vunpack.c.l.b16 %v2233
          %v3023 = vunpack.c.h.b16 %v2233
          %v3024 = vunpack.c.l.b16 %v2234
          %v3025 = vunpack.c.h.b16 %v2234
          %v3026 = vunpack.c.l.b16 %v2235
          %v3027 = vunpack.c.h.b16 %v2235
          %v3028 = vunpack.c.l.b16 %v2236
          %v3029 = vunpack.c.h.b16 %v2236
          %v3030 = vunpack.c.l.b16 %v2237
          %v3031 = vunpack.c.h.b16 %v2237
          %v3032 = vunpack.c.l.b16 %v2238
          %v3033 = vunpack.c.h.b16 %v2238
          %v3034 = vunpack.c.l.b16 %v2239
          %v3035 = vunpack.c.h.b16 %v2239
          %v3036 = vunpack.c.l.b16 %v2240
          %v3037 = vunpack.c.h.b16 %v2240
          %v3038 = vunpack.c.l.b16 %v2241
          %v3039 = vunpack.c.h.b16 %v2241
          %v3040 = vunpack.c.l.b16 %v2242
          %v3041 = vunpack.c.h.b16 %v2242
          %v3042 = vunpack.c.l.b16 %v2243
          %v3043 = vunpack.c.h.b16 %v2243
          %v3044 = vunpack.c.l.b16 %v2244
          %v3045 = vunpack.c.h.b16 %v2244
          %v3046 = vunpack.c.l.b16 %v2245
          %v3047 = vunpack.c.h.b16 %v2245
          %v3048 = vunpack.c.l.b16 %v2246
          %v3049 = vunpack.c.h.b16 %v2246
          %v3050 = vunpack.c.l.b16 %v2247
          %v3051 = vunpack.c.h.b16 %v2247
          %v3052 = vunpack.c.l.b16 %v2248
          %v3053 = vunpack.c.h.b16 %v2248
          %v3054 = vunpack.c.l.b16 %v2249
          %v3055 = vunpack.c.h.b16 %v2249
          %v3056 = vunpack.c.l.b16 %v2250
          %v3057 = vunpack.c.h.b16 %v2250
          %v3058 = vunpack.c.l.b16 %v2251
          %v3059 = vunpack.c.h.b16 %v2251
          %v3060 = vunpack.c.l.b16 %v2252
          %v3061 = vunpack.c.h.b16 %v2252
          %v3062 = vunpack.c.l.b16 %v2253
          %v3063 = vunpack.c.h.b16 %v2253
          %v3064 = vunpack.c.l.b16 %v2254
          %v3065 = vunpack.c.h.b16 %v2254
          %v3066 = vunpack.c.l.b16 %v2255
          %v3067 = vunpack.c.h.b16 %v2255
          %v3068 = vunpack.c.l.b16 %v2256
          %v3069 = vunpack.c.h.b16 %v2256
          %v3070 = vunpack.c.l.b16 %v2257
          %v3071 = vunpack.c.h.b16 %v2257
          %v3072 = vunpack.c.l.b16 %v2258
          %v3073 = vunpack.c.h.b16 %v2258
          %v3074 = vunpack.c.l.b16 %v2259
          %v3075 = vunpack.c.h.b16 %v2259
          %v3076 = vunpack.c.l.b16 %v2260
          %v3077 = vunpack.c.h.b16 %v2260
          %v3078 = vunpack.c.l.b16 %v2261
          %v3079 = vunpack.c.h.b16 %v2261
          %v3080 = vunpack.c.l.b16 %v2262
          %v3081 = vunpack.c.h.b16 %v2262
          %v3082 = vunpack.c.l.b16 %v2263
          %v3083 = vunpack.c.h.b16 %v2263
          %v3084 = vunpack.c.l.b16 %v2264
          %v3085 = vunpack.c.h.b16 %v2264
          %v3086 = vunpack.c.l.b16 %v2265
          %v3087 = vunpack.c.h.b16 %v2265
          %v3088 = vunpack.c.l.b16 %v2266
          %v3089 = vunpack.c.h.b16 %v2266
          %v3090 = vunpack.c.l.b16 %v2267
          %v3091 = vunpack.c.h.b16 %v2267
          %v3092 = vunpack.c.l.b16 %v2268
          %v3093 = vunpack.c.h.b16 %v2268
          %v3094 = vunpack.c.l.b16 %v2269
          %v3095 = vunpack.c.h.b16 %v2269
          %v3096 = vunpack.c.l.b16 %v2270
          %v3097 = vunpack.c.h.b16 %v2270
          %v3098 = vpack.c.b16 %v2590, %v2586
          %v3099 = vpack.c.b16 %v2591, %v2587
          %v3100 = vpack.c.b16 %v2592, %v2588
          %v3101 = vpack.c.b16 %v2593, %v2589
          %v3102 = vpack.c.b16 %v2598, %v2594
          %v3103 = vpack.c.b16 %v2599, %v2595
          %v3104 = vpack.c.b16 %v2600, %v2596
          %v3105 = vpack.c.b16 %v2601, %v2597
          %v3106 = vpack.c.b16 %v2606, %v2602
          %v3107 = vpack.c.b16 %v2607, %v2603
          %v3108 = vpack.c.b16 %v2608, %v2604
          %v3109 = vpack.c.b16 %v2609, %v2605
          %v3110 = vpack.c.b16 %v2614, %v2610
          %v3111 = vpack.c.b16 %v2615, %v2611
          %v3112 = vpack.c.b16 %v2616, %v2612
          %v3113 = vpack.c.b16 %v2617, %v2613
          %v3114 = vpack.c.b16 %v2622, %v2618
          %v3115 = vpack.c.b16 %v2623, %v2619
          %v3116 = vpack.c.b16 %v2624, %v2620
          %v3117 = vpack.c.b16 %v2625, %v2621
          %v3118 = vpack.c.b16 %v2630, %v2626
          %v3119 = vpack.c.b16 %v2631, %v2627
          %v3120 = vpack.c.b16 %v2632, %v2628
          %v3121 = vpack.c.b16 %v2633, %v2629
          %v3122 = vpack.c.b16 %v2638, %v2634
          %v3123 = vpack.c.b16 %v2639, %v2635
          %v3124 = vpack.c.b16 %v2640, %v2636
          %v3125 = vpack.c.b16 %v2641, %v2637
          %v3126 = vpack.c.b16 %v2646, %v2642
          %v3127 = vpack.c.b16 %v2647, %v2643
          %v3128 = vpack.c.b16 %v2648, %v2644
          %v3129 = vpack.c.b16 %v2649, %v2645
          %v3130 = vpack.c.b16 %v2654, %v2650
          %v3131 = vpack.c.b16 %v2655, %v2651
          %v3132 = vpack.c.b16 %v2656, %v2652
          %v3133 = vpack.c.b16 %v2657, %v2653
          %v3134 = vpack.c.b16 %v2662, %v2658
          %v3135 = vpack.c.b16 %v2663, %v2659
          %v3136 = vpack.c.b16 %v2664, %v2660
          %v3137 = vpack.c.b16 %v2665, %v2661
          %v3138 = vpack.c.b16 %v2670, %v2666
          %v3139 = vpack.c.b16 %v2671, %v2667
          %v3140 = vpack.c.b16 %v2672, %v2668
          %v3141 = vpack.c.b16 %v2673, %v2669
          %v3142 = vpack.c.b16 %v2678, %v2674
          %v3143 = vpack.c.b16 %v2679, %v2675
          %v3144 = vpack.c.b16 %v2680, %v2676
          %v3145 = vpack.c.b16 %v2681, %v2677
          %v3146 = vpack.c.b16 %v2686, %v2682
          %v3147 = vpack.c.b16 %v2687, %v2683
          %v3148 = vpack.c.b16 %v2688, %v2684
          %v3149 = vpack.c.b16 %v2689, %v2685
          %v3150 = vpack.c.b16 %v2694, %v2690
          %v3151 = vpack.c.b16 %v2695, %v2691
          %v3152 = vpack.c.b16 %v2696, %v2692
          %v3153 = vpack.c.b16 %v2697, %v2693
          %v3154 = vpack.c.b16 %v2702, %v2698
          %v3155 = vpack.c.b16 %v2703, %v2699
          %v3156 = vpack.c.b16 %v2704, %v2700
          %v3157 = vpack.c.b16 %v2705, %v2701
          %v3158 = vpack.c.b16 %v2710, %v2706
          %v3159 = vpack.c.b16 %v2711, %v2707
          %v3160 = vpack.c.b16 %v2712, %v2708
          %v3161 = vpack.c.b16 %v2713, %v2709
          %v3162 = vpack.c.b16 %v2718, %v2714
          %v3163 = vpack.c.b16 %v2719, %v2715
          %v3164 = vpack.c.b16 %v2720, %v2716
          %v3165 = vpack.c.b16 %v2721, %v2717
          %v3166 = vpack.c.b16 %v2726, %v2722
          %v3167 = vpack.c.b16 %v2727, %v2723
          %v3168 = vpack.c.b16 %v2728, %v2724
          %v3169 = vpack.c.b16 %v2729, %v2725
          %v3170 = vpack.c.b16 %v2734, %v2730
          %v3171 = vpack.c.b16 %v2735, %v2731
          %v3172 = vpack.c.b16 %v2736, %v2732
          %v3173 = vpack.c.b16 %v2737, %v2733
          %v3174 = vpack.c.b16 %v2742, %v2738
          %v3175 = vpack.c.b16 %v2743, %v2739
          %v3176 = vpack.c.b16 %v2744, %v2740
          %v3177 = vpack.c.b16 %v2745, %v2741
          %v3178 = vpack.c.b16 %v2750, %v2746
          %v3179 = vpack.c.b16 %v2751, %v2747
          %v3180 = vpack.c.b16 %v2752, %v2748
          %v3181 = vpack.c.b16 %v2753, %v2749
          %v3182 = vpack.c.b16 %v2758, %v2754
          %v3183 = vpack.c.b16 %v2759, %v2755
          %v3184 = vpack.c.b16 %v2760, %v2756
          %v3185 = vpack.c.b16 %v2761, %v2757
          %v3186 = vpack.c.b16 %v2766, %v2762
          %v3187 = vpack.c.b16 %v2767, %v2763
          %v3188 = vpack.c.b16 %v2768, %v2764
          %v3189 = vpack.c.b16 %v2769, %v2765
          %v3190 = vpack.c.b16 %v2774, %v2770
          %v3191 = vpack.c.b16 %v2775, %v2771
          %v3192 = vpack.c.b16 %v2776, %v2772
          %v3193 = vpack.c.b16 %v2777, %v2773
          %v3194 = vpack.c.b16 %v2782, %v2778
          %v3195 = vpack.c.b16 %v2783, %v2779
          %v3196 = vpack.c.b16 %v2784, %v2780
          %v3197 = vpack.c.b16 %v2785, %v2781
          %v3198 = vpack.c.b16 %v2790, %v2786
          %v3199 = vpack.c.b16 %v2791, %v2787
          %v3200 = vpack.c.b16 %v2792, %v2788
          %v3201 = vpack.c.b16 %v2793, %v2789
          %v3202 = vpack.c.b16 %v2798, %v2794
          %v3203 = vpack.c.b16 %v2799, %v2795
          %v3204 = vpack.c.b16 %v2800, %v2796
          %v3205 = vpack.c.b16 %v2801, %v2797
          %v3206 = vpack.c.b16 %v2806, %v2802
          %v3207 = vpack.c.b16 %v2807, %v2803
          %v3208 = vpack.c.b16 %v2808, %v2804
          %v3209 = vpack.c.b16 %v2809, %v2805
          %v3210 = vpack.c.b16 %v2814, %v2810
          %v3211 = vpack.c.b16 %v2815, %v2811
          %v3212 = vpack.c.b16 %v2816, %v2812
          %v3213 = vpack.c.b16 %v2817, %v2813
          %v3214 = vpack.c.b16 %v2822, %v2818
          %v3215 = vpack.c.b16 %v2823, %v2819
          %v3216 = vpack.c.b16 %v2824, %v2820
          %v3217 = vpack.c.b16 %v2825, %v2821
          %v3218 = vpack.c.b16 %v2830, %v2826
          %v3219 = vpack.c.b16 %v2831, %v2827
          %v3220 = vpack.c.b16 %v2832, %v2828
          %v3221 = vpack.c.b16 %v2833, %v2829
          %v3222 = vpack.c.b16 %v2838, %v2834
          %v3223 = vpack.c.b16 %v2839, %v2835
          %v3224 = vpack.c.b16 %v2840, %v2836
          %v3225 = vpack.c.b16 %v2841, %v2837
          %v3226 = vpack.c.b16 %v2846, %v2842
          %v3227 = vpack.c.b16 %v2847, %v2843
          %v3228 = vpack.c.b16 %v2848, %v2844
          %v3229 = vpack.c.b16 %v2849, %v2845
          %v3230 = vpack.c.b16 %v2854, %v2850
          %v3231 = vpack.c.b16 %v2855, %v2851
          %v3232 = vpack.c.b16 %v2856, %v2852
          %v3233 = vpack.c.b16 %v2857, %v2853
          %v3234 = vpack.c.b16 %v2862, %v2858
          %v3235 = vpack.c.b16 %v2863, %v2859
          %v3236 = vpack.c.b16 %v2864, %v2860
          %v3237 = vpack.c.b16 %v2865, %v2861
          %v3238 = vpack.c.b16 %v2870, %v2866
          %v3239 = vpack.c.b16 %v2871, %v2867
          %v3240 = vpack.c.b16 %v2872, %v2868
          %v3241 = vpack.c.b16 %v2873, %v2869
          %v3242 = vpack.c.b16 %v2878, %v2874
          %v3243 = vpack.c.b16 %v2879, %v2875
          %v3244 = vpack.c.b16 %v2880, %v2876
          %v3245 = vpack.c.b16 %v2881, %v2877
          %v3246 = vpack.c.b16 %v2886, %v2882
          %v3247 = vpack.c.b16 %v2887, %v2883
          %v3248 = vpack.c.b16 %v2888, %v2884
          %v3249 = vpack.c.b16 %v2889, %v2885
          %v3250 = vpack.c.b16 %v2894, %v2890
          %v3251 = vpack.c.b16 %v2895, %v2891
          %v3252 = vpack.c.b16 %v2896, %v2892
          %v3253 = vpack.c.b16 %v2897, %v2893
          %v3254 = vpack.c.b16 %v2902, %v2898
          %v3255 = vpack.c.b16 %v2903, %v2899
          %v3256 = vpack.c.b16 %v2904, %v2900
          %v3257 = vpack.c.b16 %v2905, %v2901
          %v3258 = vpack.c.b16 %v2910, %v2906
          %v3259 = vpack.c.b16 %v2911, %v2907
          %v3260 = vpack.c.b16 %v2912, %v2908
          %v3261 = vpack.c.b16 %v2913, %v2909
          %v3262 = vpack.c.b16 %v2918, %v2914
          %v3263 = vpack.c.b16 %v2919, %v2915
          %v3264 = vpack.c.b16 %v2920, %v2916
          %v3265 = vpack.c.b16 %v2921, %v2917
          %v3266 = vpack.c.b16 %v2926, %v2922
          %v3267 = vpack.c.b16 %v2927, %v2923
          %v3268 = vpack.c.b16 %v2928, %v2924
          %v3269 = vpack.c.b16 %v2929, %v2925
          %v3270 = vpack.c.b16 %v2934, %v2930
          %v3271 = vpack.c.b16 %v2935, %v2931
          %v3272 = vpack.c.b16 %v2936, %v2932
          %v3273 = vpack.c.b16 %v2937, %v2933
          %v3274 = vpack.c.b16 %v2942, %v2938
          %v3275 = vpack.c.b16 %v2943, %v2939
          %v3276 = vpack.c.b16 %v2944, %v2940
          %v3277 = vpack.c.b16 %v2945, %v2941
          %v3278 = vpack.c.b16 %v2950, %v2946
          %v3279 = vpack.c.b16 %v2951, %v2947
          %v3280 = vpack.c.b16 %v2952, %v2948
          %v3281 = vpack.c.b16 %v2953, %v2949
          %v3282 = vpack.c.b16 %v2958, %v2954
          %v3283 = vpack.c.b16 %v2959, %v2955
          %v3284 = vpack.c.b16 %v2960, %v2956
          %v3285 = vpack.c.b16 %v2961, %v2957
          %v3286 = vpack.c.b16 %v2966, %v2962
          %v3287 = vpack.c.b16 %v2967, %v2963
          %v3288 = vpack.c.b16 %v2968, %v2964
          %v3289 = vpack.c.b16 %v2969, %v2965
          %v3290 = vpack.c.b16 %v2974, %v2970
          %v3291 = vpack.c.b16 %v2975, %v2971
          %v3292 = vpack.c.b16 %v2976, %v2972
          %v3293 = vpack.c.b16 %v2977, %v2973
          %v3294 = vpack.c.b16 %v2982, %v2978
          %v3295 = vpack.c.b16 %v2983, %v2979
          %v3296 = vpack.c.b16 %v2984, %v2980
          %v3297 = vpack.c.b16 %v2985, %v2981
          %v3298 = vpack.c.b16 %v2990, %v2986
          %v3299 = vpack.c.b16 %v2991, %v2987
          %v3300 = vpack.c.b16 %v2992, %v2988
          %v3301 = vpack.c.b16 %v2993, %v2989
          %v3302 = vpack.c.b16 %v2998, %v2994
          %v3303 = vpack.c.b16 %v2999, %v2995
          %v3304 = vpack.c.b16 %v3000, %v2996
          %v3305 = vpack.c.b16 %v3001, %v2997
          %v3306 = vpack.c.b16 %v3006, %v3002
          %v3307 = vpack.c.b16 %v3007, %v3003
          %v3308 = vpack.c.b16 %v3008, %v3004
          %v3309 = vpack.c.b16 %v3009, %v3005
          %v3310 = vpack.c.b16 %v3014, %v3010
          %v3311 = vpack.c.b16 %v3015, %v3011
          %v3312 = vpack.c.b16 %v3016, %v3012
          %v3313 = vpack.c.b16 %v3017, %v3013
          %v3314 = vpack.c.b16 %v3022, %v3018
          %v3315 = vpack.c.b16 %v3023, %v3019
          %v3316 = vpack.c.b16 %v3024, %v3020
          %v3317 = vpack.c.b16 %v3025, %v3021
          %v3318 = vpack.c.b16 %v3030, %v3026
          %v3319 = vpack.c.b16 %v3031, %v3027
          %v3320 = vpack.c.b16 %v3032, %v3028
          %v3321 = vpack.c.b16 %v3033, %v3029
          %v3322 = vpack.c.b16 %v3038, %v3034
          %v3323 = vpack.c.b16 %v3039, %v3035
          %v3324 = vpack.c.b16 %v3040, %v3036
          %v3325 = vpack.c.b16 %v3041, %v3037
          %v3326 = vpack.c.b16 %v3046, %v3042
          %v3327 = vpack.c.b16 %v3047, %v3043
          %v3328 = vpack.c.b16 %v3048, %v3044
          %v3329 = vpack.c.b16 %v3049, %v3045
          %v3330 = vpack.c.b16 %v3054, %v3050
          %v3331 = vpack.c.b16 %v3055, %v3051
          %v3332 = vpack.c.b16 %v3056, %v3052
          %v3333 = vpack.c.b16 %v3057, %v3053
          %v3334 = vpack.c.b16 %v3062, %v3058
          %v3335 = vpack.c.b16 %v3063, %v3059
          %v3336 = vpack.c.b16 %v3064, %v3060
          %v3337 = vpack.c.b16 %v3065, %v3061
          %v3338 = vpack.c.b16 %v3070, %v3066
          %v3339 = vpack.c.b16 %v3071, %v3067
          %v3340 = vpack.c.b16 %v3072, %v3068
          %v3341 = vpack.c.b16 %v3073, %v3069
          %v3342 = vpack.c.b16 %v3078, %v3074
          %v3343 = vpack.c.b16 %v3079, %v3075
          %v3344 = vpack.c.b16 %v3080, %v3076
          %v3345 = vpack.c.b16 %v3081, %v3077
          %v3346 = vpack.c.b16 %v3086, %v3082
          %v3347 = vpack.c.b16 %v3087, %v3083
          %v3348 = vpack.c.b16 %v3088, %v3084
          %v3349 = vpack.c.b16 %v3089, %v3085
          %v3350 = vpack.c.b16 %v3094, %v3090
          %v3351 = vpack.c.b16 %v3095, %v3091
          %v3352 = vpack.c.b16 %v3096, %v3092
          %v3353 = vpack.c.b16 %v3097, %v3093
          %v3611 = vlaneseq
          %v3612 = vshrl.u32 %v3611, 7
          %v3613 = vsub.s32 0, %v3612
          %v3614 = vrot.slane %v2271, %v3613
          %v3615 = vlaneseq
          %v3616 = vshrl.u32 %v3615, 7
          %v3617 = vsub.s32 1, %v3616
          %v3618 = vrot.slane %v2271, %v3617
          %v3619 = vlaneseq
          %v3620 = vshrl.u32 %v3619, 7
          %v3621 = vsub.s32 2, %v3620
          %v3622 = vrot.slane %v2271, %v3621
          %v3623 = vlaneseq
          %v3624 = vshrl.u32 %v3623, 7
          %v3625 = vsub.s32 3, %v3624
          %v3626 = vrot.slane %v2271, %v3625
          %3631 = vmatprep.subr.bf16.mxu0 %v3127
          %3632 = vmatpush1.bf16.msra.mxu0 %v3126
          %3633 = vmatprep.subr.bf16.mxu0 %v3123
          %3634 = vmatpush1.bf16.msra.mxu0 %v3122
          %3635 = vmatprep.subr.bf16.mxu0 %v3119
          %3636 = vmatpush1.bf16.msra.mxu0 %v3118
          %3637 = vmatprep.subr.bf16.mxu0 %v3115
          %3638 = vmatpush1.bf16.msra.mxu0 %v3114
          %3639 = vmatprep.subr.bf16.mxu0 %v3111
          %3640 = vmatpush1.bf16.msra.mxu0 %v3110
          %3641 = vmatprep.subr.bf16.mxu0 %v3107
          %3642 = vmatpush1.bf16.msra.mxu0 %v3106
          %3643 = vmatprep.subr.bf16.mxu0 %v3103
          %3644 = vmatpush1.bf16.msra.mxu0 %v3102
          %3645 = vmatprep.subr.bf16.mxu0 %v3099
          %3646 = vmatpush1.bf16.msra.mxu0 %v3098
          %3647 = vmatprep.subr.bf16.mxu0 %v3159
          %3648 = vmatpush2.bf16.msra.mxu0 %v3158
          %3649 = vmatprep.subr.bf16.mxu0 %v3155
          %3650 = vmatpush2.bf16.msra.mxu0 %v3154
          %3651 = vmatprep.subr.bf16.mxu0 %v3151
          %3652 = vmatpush2.bf16.msra.mxu0 %v3150
          %3653 = vmatprep.subr.bf16.mxu0 %v3147
          %3654 = vmatpush2.bf16.msra.mxu0 %v3146
          %3655 = vmatprep.subr.bf16.mxu0 %v3143
          %3656 = vmatpush2.bf16.msra.mxu0 %v3142
          %3657 = vmatprep.subr.bf16.mxu0 %v3139
          %3658 = vmatpush2.bf16.msra.mxu0 %v3138
          %3659 = vmatprep.subr.bf16.mxu0 %v3135
          %3660 = vmatpush2.bf16.msra.mxu0 %v3134
          %3661 = vmatprep.subr.bf16.mxu0 %v3131
          %3662 = vmatpush2.bf16.msra.mxu0 %v3130
          %3663 = vmatprep.mubr.bf16.mxu0 %v2310
          %3664 = vmatmul.mubr.bf16.gmra.mxu0 %v2296
          %v3665 = vpop.f32.mrf.mxu0
          %v3666 = vadd.f32 %v3614, %v3665
          %v3667 = vpop.f32.mrf.mxu0
          %v3668 = vadd.f32 %v3618, %v3667
          %v3669 = vpop.f32.mrf.mxu0
          %v3670 = vpop.f32.mrf.mxu0
          %3671 = vdwg.mxu0
          %3672 = vmatprep.subr.bf16.mxu0 %v3191
          %3673 = vmatpush1.bf16.msra.mxu0 %v3190
          %3674 = vmatprep.subr.bf16.mxu0 %v3187
          %3675 = vmatpush1.bf16.msra.mxu0 %v3186
          %3676 = vmatprep.subr.bf16.mxu0 %v3183
          %3677 = vmatpush1.bf16.msra.mxu0 %v3182
          %3678 = vmatprep.subr.bf16.mxu0 %v3179
          %3679 = vmatpush1.bf16.msra.mxu0 %v3178
          %3680 = vmatprep.subr.bf16.mxu0 %v3175
          %3681 = vmatpush1.bf16.msra.mxu0 %v3174
          %3682 = vmatprep.subr.bf16.mxu0 %v3171
          %3683 = vmatpush1.bf16.msra.mxu0 %v3170
          %3684 = vmatprep.subr.bf16.mxu0 %v3167
          %3685 = vmatpush1.bf16.msra.mxu0 %v3166
          %3686 = vmatprep.subr.bf16.mxu0 %v3163
          %3687 = vmatpush1.bf16.msra.mxu0 %v3162
          %3688 = vmatprep.subr.bf16.mxu0 %v3223
          %3689 = vmatpush2.bf16.msra.mxu0 %v3222
          %3690 = vmatprep.subr.bf16.mxu0 %v3219
          %3691 = vmatpush2.bf16.msra.mxu0 %v3218
          %3692 = vmatprep.subr.bf16.mxu0 %v3215
          %3693 = vmatpush2.bf16.msra.mxu0 %v3214
          %3694 = vmatprep.subr.bf16.mxu0 %v3211
          %3695 = vmatpush2.bf16.msra.mxu0 %v3210
          %3696 = vmatprep.subr.bf16.mxu0 %v3207
          %3697 = vmatpush2.bf16.msra.mxu0 %v3206
          %3698 = vmatprep.subr.bf16.mxu0 %v3203
          %3699 = vmatpush2.bf16.msra.mxu0 %v3202
          %3700 = vmatprep.subr.bf16.mxu0 %v3199
          %3701 = vmatpush2.bf16.msra.mxu0 %v3198
          %3702 = vmatprep.subr.bf16.mxu0 %v3195
          %3703 = vmatpush2.bf16.msra.mxu0 %v3194
          %3704 = vmatprep.mubr.bf16.mxu0 %v2320
          %3705 = vmatmul.mubr.bf16.gmra.mxu0 %v2318
          %v3706 = vpop.f32.mrf.mxu0
          %v3707 = vadd.f32 %v3666, %v3706
          %v3708 = vpop.f32.mrf.mxu0
          %v3709 = vadd.f32 %v3668, %v3708
          %v3710 = vpop.f32.mrf.mxu0
          %v3711 = vpop.f32.mrf.mxu0
          %3712 = vdwg.mxu0
          %3713 = vmatprep.subr.bf16.mxu0 %v3255
          %3714 = vmatpush1.bf16.msra.mxu0 %v3254
          %3715 = vmatprep.subr.bf16.mxu0 %v3251
          %3716 = vmatpush1.bf16.msra.mxu0 %v3250
          %3717 = vmatprep.subr.bf16.mxu0 %v3247
          %3718 = vmatpush1.bf16.msra.mxu0 %v3246
          %3719 = vmatprep.subr.bf16.mxu0 %v3243
          %3720 = vmatpush1.bf16.msra.mxu0 %v3242
          %3721 = vmatprep.subr.bf16.mxu0 %v3239
          %3722 = vmatpush1.bf16.msra.mxu0 %v3238
          %3723 = vmatprep.subr.bf16.mxu0 %v3235
          %3724 = vmatpush1.bf16.msra.mxu0 %v3234
          %3725 = vmatprep.subr.bf16.mxu0 %v3231
          %3726 = vmatpush1.bf16.msra.mxu0 %v3230
          %3727 = vmatprep.subr.bf16.mxu0 %v3227
          %3728 = vmatpush1.bf16.msra.mxu0 %v3226
          %3729 = vmatprep.subr.bf16.mxu0 %v3287
          %3730 = vmatpush2.bf16.msra.mxu0 %v3286
          %3731 = vmatprep.subr.bf16.mxu0 %v3283
          %3732 = vmatpush2.bf16.msra.mxu0 %v3282
          %3733 = vmatprep.subr.bf16.mxu0 %v3279
          %3734 = vmatpush2.bf16.msra.mxu0 %v3278
          %3735 = vmatprep.subr.bf16.mxu0 %v3275
          %3736 = vmatpush2.bf16.msra.mxu0 %v3274
          %3737 = vmatprep.subr.bf16.mxu0 %v3271
          %3738 = vmatpush2.bf16.msra.mxu0 %v3270
          %3739 = vmatprep.subr.bf16.mxu0 %v3267
          %3740 = vmatpush2.bf16.msra.mxu0 %v3266
          %3741 = vmatprep.subr.bf16.mxu0 %v3263
          %3742 = vmatpush2.bf16.msra.mxu0 %v3262
          %3743 = vmatprep.subr.bf16.mxu0 %v3259
          %3744 = vmatpush2.bf16.msra.mxu0 %v3258
          %3745 = vmatprep.mubr.bf16.mxu0 %v2317
          %3746 = vmatmul.mubr.bf16.gmra.mxu0 %v2303
          %v3747 = vpop.f32.mrf.mxu0
          %v3748 = vadd.f32 %v3707, %v3747
          %v3749 = vpop.f32.mrf.mxu0
          %v3750 = vadd.f32 %v3709, %v3749
          %v3751 = vpop.f32.mrf.mxu0
          %v3752 = vpop.f32.mrf.mxu0
          %3753 = vdwg.mxu0
          %3754 = vmatprep.subr.bf16.mxu0 %v3319
          %3755 = vmatpush1.bf16.msra.mxu0 %v3318
          %3756 = vmatprep.subr.bf16.mxu0 %v3315
          %3757 = vmatpush1.bf16.msra.mxu0 %v3314
          %3758 = vmatprep.subr.bf16.mxu0 %v3311
          %3759 = vmatpush1.bf16.msra.mxu0 %v3310
          %3760 = vmatprep.subr.bf16.mxu0 %v3307
          %3761 = vmatpush1.bf16.msra.mxu0 %v3306
          %3762 = vmatprep.subr.bf16.mxu0 %v3303
          %3763 = vmatpush1.bf16.msra.mxu0 %v3302
          %3764 = vmatprep.subr.bf16.mxu0 %v3299
          %3765 = vmatpush1.bf16.msra.mxu0 %v3298
          %3766 = vmatprep.subr.bf16.mxu0 %v3295
          %3767 = vmatpush1.bf16.msra.mxu0 %v3294
          %3768 = vmatprep.subr.bf16.mxu0 %v3291
          %3769 = vmatpush1.bf16.msra.mxu0 %v3290
          %3770 = vmatprep.subr.bf16.mxu0 %v3351
          %3771 = vmatpush2.bf16.msra.mxu0 %v3350
          %3772 = vmatprep.subr.bf16.mxu0 %v3347
          %3773 = vmatpush2.bf16.msra.mxu0 %v3346
          %3774 = vmatprep.subr.bf16.mxu0 %v3343
          %3775 = vmatpush2.bf16.msra.mxu0 %v3342
          %3776 = vmatprep.subr.bf16.mxu0 %v3339
          %3777 = vmatpush2.bf16.msra.mxu0 %v3338
          %3778 = vmatprep.subr.bf16.mxu0 %v3335
          %3779 = vmatpush2.bf16.msra.mxu0 %v3334
          %3780 = vmatprep.subr.bf16.mxu0 %v3331
          %3781 = vmatpush2.bf16.msra.mxu0 %v3330
          %3782 = vmatprep.subr.bf16.mxu0 %v3327
          %3783 = vmatpush2.bf16.msra.mxu0 %v3326
          %3784 = vmatprep.subr.bf16.mxu0 %v3323
          %3785 = vmatpush2.bf16.msra.mxu0 %v3322
          %3786 = vmatprep.mubr.bf16.mxu0 %v2321
          %3787 = vmatmul.mubr.bf16.gmra.mxu0 %v2319
          %v3788 = vpop.f32.mrf.mxu0
          %v3789 = vadd.f32 %v3748, %v3788
          %v3790 = vpop.f32.mrf.mxu0
          %v3791 = vadd.f32 %v3750, %v3790
          %v3792 = vpop.f32.mrf.mxu0
          %v3793 = vpop.f32.mrf.mxu0
          %3794 = vdwg.mxu0
          %3795 = vmatprep.subr.bf16.mxu0 %v3129
          %3796 = vmatpush1.bf16.msra.mxu0 %v3128
          %3797 = vmatprep.subr.bf16.mxu0 %v3125
          %3798 = vmatpush1.bf16.msra.mxu0 %v3124
          %3799 = vmatprep.subr.bf16.mxu0 %v3121
          %3800 = vmatpush1.bf16.msra.mxu0 %v3120
          %3801 = vmatprep.subr.bf16.mxu0 %v3117
          %3802 = vmatpush1.bf16.msra.mxu0 %v3116
          %3803 = vmatprep.subr.bf16.mxu0 %v3113
          %3804 = vmatpush1.bf16.msra.mxu0 %v3112
          %3805 = vmatprep.subr.bf16.mxu0 %v3109
          %3806 = vmatpush1.bf16.msra.mxu0 %v3108
          %3807 = vmatprep.subr.bf16.mxu0 %v3105
          %3808 = vmatpush1.bf16.msra.mxu0 %v3104
          %3809 = vmatprep.subr.bf16.mxu0 %v3101
          %3810 = vmatpush1.bf16.msra.mxu0 %v3100
          %3811 = vmatprep.subr.bf16.mxu0 %v3161
          %3812 = vmatpush2.bf16.msra.mxu0 %v3160
          %3813 = vmatprep.subr.bf16.mxu0 %v3157
          %3814 = vmatpush2.bf16.msra.mxu0 %v3156
          %3815 = vmatprep.subr.bf16.mxu0 %v3153
          %3816 = vmatpush2.bf16.msra.mxu0 %v3152
          %3817 = vmatprep.subr.bf16.mxu0 %v3149
          %3818 = vmatpush2.bf16.msra.mxu0 %v3148
          %3819 = vmatprep.subr.bf16.mxu0 %v3145
          %3820 = vmatpush2.bf16.msra.mxu0 %v3144
          %3821 = vmatprep.subr.bf16.mxu0 %v3141
          %3822 = vmatpush2.bf16.msra.mxu0 %v3140
          %3823 = vmatprep.subr.bf16.mxu0 %v3137
          %3824 = vmatpush2.bf16.msra.mxu0 %v3136
          %3825 = vmatprep.subr.bf16.mxu0 %v3133
          %3826 = vmatpush2.bf16.msra.mxu0 %v3132
          %3827 = vmatprep.mubr.bf16.mxu0 %v2310
          %3828 = vmatmul.mubr.bf16.gmra.mxu0 %v2296
          %v3829 = vpop.f32.mrf.mxu0
          %v3830 = vadd.f32 %v3622, %v3829
          %v3831 = vpop.f32.mrf.mxu0
          %v3832 = vadd.f32 %v3626, %v3831
          %v3833 = vpop.f32.mrf.mxu0
          %v3834 = vpop.f32.mrf.mxu0
          %3835 = vdwg.mxu0
          %3836 = vmatprep.subr.bf16.mxu0 %v3193
          %3837 = vmatpush1.bf16.msra.mxu0 %v3192
          %3838 = vmatprep.subr.bf16.mxu0 %v3189
          %3839 = vmatpush1.bf16.msra.mxu0 %v3188
          %3840 = vmatprep.subr.bf16.mxu0 %v3185
          %3841 = vmatpush1.bf16.msra.mxu0 %v3184
          %3842 = vmatprep.subr.bf16.mxu0 %v3181
          %3843 = vmatpush1.bf16.msra.mxu0 %v3180
          %3844 = vmatprep.subr.bf16.mxu0 %v3177
          %3845 = vmatpush1.bf16.msra.mxu0 %v3176
          %3846 = vmatprep.subr.bf16.mxu0 %v3173
          %3847 = vmatpush1.bf16.msra.mxu0 %v3172
          %3848 = vmatprep.subr.bf16.mxu0 %v3169
          %3849 = vmatpush1.bf16.msra.mxu0 %v3168
          %3850 = vmatprep.subr.bf16.mxu0 %v3165
          %3851 = vmatpush1.bf16.msra.mxu0 %v3164
          %3852 = vmatprep.subr.bf16.mxu0 %v3225
          %3853 = vmatpush2.bf16.msra.mxu0 %v3224
          %3854 = vmatprep.subr.bf16.mxu0 %v3221
          %3855 = vmatpush2.bf16.msra.mxu0 %v3220
          %3856 = vmatprep.subr.bf16.mxu0 %v3217
          %3857 = vmatpush2.bf16.msra.mxu0 %v3216
          %3858 = vmatprep.subr.bf16.mxu0 %v3213
          %3859 = vmatpush2.bf16.msra.mxu0 %v3212
          %3860 = vmatprep.subr.bf16.mxu0 %v3209
          %3861 = vmatpush2.bf16.msra.mxu0 %v3208
          %3862 = vmatprep.subr.bf16.mxu0 %v3205
          %3863 = vmatpush2.bf16.msra.mxu0 %v3204
          %3864 = vmatprep.subr.bf16.mxu0 %v3201
          %3865 = vmatpush2.bf16.msra.mxu0 %v3200
          %3866 = vmatprep.subr.bf16.mxu0 %v3197
          %3867 = vmatpush2.bf16.msra.mxu0 %v3196
          %3868 = vmatprep.mubr.bf16.mxu0 %v2320
          %3869 = vmatmul.mubr.bf16.gmra.mxu0 %v2318
          %v3870 = vpop.f32.mrf.mxu0
          %v3871 = vadd.f32 %v3830, %v3870
          %v3872 = vpop.f32.mrf.mxu0
          %v3873 = vadd.f32 %v3832, %v3872
          %v3874 = vpop.f32.mrf.mxu0
          %v3875 = vpop.f32.mrf.mxu0
          %3876 = vdwg.mxu0
          %3877 = vmatprep.subr.bf16.mxu0 %v3257
          %3878 = vmatpush1.bf16.msra.mxu0 %v3256
          %3879 = vmatprep.subr.bf16.mxu0 %v3253
          %3880 = vmatpush1.bf16.msra.mxu0 %v3252
          %3881 = vmatprep.subr.bf16.mxu0 %v3249
          %3882 = vmatpush1.bf16.msra.mxu0 %v3248
          %3883 = vmatprep.subr.bf16.mxu0 %v3245
          %3884 = vmatpush1.bf16.msra.mxu0 %v3244
          %3885 = vmatprep.subr.bf16.mxu0 %v3241
          %3886 = vmatpush1.bf16.msra.mxu0 %v3240
          %3887 = vmatprep.subr.bf16.mxu0 %v3237
          %3888 = vmatpush1.bf16.msra.mxu0 %v3236
          %3889 = vmatprep.subr.bf16.mxu0 %v3233
          %3890 = vmatpush1.bf16.msra.mxu0 %v3232
          %3891 = vmatprep.subr.bf16.mxu0 %v3229
          %3892 = vmatpush1.bf16.msra.mxu0 %v3228
          %3893 = vmatprep.subr.bf16.mxu0 %v3289
          %3894 = vmatpush2.bf16.msra.mxu0 %v3288
          %3895 = vmatprep.subr.bf16.mxu0 %v3285
          %3896 = vmatpush2.bf16.msra.mxu0 %v3284
          %3897 = vmatprep.subr.bf16.mxu0 %v3281
          %3898 = vmatpush2.bf16.msra.mxu0 %v3280
          %3899 = vmatprep.subr.bf16.mxu0 %v3277
          %3900 = vmatpush2.bf16.msra.mxu0 %v3276
          %3901 = vmatprep.subr.bf16.mxu0 %v3273
          %3902 = vmatpush2.bf16.msra.mxu0 %v3272
          %3903 = vmatprep.subr.bf16.mxu0 %v3269
          %3904 = vmatpush2.bf16.msra.mxu0 %v3268
          %3905 = vmatprep.subr.bf16.mxu0 %v3265
          %3906 = vmatpush2.bf16.msra.mxu0 %v3264
          %3907 = vmatprep.subr.bf16.mxu0 %v3261
          %3908 = vmatpush2.bf16.msra.mxu0 %v3260
          %3909 = vmatprep.mubr.bf16.mxu0 %v2317
          %3910 = vmatmul.mubr.bf16.gmra.mxu0 %v2303
          %v3911 = vpop.f32.mrf.mxu0
          %v3912 = vadd.f32 %v3871, %v3911
          %v3913 = vpop.f32.mrf.mxu0
          %v3914 = vadd.f32 %v3873, %v3913
          %v3915 = vpop.f32.mrf.mxu0
          %v3916 = vpop.f32.mrf.mxu0
          %3917 = vdwg.mxu0
          %3918 = vmatprep.subr.bf16.mxu0 %v3321
          %3919 = vmatpush1.bf16.msra.mxu0 %v3320
          %3920 = vmatprep.subr.bf16.mxu0 %v3317
          %3921 = vmatpush1.bf16.msra.mxu0 %v3316
          %3922 = vmatprep.subr.bf16.mxu0 %v3313
          %3923 = vmatpush1.bf16.msra.mxu0 %v3312
          %3924 = vmatprep.subr.bf16.mxu0 %v3309
          %3925 = vmatpush1.bf16.msra.mxu0 %v3308
          %3926 = vmatprep.subr.bf16.mxu0 %v3305
          %3927 = vmatpush1.bf16.msra.mxu0 %v3304
          %3928 = vmatprep.subr.bf16.mxu0 %v3301
          %3929 = vmatpush1.bf16.msra.mxu0 %v3300
          %3930 = vmatprep.subr.bf16.mxu0 %v3297
          %3931 = vmatpush1.bf16.msra.mxu0 %v3296
          %3932 = vmatprep.subr.bf16.mxu0 %v3293
          %3933 = vmatpush1.bf16.msra.mxu0 %v3292
          %3934 = vmatprep.subr.bf16.mxu0 %v3353
          %3935 = vmatpush2.bf16.msra.mxu0 %v3352
          %3936 = vmatprep.subr.bf16.mxu0 %v3349
          %3937 = vmatpush2.bf16.msra.mxu0 %v3348
          %3938 = vmatprep.subr.bf16.mxu0 %v3345
          %3939 = vmatpush2.bf16.msra.mxu0 %v3344
          %3940 = vmatprep.subr.bf16.mxu0 %v3341
          %3941 = vmatpush2.bf16.msra.mxu0 %v3340
          %3942 = vmatprep.subr.bf16.mxu0 %v3337
          %3943 = vmatpush2.bf16.msra.mxu0 %v3336
          %3944 = vmatprep.subr.bf16.mxu0 %v3333
          %3945 = vmatpush2.bf16.msra.mxu0 %v3332
          %3946 = vmatprep.subr.bf16.mxu0 %v3329
          %3947 = vmatpush2.bf16.msra.mxu0 %v3328
          %3948 = vmatprep.subr.bf16.mxu0 %v3325
          %3949 = vmatpush2.bf16.msra.mxu0 %v3324
          %3950 = vmatprep.mubr.bf16.mxu0 %v2321
          %3951 = vmatmul.mubr.bf16.gmra.mxu0 %v2319
          %v3952 = vpop.f32.mrf.mxu0
          %v3953 = vadd.f32 %v3912, %v3952
          %v3954 = vpop.f32.mrf.mxu0
          %v3955 = vadd.f32 %v3914, %v3954
          %v3956 = vpop.f32.mrf.mxu0
          %v3957 = vpop.f32.mrf.mxu0
          %3958 = vdwg.mxu0
          %v3959 = vmax.f32 %v3789, 0.0
          %v3960 = vmax.f32 %v3791, 0.0
          %v3961 = vmax.f32 %v3953, 0.0
          %v3962 = vmax.f32 %v3955, 0.0
          %v3963 = vpack.c.bf16 %v3959, %v3959
          %v3964 = vpack.c.bf16 %v3960, %v3960
          %v3965 = vpack.c.bf16 %v3961, %v3961
          %v3966 = vpack.c.bf16 %v3962, %v3962
          %v3967 = vld [vmem:[#allocation8] sm:$0xff]
          %v3968 = vld [vmem:[#allocation8 + $0x8] sm:$0xff]
          %v3969 = vld [vmem:[#allocation8 + $0x10] sm:$0xff]
          %v3970 = vld [vmem:[#allocation8 + $0x18] sm:$0xff]
          %v3971 = vld [vmem:[#allocation8 + $0x20] sm:$0xff]
          %v3972 = vld [vmem:[#allocation8 + $0x28] sm:$0xff]
          %v3973 = vld [vmem:[#allocation8 + $0x30] sm:$0xff]
          %v3974 = vld [vmem:[#allocation8 + $0x38] sm:$0xff]
          %v3975 = vld [vmem:[#allocation8 + $0x40] sm:$0xff]
          %v3976 = vld [vmem:[#allocation8 + $0x48] sm:$0xff]
          %v3977 = vld [vmem:[#allocation8 + $0x50] sm:$0xff]
          %v3978 = vld [vmem:[#allocation8 + $0x58] sm:$0xff]
          %v3979 = vld [vmem:[#allocation8 + $0x60] sm:$0xff]
          %v3980 = vld [vmem:[#allocation8 + $0x68] sm:$0xff]
          %v3981 = vld [vmem:[#allocation8 + $0x70] sm:$0xff]
          %v3982 = vld [vmem:[#allocation8 + $0x78] sm:$0xff]
          %v3983 = vld [vmem:[#allocation8 + $0x80] sm:$0xff]
          %v3984 = vld [vmem:[#allocation8 + $0x88] sm:$0xff]
          %v3985 = vld [vmem:[#allocation8 + $0x90] sm:$0xff]
          %v3986 = vld [vmem:[#allocation8 + $0x98] sm:$0xff]
          %v3987 = vld [vmem:[#allocation8 + $0xa0] sm:$0xff]
          %v3988 = vld [vmem:[#allocation8 + $0xa8] sm:$0xff]
          %v3989 = vld [vmem:[#allocation8 + $0xb0] sm:$0xff]
          %v3990 = vld [vmem:[#allocation8 + $0xb8] sm:$0xff]
          %v3991 = vld [vmem:[#allocation8 + $0xc0] sm:$0xff]
          %v3992 = vld [vmem:[#allocation8 + $0xc8] sm:$0xff]
          %v3993 = vld [vmem:[#allocation8 + $0xd0] sm:$0xff]
          %v3994 = vld [vmem:[#allocation8 + $0xd8] sm:$0xff]
          %v3995 = vld [vmem:[#allocation8 + $0xe0] sm:$0xff]
          %v3996 = vld [vmem:[#allocation8 + $0xe8] sm:$0xff]
          %v3997 = vld [vmem:[#allocation8 + $0xf0] sm:$0xff]
          %v3998 = vld [vmem:[#allocation8 + $0xf8] sm:$0xff]
          %v3999 = vld [vmem:[#allocation8 + $0x100] sm:$0xff]
          %v4000 = vld [vmem:[#allocation8 + $0x108] sm:$0xff]
          %v4001 = vld [vmem:[#allocation8 + $0x110] sm:$0xff]
          %v4002 = vld [vmem:[#allocation8 + $0x118] sm:$0xff]
          %v4003 = vld [vmem:[#allocation8 + $0x120] sm:$0xff]
          %v4004 = vld [vmem:[#allocation8 + $0x128] sm:$0xff]
          %v4005 = vld [vmem:[#allocation8 + $0x130] sm:$0xff]
          %v4006 = vld [vmem:[#allocation8 + $0x138] sm:$0xff]
          %v4007 = vld [vmem:[#allocation8 + $0x140] sm:$0xff]
          %v4008 = vld [vmem:[#allocation8 + $0x148] sm:$0xff]
          %v4009 = vld [vmem:[#allocation8 + $0x150] sm:$0xff]
          %v4010 = vld [vmem:[#allocation8 + $0x158] sm:$0xff]
          %v4011 = vld [vmem:[#allocation8 + $0x160] sm:$0xff]
          %v4012 = vld [vmem:[#allocation8 + $0x168] sm:$0xff]
          %v4013 = vld [vmem:[#allocation8 + $0x170] sm:$0xff]
          %v4014 = vld [vmem:[#allocation8 + $0x178] sm:$0xff]
          %v4015 = vld [vmem:[#allocation8 + $0x180] sm:$0xff]
          %v4016 = vld [vmem:[#allocation8 + $0x188] sm:$0xff]
          %v4017 = vld [vmem:[#allocation8 + $0x190] sm:$0xff]
          %v4018 = vld [vmem:[#allocation8 + $0x198] sm:$0xff]
          %v4019 = vld [vmem:[#allocation8 + $0x1a0] sm:$0xff]
          %v4020 = vld [vmem:[#allocation8 + $0x1a8] sm:$0xff]
          %v4021 = vld [vmem:[#allocation8 + $0x1b0] sm:$0xff]
          %v4022 = vld [vmem:[#allocation8 + $0x1b8] sm:$0xff]
          %v4023 = vld [vmem:[#allocation8 + $0x1c0] sm:$0xff]
          %v4024 = vld [vmem:[#allocation8 + $0x1c8] sm:$0xff]
          %v4025 = vld [vmem:[#allocation8 + $0x1d0] sm:$0xff]
          %v4026 = vld [vmem:[#allocation8 + $0x1d8] sm:$0xff]
          %v4027 = vld [vmem:[#allocation8 + $0x1e0] sm:$0xff]
          %v4028 = vld [vmem:[#allocation8 + $0x1e8] sm:$0xff]
          %v4029 = vld [vmem:[#allocation8 + $0x1f0] sm:$0xff]
          %v4030 = vld [vmem:[#allocation8 + $0x1f8] sm:$0xff]
          %v4031 = vld [vmem:[%s8] sm:$0x3]
          %v4096 = vunpack.c.l.b16 %v3967
          %v4097 = vunpack.c.h.b16 %v3967
          %v4098 = vunpack.c.l.b16 %v3968
          %v4099 = vunpack.c.h.b16 %v3968
          %v4100 = vunpack.c.l.b16 %v3969
          %v4101 = vunpack.c.h.b16 %v3969
          %v4102 = vunpack.c.l.b16 %v3970
          %v4103 = vunpack.c.h.b16 %v3970
          %v4104 = vunpack.c.l.b16 %v3971
          %v4105 = vunpack.c.h.b16 %v3971
          %v4106 = vunpack.c.l.b16 %v3972
          %v4107 = vunpack.c.h.b16 %v3972
          %v4108 = vunpack.c.l.b16 %v3973
          %v4109 = vunpack.c.h.b16 %v3973
          %v4110 = vunpack.c.l.b16 %v3974
          %v4111 = vunpack.c.h.b16 %v3974
          %v4112 = vunpack.c.l.b16 %v3975
          %v4113 = vunpack.c.h.b16 %v3975
          %v4114 = vunpack.c.l.b16 %v3976
          %v4115 = vunpack.c.h.b16 %v3976
          %v4116 = vunpack.c.l.b16 %v3977
          %v4117 = vunpack.c.h.b16 %v3977
          %v4118 = vunpack.c.l.b16 %v3978
          %v4119 = vunpack.c.h.b16 %v3978
          %v4120 = vunpack.c.l.b16 %v3979
          %v4121 = vunpack.c.h.b16 %v3979
          %v4122 = vunpack.c.l.b16 %v3980
          %v4123 = vunpack.c.h.b16 %v3980
          %v4124 = vunpack.c.l.b16 %v3981
          %v4125 = vunpack.c.h.b16 %v3981
          %v4126 = vunpack.c.l.b16 %v3982
          %v4127 = vunpack.c.h.b16 %v3982
          %v4128 = vunpack.c.l.b16 %v3983
          %v4129 = vunpack.c.h.b16 %v3983
          %v4130 = vunpack.c.l.b16 %v3984
          %v4131 = vunpack.c.h.b16 %v3984
          %v4132 = vunpack.c.l.b16 %v3985
          %v4133 = vunpack.c.h.b16 %v3985
          %v4134 = vunpack.c.l.b16 %v3986
          %v4135 = vunpack.c.h.b16 %v3986
          %v4136 = vunpack.c.l.b16 %v3987
          %v4137 = vunpack.c.h.b16 %v3987
          %v4138 = vunpack.c.l.b16 %v3988
          %v4139 = vunpack.c.h.b16 %v3988
          %v4140 = vunpack.c.l.b16 %v3989
          %v4141 = vunpack.c.h.b16 %v3989
          %v4142 = vunpack.c.l.b16 %v3990
          %v4143 = vunpack.c.h.b16 %v3990
          %v4144 = vunpack.c.l.b16 %v3991
          %v4145 = vunpack.c.h.b16 %v3991
          %v4146 = vunpack.c.l.b16 %v3992
          %v4147 = vunpack.c.h.b16 %v3992
          %v4148 = vunpack.c.l.b16 %v3993
          %v4149 = vunpack.c.h.b16 %v3993
          %v4150 = vunpack.c.l.b16 %v3994
          %v4151 = vunpack.c.h.b16 %v3994
          %v4152 = vunpack.c.l.b16 %v3995
          %v4153 = vunpack.c.h.b16 %v3995
          %v4154 = vunpack.c.l.b16 %v3996
          %v4155 = vunpack.c.h.b16 %v3996
          %v4156 = vunpack.c.l.b16 %v3997
          %v4157 = vunpack.c.h.b16 %v3997
          %v4158 = vunpack.c.l.b16 %v3998
          %v4159 = vunpack.c.h.b16 %v3998
          %v4160 = vunpack.c.l.b16 %v3999
          %v4161 = vunpack.c.h.b16 %v3999
          %v4162 = vunpack.c.l.b16 %v4000
          %v4163 = vunpack.c.h.b16 %v4000
          %v4164 = vunpack.c.l.b16 %v4001
          %v4165 = vunpack.c.h.b16 %v4001
          %v4166 = vunpack.c.l.b16 %v4002
          %v4167 = vunpack.c.h.b16 %v4002
          %v4168 = vunpack.c.l.b16 %v4003
          %v4169 = vunpack.c.h.b16 %v4003
          %v4170 = vunpack.c.l.b16 %v4004
          %v4171 = vunpack.c.h.b16 %v4004
          %v4172 = vunpack.c.l.b16 %v4005
          %v4173 = vunpack.c.h.b16 %v4005
          %v4174 = vunpack.c.l.b16 %v4006
          %v4175 = vunpack.c.h.b16 %v4006
          %v4176 = vunpack.c.l.b16 %v4007
          %v4177 = vunpack.c.h.b16 %v4007
          %v4178 = vunpack.c.l.b16 %v4008
          %v4179 = vunpack.c.h.b16 %v4008
          %v4180 = vunpack.c.l.b16 %v4009
          %v4181 = vunpack.c.h.b16 %v4009
          %v4182 = vunpack.c.l.b16 %v4010
          %v4183 = vunpack.c.h.b16 %v4010
          %v4184 = vunpack.c.l.b16 %v4011
          %v4185 = vunpack.c.h.b16 %v4011
          %v4186 = vunpack.c.l.b16 %v4012
          %v4187 = vunpack.c.h.b16 %v4012
          %v4188 = vunpack.c.l.b16 %v4013
          %v4189 = vunpack.c.h.b16 %v4013
          %v4190 = vunpack.c.l.b16 %v4014
          %v4191 = vunpack.c.h.b16 %v4014
          %v4192 = vunpack.c.l.b16 %v4015
          %v4193 = vunpack.c.h.b16 %v4015
          %v4194 = vunpack.c.l.b16 %v4016
          %v4195 = vunpack.c.h.b16 %v4016
          %v4196 = vunpack.c.l.b16 %v4017
          %v4197 = vunpack.c.h.b16 %v4017
          %v4198 = vunpack.c.l.b16 %v4018
          %v4199 = vunpack.c.h.b16 %v4018
          %v4200 = vunpack.c.l.b16 %v4019
          %v4201 = vunpack.c.h.b16 %v4019
          %v4202 = vunpack.c.l.b16 %v4020
          %v4203 = vunpack.c.h.b16 %v4020
          %v4204 = vunpack.c.l.b16 %v4021
          %v4205 = vunpack.c.h.b16 %v4021
          %v4206 = vunpack.c.l.b16 %v4022
          %v4207 = vunpack.c.h.b16 %v4022
          %v4208 = vunpack.c.l.b16 %v4023
          %v4209 = vunpack.c.h.b16 %v4023
          %v4210 = vunpack.c.l.b16 %v4024
          %v4211 = vunpack.c.h.b16 %v4024
          %v4212 = vunpack.c.l.b16 %v4025
          %v4213 = vunpack.c.h.b16 %v4025
          %v4214 = vunpack.c.l.b16 %v4026
          %v4215 = vunpack.c.h.b16 %v4026
          %v4216 = vunpack.c.l.b16 %v4027
          %v4217 = vunpack.c.h.b16 %v4027
          %v4218 = vunpack.c.l.b16 %v4028
          %v4219 = vunpack.c.h.b16 %v4028
          %v4220 = vunpack.c.l.b16 %v4029
          %v4221 = vunpack.c.h.b16 %v4029
          %v4222 = vunpack.c.l.b16 %v4030
          %v4223 = vunpack.c.h.b16 %v4030
          %v4224 = vpack.c.b16 %v4098, %v4096
          %v4225 = vpack.c.b16 %v4099, %v4097
          %v4226 = vpack.c.b16 %v4102, %v4100
          %v4227 = vpack.c.b16 %v4103, %v4101
          %v4228 = vpack.c.b16 %v4106, %v4104
          %v4229 = vpack.c.b16 %v4107, %v4105
          %v4230 = vpack.c.b16 %v4110, %v4108
          %v4231 = vpack.c.b16 %v4111, %v4109
          %v4232 = vpack.c.b16 %v4114, %v4112
          %v4233 = vpack.c.b16 %v4115, %v4113
          %v4234 = vpack.c.b16 %v4118, %v4116
          %v4235 = vpack.c.b16 %v4119, %v4117
          %v4236 = vpack.c.b16 %v4122, %v4120
          %v4237 = vpack.c.b16 %v4123, %v4121
          %v4238 = vpack.c.b16 %v4126, %v4124
          %v4239 = vpack.c.b16 %v4127, %v4125
          %v4240 = vpack.c.b16 %v4130, %v4128
          %v4241 = vpack.c.b16 %v4131, %v4129
          %v4242 = vpack.c.b16 %v4134, %v4132
          %v4243 = vpack.c.b16 %v4135, %v4133
          %v4244 = vpack.c.b16 %v4138, %v4136
          %v4245 = vpack.c.b16 %v4139, %v4137
          %v4246 = vpack.c.b16 %v4142, %v4140
          %v4247 = vpack.c.b16 %v4143, %v4141
          %v4248 = vpack.c.b16 %v4146, %v4144
          %v4249 = vpack.c.b16 %v4147, %v4145
          %v4250 = vpack.c.b16 %v4150, %v4148
          %v4251 = vpack.c.b16 %v4151, %v4149
          %v4252 = vpack.c.b16 %v4154, %v4152
          %v4253 = vpack.c.b16 %v4155, %v4153
          %v4254 = vpack.c.b16 %v4158, %v4156
          %v4255 = vpack.c.b16 %v4159, %v4157
          %v4256 = vpack.c.b16 %v4162, %v4160
          %v4257 = vpack.c.b16 %v4163, %v4161
          %v4258 = vpack.c.b16 %v4166, %v4164
          %v4259 = vpack.c.b16 %v4167, %v4165
          %v4260 = vpack.c.b16 %v4170, %v4168
          %v4261 = vpack.c.b16 %v4171, %v4169
          %v4262 = vpack.c.b16 %v4174, %v4172
          %v4263 = vpack.c.b16 %v4175, %v4173
          %v4264 = vpack.c.b16 %v4178, %v4176
          %v4265 = vpack.c.b16 %v4179, %v4177
          %v4266 = vpack.c.b16 %v4182, %v4180
          %v4267 = vpack.c.b16 %v4183, %v4181
          %v4268 = vpack.c.b16 %v4186, %v4184
          %v4269 = vpack.c.b16 %v4187, %v4185
          %v4270 = vpack.c.b16 %v4190, %v4188
          %v4271 = vpack.c.b16 %v4191, %v4189
          %v4272 = vpack.c.b16 %v4194, %v4192
          %v4273 = vpack.c.b16 %v4195, %v4193
          %v4274 = vpack.c.b16 %v4198, %v4196
          %v4275 = vpack.c.b16 %v4199, %v4197
          %v4276 = vpack.c.b16 %v4202, %v4200
          %v4277 = vpack.c.b16 %v4203, %v4201
          %v4278 = vpack.c.b16 %v4206, %v4204
          %v4279 = vpack.c.b16 %v4207, %v4205
          %v4280 = vpack.c.b16 %v4210, %v4208
          %v4281 = vpack.c.b16 %v4211, %v4209
          %v4282 = vpack.c.b16 %v4214, %v4212
          %v4283 = vpack.c.b16 %v4215, %v4213
          %v4284 = vpack.c.b16 %v4218, %v4216
          %v4285 = vpack.c.b16 %v4219, %v4217
          %v4286 = vpack.c.b16 %v4222, %v4220
          %v4287 = vpack.c.b16 %v4223, %v4221
          %v4353 = vlaneseq
          %v4354 = vshrl.u32 %v4353, 7
          %v4355 = vsub.s32 0, %v4354
          %v4356 = vrot.slane %v4031, %v4355
          %v4357 = vlaneseq
          %v4358 = vshrl.u32 %v4357, 7
          %v4359 = vsub.s32 1, %v4358
          %v4360 = vrot.slane %v4031, %v4359
          %4363 = vmatprep.subr.bf16.mxu0 %v4239
          %4364 = vmatpush1.bf16.msra.mxu0 %v4238
          %4365 = vmatprep.subr.bf16.mxu0 %v4237
          %4366 = vmatpush1.bf16.msra.mxu0 %v4236
          %4367 = vmatprep.subr.bf16.mxu0 %v4235
          %4368 = vmatpush1.bf16.msra.mxu0 %v4234
          %4369 = vmatprep.subr.bf16.mxu0 %v4233
          %4370 = vmatpush1.bf16.msra.mxu0 %v4232
          %4371 = vmatprep.subr.bf16.mxu0 %v4231
          %4372 = vmatpush1.bf16.msra.mxu0 %v4230
          %4373 = vmatprep.subr.bf16.mxu0 %v4229
          %4374 = vmatpush1.bf16.msra.mxu0 %v4228
          %4375 = vmatprep.subr.bf16.mxu0 %v4227
          %4376 = vmatpush1.bf16.msra.mxu0 %v4226
          %4377 = vmatprep.subr.bf16.mxu0 %v4225
          %4378 = vmatpush1.bf16.msra.mxu0 %v4224
          %4379 = vmatprep.subr.bf16.mxu0 %v4255
          %4380 = vmatpush2.bf16.msra.mxu0 %v4254
          %4381 = vmatprep.subr.bf16.mxu0 %v4253
          %4382 = vmatpush2.bf16.msra.mxu0 %v4252
          %4383 = vmatprep.subr.bf16.mxu0 %v4251
          %4384 = vmatpush2.bf16.msra.mxu0 %v4250
          %4385 = vmatprep.subr.bf16.mxu0 %v4249
          %4386 = vmatpush2.bf16.msra.mxu0 %v4248
          %4387 = vmatprep.subr.bf16.mxu0 %v4247
          %4388 = vmatpush2.bf16.msra.mxu0 %v4246
          %4389 = vmatprep.subr.bf16.mxu0 %v4245
          %4390 = vmatpush2.bf16.msra.mxu0 %v4244
          %4391 = vmatprep.subr.bf16.mxu0 %v4243
          %4392 = vmatpush2.bf16.msra.mxu0 %v4242
          %4393 = vmatprep.subr.bf16.mxu0 %v4241
          %4394 = vmatpush2.bf16.msra.mxu0 %v4240
          %4395 = vmatprep.mubr.bf16.mxu0 %v3964
          %4396 = vmatmul.mubr.bf16.gmra.mxu0 %v3963
          %v4397 = vpop.f32.mrf.mxu0
          %v4398 = vadd.f32 %v4356, %v4397
          %v4399 = vpop.f32.mrf.mxu0
          %v4400 = vadd.f32 %v4360, %v4399
          %v4401 = vpop.f32.mrf.mxu0
          %v4402 = vpop.f32.mrf.mxu0
          %4403 = vdwg.mxu0
          %4404 = vmatprep.subr.bf16.mxu0 %v4271
          %4405 = vmatpush1.bf16.msra.mxu0 %v4270
          %4406 = vmatprep.subr.bf16.mxu0 %v4269
          %4407 = vmatpush1.bf16.msra.mxu0 %v4268
          %4408 = vmatprep.subr.bf16.mxu0 %v4267
          %4409 = vmatpush1.bf16.msra.mxu0 %v4266
          %4410 = vmatprep.subr.bf16.mxu0 %v4265
          %4411 = vmatpush1.bf16.msra.mxu0 %v4264
          %4412 = vmatprep.subr.bf16.mxu0 %v4263
          %4413 = vmatpush1.bf16.msra.mxu0 %v4262
          %4414 = vmatprep.subr.bf16.mxu0 %v4261
          %4415 = vmatpush1.bf16.msra.mxu0 %v4260
          %4416 = vmatprep.subr.bf16.mxu0 %v4259
          %4417 = vmatpush1.bf16.msra.mxu0 %v4258
          %4418 = vmatprep.subr.bf16.mxu0 %v4257
          %4419 = vmatpush1.bf16.msra.mxu0 %v4256
          %4420 = vmatprep.subr.bf16.mxu0 %v4287
          %4421 = vmatpush2.bf16.msra.mxu0 %v4286
          %4422 = vmatprep.subr.bf16.mxu0 %v4285
          %4423 = vmatpush2.bf16.msra.mxu0 %v4284
          %4424 = vmatprep.subr.bf16.mxu0 %v4283
          %4425 = vmatpush2.bf16.msra.mxu0 %v4282
          %4426 = vmatprep.subr.bf16.mxu0 %v4281
          %4427 = vmatpush2.bf16.msra.mxu0 %v4280
          %4428 = vmatprep.subr.bf16.mxu0 %v4279
          %4429 = vmatpush2.bf16.msra.mxu0 %v4278
          %4430 = vmatprep.subr.bf16.mxu0 %v4277
          %4431 = vmatpush2.bf16.msra.mxu0 %v4276
          %4432 = vmatprep.subr.bf16.mxu0 %v4275
          %4433 = vmatpush2.bf16.msra.mxu0 %v4274
          %4434 = vmatprep.subr.bf16.mxu0 %v4273
          %4435 = vmatpush2.bf16.msra.mxu0 %v4272
          %4436 = vmatprep.mubr.bf16.mxu0 %v3966
          %4437 = vmatmul.mubr.bf16.gmra.mxu0 %v3965
          %v4438 = vpop.f32.mrf.mxu0
          %v4439 = vadd.f32 %v4398, %v4438
          %v4440 = vpop.f32.mrf.mxu0
          %v4441 = vadd.f32 %v4400, %v4440
          %v4442 = vpop.f32.mrf.mxu0
          %v4443 = vpop.f32.mrf.mxu0
          %4444 = vdwg.mxu0
          %v4445 = vmax.f32 %v4439, 0.0
          %v4446 = vmax.f32 %v4441, 0.0
          %v4447 = vpack.c.bf16 %v4445, %v4445
          %v4448 = vpack.c.bf16 %v4446, %v4446
          %v4449 = vld [vmem:[%s9] sm:$0xf]
          %v4450 = vld [vmem:[%s9 + $0x4] sm:$0xf]
          %v4451 = vld [vmem:[%s9 + $0x8] sm:$0xf]
          %v4452 = vld [vmem:[%s9 + $0xc] sm:$0xf]
          %v4453 = vld [vmem:[%s9 + $0x10] sm:$0xf]
          %v4454 = vld [vmem:[%s9 + $0x14] sm:$0xf]
          %v4455 = vld [vmem:[%s9 + $0x18] sm:$0xf]
          %v4456 = vld [vmem:[%s9 + $0x1c] sm:$0xf]
          %v4457 = vld [vmem:[%s9 + $0x20] sm:$0xf]
          %v4458 = vld [vmem:[%s9 + $0x24] sm:$0xf]
          %v4459 = vld [vmem:[%s9 + $0x28] sm:$0xf]
          %v4460 = vld [vmem:[%s9 + $0x2c] sm:$0xf]
          %v4461 = vld [vmem:[%s9 + $0x30] sm:$0xf]
          %v4462 = vld [vmem:[%s9 + $0x34] sm:$0xf]
          %v4463 = vld [vmem:[%s9 + $0x38] sm:$0xf]
          %v4464 = vld [vmem:[%s9 + $0x3c] sm:$0xf]
          %v4465 = vld [vmem:[%s9 + $0x40] sm:$0xf]
          %v4466 = vld [vmem:[%s9 + $0x44] sm:$0xf]
          %v4467 = vld [vmem:[%s9 + $0x48] sm:$0xf]
          %v4468 = vld [vmem:[%s9 + $0x4c] sm:$0xf]
          %v4469 = vld [vmem:[%s9 + $0x50] sm:$0xf]
          %v4470 = vld [vmem:[%s9 + $0x54] sm:$0xf]
          %v4471 = vld [vmem:[%s9 + $0x58] sm:$0xf]
          %v4472 = vld [vmem:[%s9 + $0x5c] sm:$0xf]
          %v4473 = vld [vmem:[%s9 + $0x60] sm:$0xf]
          %v4474 = vld [vmem:[%s9 + $0x64] sm:$0xf]
          %v4475 = vld [vmem:[%s9 + $0x68] sm:$0xf]
          %v4476 = vld [vmem:[%s9 + $0x6c] sm:$0xf]
          %v4477 = vld [vmem:[%s9 + $0x70] sm:$0xf]
          %v4478 = vld [vmem:[%s9 + $0x74] sm:$0xf]
          %v4479 = vld [vmem:[%s9 + $0x78] sm:$0xf]
          %v4480 = vld [vmem:[%s9 + $0x7c] sm:$0xf]
          %v4481 = vld [vmem:[%s10] sm:$0x1]
          %v4514 = vunpack.c.l.b16 %v4449
          %v4515 = vunpack.c.l.b16 %v4450
          %v4516 = vunpack.c.l.b16 %v4451
          %v4517 = vunpack.c.l.b16 %v4452
          %v4518 = vunpack.c.l.b16 %v4453
          %v4519 = vunpack.c.l.b16 %v4454
          %v4520 = vunpack.c.l.b16 %v4455
          %v4521 = vunpack.c.l.b16 %v4456
          %v4522 = vunpack.c.l.b16 %v4457
          %v4523 = vunpack.c.l.b16 %v4458
          %v4524 = vunpack.c.l.b16 %v4459
          %v4525 = vunpack.c.l.b16 %v4460
          %v4526 = vunpack.c.l.b16 %v4461
          %v4527 = vunpack.c.l.b16 %v4462
          %v4528 = vunpack.c.l.b16 %v4463
          %v4529 = vunpack.c.l.b16 %v4464
          %v4530 = vunpack.c.l.b16 %v4465
          %v4531 = vunpack.c.l.b16 %v4466
          %v4532 = vunpack.c.l.b16 %v4467
          %v4533 = vunpack.c.l.b16 %v4468
          %v4534 = vunpack.c.l.b16 %v4469
          %v4535 = vunpack.c.l.b16 %v4470
          %v4536 = vunpack.c.l.b16 %v4471
          %v4537 = vunpack.c.l.b16 %v4472
          %v4538 = vunpack.c.l.b16 %v4473
          %v4539 = vunpack.c.l.b16 %v4474
          %v4540 = vunpack.c.l.b16 %v4475
          %v4541 = vunpack.c.l.b16 %v4476
          %v4542 = vunpack.c.l.b16 %v4477
          %v4543 = vunpack.c.l.b16 %v4478
          %v4544 = vunpack.c.l.b16 %v4479
          %v4545 = vunpack.c.l.b16 %v4480
          %v4546 = vpack.c.b16 %v4515, %v4514
          %v4547 = vpack.c.b16 %v4517, %v4516
          %v4548 = vpack.c.b16 %v4519, %v4518
          %v4549 = vpack.c.b16 %v4521, %v4520
          %v4550 = vpack.c.b16 %v4523, %v4522
          %v4551 = vpack.c.b16 %v4525, %v4524
          %v4552 = vpack.c.b16 %v4527, %v4526
          %v4553 = vpack.c.b16 %v4529, %v4528
          %v4554 = vpack.c.b16 %v4531, %v4530
          %v4555 = vpack.c.b16 %v4533, %v4532
          %v4556 = vpack.c.b16 %v4535, %v4534
          %v4557 = vpack.c.b16 %v4537, %v4536
          %v4558 = vpack.c.b16 %v4539, %v4538
          %v4559 = vpack.c.b16 %v4541, %v4540
          %v4560 = vpack.c.b16 %v4543, %v4542
          %v4561 = vpack.c.b16 %v4545, %v4544
          %4578 = vmatprep.subr.bf16.mxu0 0
          %4579 = vmatpush1.bf16.msra.mxu0 %v4553
          %4580 = vmatprep.subr.bf16.mxu0 0
          %4581 = vmatpush1.bf16.msra.mxu0 %v4552
          %4582 = vmatprep.subr.bf16.mxu0 0
          %4583 = vmatpush1.bf16.msra.mxu0 %v4551
          %4584 = vmatprep.subr.bf16.mxu0 0
          %4585 = vmatpush1.bf16.msra.mxu0 %v4550
          %4586 = vmatprep.subr.bf16.mxu0 0
          %4587 = vmatpush1.bf16.msra.mxu0 %v4549
          %4588 = vmatprep.subr.bf16.mxu0 0
          %4589 = vmatpush1.bf16.msra.mxu0 %v4548
          %4590 = vmatprep.subr.bf16.mxu0 0
          %4591 = vmatpush1.bf16.msra.mxu0 %v4547
          %4592 = vmatprep.subr.bf16.mxu0 0
          %4593 = vmatpush1.bf16.msra.mxu0 %v4546
          %4594 = vmatprep.subr.bf16.mxu0 0
          %4595 = vmatpush2.bf16.msra.mxu0 %v4561
          %4596 = vmatprep.subr.bf16.mxu0 0
          %4597 = vmatpush2.bf16.msra.mxu0 %v4560
          %4598 = vmatprep.subr.bf16.mxu0 0
          %4599 = vmatpush2.bf16.msra.mxu0 %v4559
          %4600 = vmatprep.subr.bf16.mxu0 0
          %4601 = vmatpush2.bf16.msra.mxu0 %v4558
          %4602 = vmatprep.subr.bf16.mxu0 0
          %4603 = vmatpush2.bf16.msra.mxu0 %v4557
          %4604 = vmatprep.subr.bf16.mxu0 0
          %4605 = vmatpush2.bf16.msra.mxu0 %v4556
          %4606 = vmatprep.subr.bf16.mxu0 0
          %4607 = vmatpush2.bf16.msra.mxu0 %v4555
          %4608 = vmatprep.subr.bf16.mxu0 0
          %4609 = vmatpush2.bf16.msra.mxu0 %v4554
          %4610 = vmatprep.mubr.bf16.mxu0 %v4448
          %4611 = vmatmul.mubr.bf16.gmra.mxu0 %v4447
          %v4612 = vpop.f32.mrf.mxu0
          %v4613 = vadd.f32 %v4481, %v4612
          %v4614 = vpop.f32.mrf.mxu0
          %v4615 = vpop.f32.mrf.mxu0
          %v4616 = vpop.f32.mrf.mxu0
          %4617 = vdwg.mxu0
          %4618 = vst [vmem:[%s445] sm:$0x1] %v4613
        $region84: #{tpu_custom_call.1} parent=63 // pred_fallthru
          _
        %s4619 = sand.u32 %s285, 1
        %s4620 = scalar_lea.sflag [#allocation5], %s4619
        %s4621 = sand.u32 %s285, 1
        %s4622 = scalar_lea.vmem [#allocation9], %s4621
        // Predicated region
        $region85: #{tpu_custom_call.1} parent=63 // pred_check
          %p4623 = pneg %p295
        $region86: #{tpu_custom_call.1} parent=63 // pred_check_branch
          %4625 = sbr.rel (%p4623) target = $region88
        $region87: #{tpu_custom_call.1} parent=63 // pred_region
          %s4627 = ssub.s32 16, 16
          %4628 = vsyncadd %s4620, %s4627
          %s4629 = smul.addr %s31, 16
          %s4630 = scalar_lea.hbm %s11, %s4629
          %s4632 = sshll.u32 %s4622, 4
          %s4633 = int_to_ptr.vmem [resolvable:$true] %s4632
          %4635 = dma.vmem_to_hbm [thread:$0]  %s4633, 16, %s4630, %s4620
        $region88: #{tpu_custom_call.1} parent=63 // pred_fallthru
          _
      $region64: #{tpu_custom_call.1} parent=5 // pred_fallthru
        _
      %p4636 = scmp.le.s32.totalorder 2, %s22
      // Predicated region
      $region89: #{tpu_custom_call.1} parent=5 // pred_check
        %p4637 = pneg %p4636
      $region90: #{tpu_custom_call.1} parent=5 // pred_check_branch
        %4639 = sbr.rel (%p4637) target = $region92
      $region91: #{tpu_custom_call.1} parent=5 // pred_region
        %s4640 = ssub.s32 %s22, 2
        // Predicated region
        $region93: #{tpu_custom_call.1} parent=91 // pred_check
          %p4641 = pneg %p301
        $region94: #{tpu_custom_call.1} parent=91 // pred_check_branch
          %4643 = sbr.rel (%p4641) target = $region96
        $region95: #{tpu_custom_call.1} parent=91 // pred_region
          %s4644 = sand.u32 %s286, 1
          %s4645 = scalar_lea.sflag [#allocation5], %s4644
          %s4646 = sand.u32 %s286, 1
          %s4647 = scalar_lea.vmem [#allocation9], %s4646
          %4648 = dma.done %s4645, 16
        $region96: #{tpu_custom_call.1} parent=91 // pred_fallthru
          _
      $region92: #{tpu_custom_call.1} parent=5 // pred_fallthru
        _
    $region6: #{tpu_custom_call.1} parent=1 // loop_footer
      %s26 = sadd.s32 1, %s22
    $region7: #{tpu_custom_call.1} parent=1 // loop_footer_branch
      %21 = sbr.rel target = $region3
    $region8: #{tpu_custom_call.1} parent=1 // loop_exit
      _
    %4649 = vsyncpa [#allocation4], 1
    %s4650 = scalar_lea.sflag [#allocation4], 1
    %4651 = vsyncpa %s4650, 1
    %4652 = vsyncpa [#allocation7], 1
    %4653 = vsyncpa [#allocation5], 1
    %s4654 = scalar_lea.sflag [#allocation5], 1
    %4655 = vsyncpa %s4654, 1

</llo_original>
